<compile_context>
chip_gen: v7x
topology: tpu7x:2x2x1
jax: 0.10.0
libtpu: 0.0.40
codegen_flags: <defaults>
</compile_context>

<pallas_src>
import functools
import math

import jax
import jax.numpy as jnp
from jax import lax
from jax.experimental import pallas as pl
from jax.experimental.pallas import tpu as pltpu

D_STATE = 16
D_CONV = 4
EXPAND = 2
LN_EPS = 1e-5

# Fused-parameter order as passed to pallas_call (after wrapper-side fusion).
PARAM_NAMES = [
    "gamma", "beta", "w_in", "conv_w", "conv_b",
    "w_xproj", "w_dt", "b_dt", "a_neg", "d_skip", "w_out",
]


def _silu(x):
    return x * (1.0 / (1.0 + jnp.exp(-x)))


def _softplus(x):
    # numerically stable softplus built from basic ops (EUP-friendly)
    return jnp.maximum(x, 0.0) + jnp.log1p(jnp.exp(-jnp.abs(x)))


def basic_block_kernel(
    # inputs
    x_ref, gamma_ref, beta_ref,
    w_in_ref, convw_ref, convb_ref,
    w_xp_ref, w_dt_ref, b_dt_ref,
    a_neg_ref, d_skip_ref, w_out_ref,
    # outputs
    out_ref,
    # scratch (persist across grid steps -> chunk carries)
    h_sc, conv_in_sc, delta_sc, v_sc, y_sc, bccol_sc,
    *, unroll,
):
    T = x_ref.shape[1]                 # tokens in this chunk
    d_inner = w_in_ref.shape[1] // 2
    d_state = a_neg_ref.shape[0]
    d_conv = convw_ref.shape[0]
    pad = d_conv - 1
    dt_rank = w_dt_ref.shape[0]

    c = pl.program_id(1)               # chunk index within this batch element

    def mm(act, w_ref):
        # matmul in the weight dtype (f32 or bf16), accumulate in f32
        return jnp.dot(act.astype(w_ref.dtype), w_ref[...],
                       preferred_element_type=jnp.float32)

    # ---- reset carries at the first chunk of every batch element ----
    @pl.when(c == 0)
    def _():
        h_sc[...] = jnp.zeros_like(h_sc)
        conv_in_sc[0:pad, :] = jnp.zeros((pad, d_inner), jnp.float32)

    xb = x_ref[0]                      # (T, dim)

    # ---- LayerNorm over the model dim ----
    mu = jnp.mean(xb, axis=1, keepdims=True)
    xc = xb - mu
    var = jnp.mean(xc * xc, axis=1, keepdims=True)
    hn = xc * lax.rsqrt(var + LN_EPS) * gamma_ref[...] + beta_ref[...]

    # ---- fused in_proj (x and z halves from one wider matmul) ----
    xz = mm(hn, w_in_ref)              # (T, 2*d_inner)
    xs = xz[:, :d_inner]
    z = xz[:, d_inner:]

    # ---- causal depthwise conv1d (kernel d_conv) + SiLU, chunk carry ----
    # conv_in_sc rows [0:pad] hold the previous chunk's last rows (zeros at c==0).
    conv_in_sc[pad:, :] = xs
    conv_w = convw_ref[...]            # (d_conv, d_inner)
    acc = convb_ref[...] + conv_w[0:1, :] * conv_in_sc[0:T, :]
    for k in range(1, d_conv):
        acc = acc + conv_w[k:k + 1, :] * conv_in_sc[k:k + T, :]
    # stash the carry for the next chunk (last `pad` rows of this chunk's xs)
    conv_in_sc[0:pad, :] = conv_in_sc[T:T + pad, :]
    xs_c = _silu(acc)                  # (T, d_inner)

    # ---- fused x_proj (dt_low | B | C) + dt_proj + softplus ----
    xbc = mm(xs_c, w_xp_ref)           # (T, dt_rank + 2*d_state)
    dt_low = xbc[:, :dt_rank]
    bc = xbc[:, dt_rank:]              # (T, 2*d_state): [B | C]
    delta = _softplus(mm(dt_low, w_dt_ref) + b_dt_ref[...])   # (T, d_inner)

    # ---- stage per-step scan operands in VMEM ----
    delta_sc[...] = delta
    v_sc[...] = delta * xs_c           # dB-input term delta*u
    # Columnize B/C per time step ((T, 2S, 1) so each scan step reads a dense
    # (2S, 1) tile with a leading-axis dynamic index). 2S tiny lane-slice
    # writes per chunk; negligible vs. the (L,S,E) slab writes they replace.
    for s in range(2 * d_state):
        bccol_sc[:, s, :] = bc[:, s:s + 1]

    a_neg = a_neg_ref[...]             # (d_state, d_inner), = -exp(A_log)

    # ---- selective scan over time: h <- exp(delta*A)*h + B*(delta*u),
    #      y[t] = sum_s C[t,s]*h[s,:]   (y accumulated in-scan, no h history)
    def step_block(i, h):
        base = pl.multiple_of(i * unroll, unroll)
        for u in range(unroll):        # manual unroll: straight-line steps
            t = base + u
            drow = delta_sc[pl.ds(t, 1), :]           # (1, E)
            vrow = v_sc[pl.ds(t, 1), :]               # (1, E)
            bc_t = bccol_sc[t]                        # (2S, 1)
            b_col = bc_t[:d_state]                    # (S, 1)
            c_col = bc_t[d_state:]                    # (S, 1)
            dA = jnp.exp(drow * a_neg)                # (S, E)  EUP
            h = dA * h + b_col * vrow                 # (S, E)  VPU
            y_sc[pl.ds(t, 1), :] = jnp.sum(h * c_col, axis=0, keepdims=True)
        return h

    h0 = h_sc[...]
    hT = lax.fori_loop(0, T // unroll, step_block, h0)
    h_sc[...] = hT                     # carry SSM state to the next chunk

    # ---- skip term, gate with SiLU(z), out_proj, residual ----
    y = y_sc[...] + d_skip_ref[...] * xs_c
    y = y * _silu(z)
    out = mm(y, w_out_ref)
    # Dropout(p=0.0) and DropPath(p=0.0) are identities in eval mode.
    out_ref[0] = out + xb


def _pick_chunk(L):
    """Chunk length along the sequence: full L if small, else a /8 divisor."""
    if L <= 256:
        return L
    for t in (256, 128, 64, 32, 16, 8):
        if L % t == 0:
            return t
    return L   # fall back to un-chunked (still correct)


def basic_block_forward(x, params, *, matmul_dtype=jnp.float32, chunk=None):
    B, L, dim = x.shape
    d_inner = params["wx"].shape[1]
    d_state = params["A_logT"].shape[0]
    d_conv = params["conv_w"].shape[0]
    pad = d_conv - 1

    T = chunk if chunk is not None else _pick_chunk(L)
    assert L % T == 0 and T >= pad, "chunk must divide L and cover the conv taps"
    n_chunks = L // T
    unroll = max(u for u in (8, 4, 2, 1) if T % u == 0)

    # ---- wrapper-side parameter fusion / precompute (done once, outside) ----
    wcast = lambda w: w.astype(matmul_dtype)
    fused = dict(
        gamma=params["gamma"],
        beta=params["beta"],
        w_in=wcast(jnp.concatenate([params["wx"], params["wz"]], axis=1)),
        conv_w=params["conv_w"],
        conv_b=params["conv_b"],
        w_xproj=wcast(jnp.concatenate(
            [params["w_dtlow"], params["w_B"], params["w_C"]], axis=1)),
        w_dt=wcast(params["w_dt"]),
        b_dt=params["b_dt"],
        a_neg=-jnp.exp(params["A_logT"]),     # precompute A = -exp(A_log)
        d_skip=params["D"],
        w_out=wcast(params["w_out"]),
    )

    in_specs = [pl.BlockSpec((1, T, dim), lambda b, c: (b, c, 0))]
    for name in PARAM_NAMES:
        shp = fused[name].shape
        in_specs.append(pl.BlockSpec(shp, lambda b, c: (0, 0)))

    scratch_shapes = [
        pltpu.VMEM((d_state, d_inner), jnp.float32),    # h carry across chunks
        pltpu.VMEM((pad + T, d_inner), jnp.float32),    # conv input (+carry)
        pltpu.VMEM((T, d_inner), jnp.float32),          # delta
        pltpu.VMEM((T, d_inner), jnp.float32),          # delta * xs_c
        pltpu.VMEM((T, d_inner), jnp.float32),          # y accumulator
        pltpu.VMEM((T, 2 * d_state, 1), jnp.float32),   # B,C columns per step
    ]

    # rough VMEM budget: scratches (lane-padded) + double-buffered I/O + params
    def _nb(shape):
        n = 1
        for d in shape:
            n *= d
        return 4 * n
    scratch_bytes = (_nb((d_state, d_inner)) + _nb((pad + T, d_inner))
                     + 3 * _nb((T, d_inner)) + _nb((T, 2 * d_state, 128)))
    io_bytes = 2 * 2 * _nb((T, dim))
    param_bytes = sum(int(v.size) * v.dtype.itemsize for v in fused.values())
    vmem_limit = int(min(64 * 2**20,
                         max(32 * 2**20,
                             4 * (scratch_bytes + io_bytes + param_bytes))))

    kernel = functools.partial(basic_block_kernel, unroll=unroll)
    return pl.pallas_call(
        kernel,
        out_shape=jax.ShapeDtypeStruct((B, L, dim), jnp.float32),
        grid=(B, n_chunks),
        in_specs=in_specs,
        out_specs=pl.BlockSpec((1, T, dim), lambda b, c: (b, c, 0)),
        scratch_shapes=scratch_shapes,
        compiler_params=pltpu.CompilerParams(
            dimension_semantics=("parallel", "arbitrary"),
            vmem_limit_bytes=vmem_limit),
    )(x, *[fused[k] for k in PARAM_NAMES])


def make_params(dim, key):
    d_inner = EXPAND * dim
    dt_rank = max(1, math.ceil(dim / 16))
    ks = jax.random.split(key, 10)

    def nrm(k, shape, scale):
        return jax.random.normal(k, shape, jnp.float32) * scale

    return dict(
        gamma=jnp.ones((1, dim), jnp.float32),
        beta=jnp.zeros((1, dim), jnp.float32),
        wx=nrm(ks[0], (dim, d_inner), 1.0 / math.sqrt(dim)),
        wz=nrm(ks[1], (dim, d_inner), 1.0 / math.sqrt(dim)),
        conv_w=nrm(ks[2], (D_CONV, d_inner), 1.0 / math.sqrt(D_CONV)),
        conv_b=nrm(ks[3], (1, d_inner), 0.1),
        w_dtlow=nrm(ks[4], (d_inner, dt_rank), 1.0 / math.sqrt(d_inner)),
        w_B=nrm(ks[5], (d_inner, D_STATE), 1.0 / math.sqrt(d_inner)),
        w_C=nrm(ks[6], (d_inner, D_STATE), 1.0 / math.sqrt(d_inner)),
        w_dt=nrm(ks[7], (dt_rank, d_inner), 1.0 / math.sqrt(dt_rank)),
        b_dt=nrm(ks[8], (1, d_inner), 0.1),
        # S4D-real init, stored transposed (d_state, d_inner)
        A_logT=jnp.tile(
            jnp.log(jnp.arange(1, D_STATE + 1, dtype=jnp.float32))[:, None],
            (1, d_inner)),
        D=jnp.ones((1, d_inner), jnp.float32),
        w_out=nrm(ks[9], (d_inner, dim), 1.0 / math.sqrt(d_inner)),
    )


def ref_basic_block(x, params):
    """Pure-JAX reference with identical math (for sanity checking)."""
    B, L, dim = x.shape
    mu = x.mean(-1, keepdims=True)
    var = ((x - mu) ** 2).mean(-1, keepdims=True)
    hn = (x - mu) / jnp.sqrt(var + LN_EPS) * params["gamma"][0] + params["beta"][0]

    xs = hn @ params["wx"]
    z = hn @ params["wz"]
    d_inner = xs.shape[-1]

    pad = D_CONV - 1
    xs_pad = jnp.concatenate(
        [jnp.zeros((B, pad, d_inner), jnp.float32), xs], axis=1)
    conv = jnp.zeros((B, L, d_inner), jnp.float32)
    for k in range(D_CONV):
        conv = conv + params["conv_w"][k] * xs_pad[:, k:k + L, :]
    xs_c = jax.nn.silu(conv + params["conv_b"][0])

    dt_low = xs_c @ params["w_dtlow"]
    Bm = xs_c @ params["w_B"]
    Cm = xs_c @ params["w_C"]
    delta = jax.nn.softplus(dt_low @ params["w_dt"] + params["b_dt"][0])

    A_T = -jnp.exp(params["A_logT"])                                   # (S, E)
    dA = jnp.exp(delta[:, :, None, :] * A_T[None, None, :, :])         # (B,L,S,E)
    dBx = Bm[:, :, :, None] * (delta * xs_c)[:, :, None, :]            # (B,L,S,E)

    def step(h, inp):
        dA_t, dBx_t, C_t = inp
        h = dA_t * h + dBx_t                                           # (B,S,E)
        y_t = jnp.einsum("bse,bs->be", h, C_t)
        return h, y_t

    h0 = jnp.zeros((B, D_STATE, d_inner), jnp.float32)
    _, ys = lax.scan(step, h0,
                     (dA.transpose(1, 0, 2, 3),
                      dBx.transpose(1, 0, 2, 3),
                      Cm.transpose(1, 0, 2)))
    y = ys.transpose(1, 0, 2) + params["D"][0] * xs_c
    y = y * jax.nn.silu(z)
    return y @ params["w_out"] + x


if __name__ == "__main__":
    key = jax.random.PRNGKey(0)
    kx, kp = jax.random.split(key)
    B, L, dim = 2, 8, 32  # batch=2, seq=8 tokens, d_model=32

    x = jax.random.normal(kx, (B, L, dim), jnp.float32)
    params = make_params(dim, kp)

    out = basic_block_forward(x, params)
    jax.block_until_ready(out)

    ref = ref_basic_block(x, params)
    assert out.shape == (B, L, dim)
    max_err = float(jnp.max(jnp.abs(out - ref)))
    assert max_err < 5e-2, f"mismatch vs reference: max abs err = {max_err}"

    print("KERNEL_OK")
</pallas_src>

<mosaic_0001>
module attributes {stable_mosaic.version = 11 : i64} {
  func.func @basic_block_kernel(%arg0: i32, %arg1: i32, %arg2: memref<1x8x32xf32, #tpu.memory_space<vmem>>, %arg3: memref<1x32xf32, #tpu.memory_space<vmem>>, %arg4: memref<1x32xf32, #tpu.memory_space<vmem>>, %arg5: memref<32x128xf32, #tpu.memory_space<vmem>>, %arg6: memref<4x64xf32, #tpu.memory_space<vmem>>, %arg7: memref<1x64xf32, #tpu.memory_space<vmem>>, %arg8: memref<64x34xf32, #tpu.memory_space<vmem>>, %arg9: memref<2x64xf32, #tpu.memory_space<vmem>>, %arg10: memref<1x64xf32, #tpu.memory_space<vmem>>, %arg11: memref<16x64xf32, #tpu.memory_space<vmem>>, %arg12: memref<1x64xf32, #tpu.memory_space<vmem>>, %arg13: memref<64x32xf32, #tpu.memory_space<vmem>>, %arg14: memref<1x8x32xf32, #tpu.memory_space<vmem>>, %arg15: memref<16x64xf32, #tpu.memory_space<vmem>>, %arg16: memref<11x64xf32, #tpu.memory_space<vmem>>, %arg17: memref<8x64xf32, #tpu.memory_space<vmem>>, %arg18: memref<8x64xf32, #tpu.memory_space<vmem>>, %arg19: memref<8x64xf32, #tpu.memory_space<vmem>>, %arg20: memref<8x32x1xf32, #tpu.memory_space<vmem>>) attributes {dimension_semantics = [#tpu.dimension_semantics<parallel>, #tpu.dimension_semantics<arbitrary>], iteration_bounds = array<i64: 2, 1>, scalar_prefetch = 0 : i64, scratch_operands = 6 : i64, tpu.core_type = #tpu.core_type<tc>, window_params = [{transform_indices = @transform_0, window_bounds = array<i64: 1, 8, 32>}, {pipeline_mode = #tpu.pipeline_mode<synchronous>, transform_indices = @transform_1, window_bounds = array<i64: 1, 32>}, {pipeline_mode = #tpu.pipeline_mode<synchronous>, transform_indices = @transform_2, window_bounds = array<i64: 1, 32>}, {pipeline_mode = #tpu.pipeline_mode<synchronous>, transform_indices = @transform_3, window_bounds = array<i64: 32, 128>}, {pipeline_mode = #tpu.pipeline_mode<synchronous>, transform_indices = @transform_4, window_bounds = array<i64: 4, 64>}, {pipeline_mode = #tpu.pipeline_mode<synchronous>, transform_indices = @transform_5, window_bounds = array<i64: 1, 64>}, {pipeline_mode = #tpu.pipeline_mode<synchronous>, transform_indices = @transform_6, window_bounds = array<i64: 64, 34>}, {pipeline_mode = #tpu.pipeline_mode<synchronous>, transform_indices = @transform_7, window_bounds = array<i64: 2, 64>}, {pipeline_mode = #tpu.pipeline_mode<synchronous>, transform_indices = @transform_8, window_bounds = array<i64: 1, 64>}, {pipeline_mode = #tpu.pipeline_mode<synchronous>, transform_indices = @transform_9, window_bounds = array<i64: 16, 64>}, {pipeline_mode = #tpu.pipeline_mode<synchronous>, transform_indices = @transform_10, window_bounds = array<i64: 1, 64>}, {pipeline_mode = #tpu.pipeline_mode<synchronous>, transform_indices = @transform_11, window_bounds = array<i64: 64, 32>}, {transform_indices = @transform_12, window_bounds = array<i64: 1, 8, 32>}]} {
    %c0_i32 = arith.constant 0 : i32
    %0 = arith.cmpi eq, %arg1, %c0_i32 : i32
    %1 = arith.extui %0 : i1 to i32
    %c0_i32_0 = arith.constant 0 : i32
    %2 = arith.cmpi ne, %1, %c0_i32_0 : i32
    scf.if %2 {
      %cst_184 = arith.constant 0.000000e+00 : f32
      %430 = vector.broadcast %cst_184 : f32 to vector<16x64xf32>
      %c0_185 = arith.constant 0 : index
      %c0_186 = arith.constant 0 : index
      %431 = vector.load %arg15[%c0_185, %c0_186] : memref<16x64xf32, #tpu.memory_space<vmem>>, vector<16x64xf32>
      tpu.vector_store %arg15[%c0_185, %c0_186], %430 {strides = array<i32>} : memref<16x64xf32, #tpu.memory_space<vmem>>, vector<16x64xf32>,
      %cst_187 = arith.constant 0.000000e+00 : f32
      %432 = vector.broadcast %cst_187 : f32 to vector<3x64xf32>
      %c0_188 = arith.constant 0 : index
      %c0_189 = arith.constant 0 : index
      %433 = vector.load %arg16[%c0_188, %c0_189] : memref<11x64xf32, #tpu.memory_space<vmem>>, vector<3x64xf32>
      tpu.vector_store %arg16[%c0_188, %c0_189], %432 {strides = array<i32>} : memref<11x64xf32, #tpu.memory_space<vmem>>, vector<3x64xf32>,
    } else {
    }
    %c0 = arith.constant 0 : index
    %c0_1 = arith.constant 0 : index
    %c0_2 = arith.constant 0 : index
    %3 = vector.load %arg2[%c0, %c0_1, %c0_2] : memref<1x8x32xf32, #tpu.memory_space<vmem>>, vector<1x8x32xf32>
    %4 = vector.shape_cast %3 : vector<1x8x32xf32> to vector<8x32xf32>
    %cst = arith.constant dense<0.000000e+00> : vector<8xf32>
    %5 = vector.multi_reduction <add>, %4, %cst [1] : vector<8x32xf32> to vector<8xf32>
    %6 = vector.shape_cast %5 : vector<8xf32> to vector<8x1xf32>
    %cst_3 = arith.constant 3.200000e+01 : f32
    %7 = vector.broadcast %cst_3 : f32 to vector<8x1xf32>
    %8 = arith.divf %6, %7 : vector<8x1xf32>
    %9 = vector.broadcast %8 : vector<8x1xf32> to vector<8x32xf32>
    %10 = arith.subf %4, %9 : vector<8x32xf32>
    %11 = arith.mulf %10, %10 : vector<8x32xf32>
    %cst_4 = arith.constant dense<0.000000e+00> : vector<8xf32>
    %12 = vector.multi_reduction <add>, %11, %cst_4 [1] : vector<8x32xf32> to vector<8xf32>
    %13 = vector.shape_cast %12 : vector<8xf32> to vector<8x1xf32>
    %cst_5 = arith.constant 3.200000e+01 : f32
    %14 = vector.broadcast %cst_5 : f32 to vector<8x1xf32>
    %15 = arith.divf %13, %14 : vector<8x1xf32>
    %cst_6 = arith.constant 9.99999974E-6 : f32
    %16 = vector.broadcast %cst_6 : f32 to vector<8x1xf32>
    %17 = arith.addf %15, %16 : vector<8x1xf32>
    %18 = math.rsqrt %17 : vector<8x1xf32>
    %19 = vector.broadcast %18 : vector<8x1xf32> to vector<8x32xf32>
    %20 = arith.mulf %10, %19 : vector<8x32xf32>
    %c0_7 = arith.constant 0 : index
    %c0_8 = arith.constant 0 : index
    %21 = vector.load %arg3[%c0_7, %c0_8] : memref<1x32xf32, #tpu.memory_space<vmem>>, vector<1x32xf32>
    %22 = vector.broadcast %21 : vector<1x32xf32> to vector<8x32xf32>
    %23 = arith.mulf %20, %22 : vector<8x32xf32>
    %c0_9 = arith.constant 0 : index
    %c0_10 = arith.constant 0 : index
    %24 = vector.load %arg4[%c0_9, %c0_10] : memref<1x32xf32, #tpu.memory_space<vmem>>, vector<1x32xf32>
    %25 = vector.broadcast %24 : vector<1x32xf32> to vector<8x32xf32>
    %26 = arith.addf %23, %25 : vector<8x32xf32>
    %c0_11 = arith.constant 0 : index
    %c0_12 = arith.constant 0 : index
    %27 = vector.load %arg5[%c0_11, %c0_12] : memref<32x128xf32, #tpu.memory_space<vmem>>, vector<32x128xf32>
    %cst_13 = arith.constant dense<0.000000e+00> : vector<8x128xf32>
    %28 = tpu.matmul %26, %27, %cst_13 {dimension_numbers = #tpu.dot_dimension_numbers<[1], [0], [0], [1], [0, 0, 1, 1], [], []>} : vector<8x32xf32>, vector<32x128xf32>, vector<8x128xf32> -> vector<8x128xf32>
    %29 = vector.extract_strided_slice %28 {offsets = [0, 0], sizes = [8, 64], strides = [1, 1]} : vector<8x128xf32> to vector<8x64xf32>
    %30 = vector.extract_strided_slice %28 {offsets = [0, 64], sizes = [8, 64], strides = [1, 1]} : vector<8x128xf32> to vector<8x64xf32>
    %c3 = arith.constant 3 : index
    %c0_14 = arith.constant 0 : index
    %31 = vector.load %arg16[%c3, %c0_14] : memref<11x64xf32, #tpu.memory_space<vmem>>, vector<8x64xf32>
    tpu.vector_store %arg16[%c3, %c0_14], %29 {strides = array<i32>} : memref<11x64xf32, #tpu.memory_space<vmem>>, vector<8x64xf32>,
    %c0_15 = arith.constant 0 : index
    %c0_16 = arith.constant 0 : index
    %32 = vector.load %arg6[%c0_15, %c0_16] : memref<4x64xf32, #tpu.memory_space<vmem>>, vector<4x64xf32>
    %c0_17 = arith.constant 0 : index
    %c0_18 = arith.constant 0 : index
    %33 = vector.load %arg7[%c0_17, %c0_18] : memref<1x64xf32, #tpu.memory_space<vmem>>, vector<1x64xf32>
    %34 = vector.extract_strided_slice %32 {offsets = [0, 0], sizes = [1, 64], strides = [1, 1]} : vector<4x64xf32> to vector<1x64xf32>
    %c0_19 = arith.constant 0 : index
    %c0_20 = arith.constant 0 : index
    %35 = vector.load %arg16[%c0_19, %c0_20] : memref<11x64xf32, #tpu.memory_space<vmem>>, vector<8x64xf32>
    %36 = vector.broadcast %34 : vector<1x64xf32> to vector<8x64xf32>
    %37 = arith.mulf %36, %35 : vector<8x64xf32>
    %38 = vector.broadcast %33 : vector<1x64xf32> to vector<8x64xf32>
    %39 = arith.addf %38, %37 : vector<8x64xf32>
    %40 = vector.extract_strided_slice %32 {offsets = [1, 0], sizes = [1, 64], strides = [1, 1]} : vector<4x64xf32> to vector<1x64xf32>
    %c1 = arith.constant 1 : index
    %c0_21 = arith.constant 0 : index
    %41 = vector.load %arg16[%c1, %c0_21] : memref<11x64xf32, #tpu.memory_space<vmem>>, vector<8x64xf32>
    %42 = vector.broadcast %40 : vector<1x64xf32> to vector<8x64xf32>
    %43 = arith.mulf %42, %41 : vector<8x64xf32>
    %44 = arith.addf %39, %43 : vector<8x64xf32>
    %45 = vector.extract_strided_slice %32 {offsets = [2, 0], sizes = [1, 64], strides = [1, 1]} : vector<4x64xf32> to vector<1x64xf32>
    %c2 = arith.constant 2 : index
    %c0_22 = arith.constant 0 : index
    %46 = vector.load %arg16[%c2, %c0_22] : memref<11x64xf32, #tpu.memory_space<vmem>>, vector<8x64xf32>
    %47 = vector.broadcast %45 : vector<1x64xf32> to vector<8x64xf32>
    %48 = arith.mulf %47, %46 : vector<8x64xf32>
    %49 = arith.addf %44, %48 : vector<8x64xf32>
    %50 = vector.extract_strided_slice %32 {offsets = [3, 0], sizes = [1, 64], strides = [1, 1]} : vector<4x64xf32> to vector<1x64xf32>
    %c3_23 = arith.constant 3 : index
    %c0_24 = arith.constant 0 : index
    %51 = vector.load %arg16[%c3_23, %c0_24] : memref<11x64xf32, #tpu.memory_space<vmem>>, vector<8x64xf32>
    %52 = vector.broadcast %50 : vector<1x64xf32> to vector<8x64xf32>
    %53 = arith.mulf %52, %51 : vector<8x64xf32>
    %54 = arith.addf %49, %53 : vector<8x64xf32>
    %c8 = arith.constant 8 : index
    %c0_25 = arith.constant 0 : index
    %55 = vector.load %arg16[%c8, %c0_25] : memref<11x64xf32, #tpu.memory_space<vmem>>, vector<3x64xf32>
    %c0_26 = arith.constant 0 : index
    %c0_27 = arith.constant 0 : index
    %56 = vector.load %arg16[%c0_26, %c0_27] : memref<11x64xf32, #tpu.memory_space<vmem>>, vector<3x64xf32>
    tpu.vector_store %arg16[%c0_26, %c0_27], %55 {strides = array<i32>} : memref<11x64xf32, #tpu.memory_space<vmem>>, vector<3x64xf32>,
    %cst_28 = arith.constant 0.000000e+00 : f32
    %57 = vector.broadcast %cst_28 : f32 to vector<8x64xf32>
    %58 = arith.subf %57, %54 : vector<8x64xf32>
    %59 = math.exp %58 : vector<8x64xf32>
    %cst_29 = arith.constant 1.000000e+00 : f32
    %60 = vector.broadcast %cst_29 : f32 to vector<8x64xf32>
    %61 = arith.addf %60, %59 : vector<8x64xf32>
    %cst_30 = arith.constant 1.000000e+00 : f32
    %62 = vector.broadcast %cst_30 : f32 to vector<8x64xf32>
    %63 = arith.divf %62, %61 : vector<8x64xf32>
    %64 = arith.mulf %54, %63 : vector<8x64xf32>
    %c0_31 = arith.constant 0 : index
    %c0_32 = arith.constant 0 : index
    %65 = vector.load %arg8[%c0_31, %c0_32] : memref<64x34xf32, #tpu.memory_space<vmem>>, vector<64x34xf32>
    %cst_33 = arith.constant dense<0.000000e+00> : vector<8x34xf32>
    %66 = tpu.matmul %64, %65, %cst_33 {dimension_numbers = #tpu.dot_dimension_numbers<[1], [0], [0], [1], [0, 0, 1, 1], [], []>} : vector<8x64xf32>, vector<64x34xf32>, vector<8x34xf32> -> vector<8x34xf32>
    %67 = vector.extract_strided_slice %66 {offsets = [0, 0], sizes = [8, 2], strides = [1, 1]} : vector<8x34xf32> to vector<8x2xf32>
    %68 = vector.extract_strided_slice %66 {offsets = [0, 2], sizes = [8, 32], strides = [1, 1]} : vector<8x34xf32> to vector<8x32xf32>
    %c0_34 = arith.constant 0 : index
    %c0_35 = arith.constant 0 : index
    %69 = vector.load %arg9[%c0_34, %c0_35] : memref<2x64xf32, #tpu.memory_space<vmem>>, vector<2x64xf32>
    %cst_36 = arith.constant dense<0.000000e+00> : vector<8x64xf32>
    %70 = tpu.matmul %67, %69, %cst_36 {dimension_numbers = #tpu.dot_dimension_numbers<[1], [0], [0], [1], [0, 0, 1, 1], [], []>} : vector<8x2xf32>, vector<2x64xf32>, vector<8x64xf32> -> vector<8x64xf32>
    %c0_37 = arith.constant 0 : index
    %c0_38 = arith.constant 0 : index
    %71 = vector.load %arg10[%c0_37, %c0_38] : memref<1x64xf32, #tpu.memory_space<vmem>>, vector<1x64xf32>
    %72 = vector.broadcast %71 : vector<1x64xf32> to vector<8x64xf32>
    %73 = arith.addf %70, %72 : vector<8x64xf32>
    %cst_39 = arith.constant 0.000000e+00 : f32
    %74 = vector.broadcast %cst_39 : f32 to vector<8x64xf32>
    %75 = arith.maximumf %73, %74 : vector<8x64xf32>
    %76 = math.absf %73 : vector<8x64xf32>
    %cst_40 = arith.constant 0.000000e+00 : f32
    %77 = vector.broadcast %cst_40 : f32 to vector<8x64xf32>
    %78 = arith.subf %77, %76 : vector<8x64xf32>
    %79 = math.exp %78 : vector<8x64xf32>
    %80 = math.log1p %79 : vector<8x64xf32>
    %81 = arith.addf %75, %80 : vector<8x64xf32>
    %c0_41 = arith.constant 0 : index
    %c0_42 = arith.constant 0 : index
    %82 = vector.load %arg17[%c0_41, %c0_42] : memref<8x64xf32, #tpu.memory_space<vmem>>, vector<8x64xf32>
    tpu.vector_store %arg17[%c0_41, %c0_42], %81 {strides = array<i32>} : memref<8x64xf32, #tpu.memory_space<vmem>>, vector<8x64xf32>,
    %83 = arith.mulf %81, %64 : vector<8x64xf32>
    %c0_43 = arith.constant 0 : index
    %c0_44 = arith.constant 0 : index
    %84 = vector.load %arg18[%c0_43, %c0_44] : memref<8x64xf32, #tpu.memory_space<vmem>>, vector<8x64xf32>
    tpu.vector_store %arg18[%c0_43, %c0_44], %83 {strides = array<i32>} : memref<8x64xf32, #tpu.memory_space<vmem>>, vector<8x64xf32>,
    %85 = vector.extract_strided_slice %68 {offsets = [0, 0], sizes = [8, 1], strides = [1, 1]} : vector<8x32xf32> to vector<8x1xf32>
    %c0_45 = arith.constant 0 : index
    %c0_46 = arith.constant 0 : index
    %c0_47 = arith.constant 0 : index
    %86 = vector.load %arg20[%c0_45, %c0_46, %c0_47] : memref<8x32x1xf32, #tpu.memory_space<vmem>>, vector<8x1x1xf32>
    %87 = vector.shape_cast %86 : vector<8x1x1xf32> to vector<8x1xf32>
    %88 = vector.shape_cast %85 : vector<8x1xf32> to vector<8x1x1xf32>
    tpu.vector_store %arg20[%c0_45, %c0_46, %c0_47], %88 {strides = array<i32>} : memref<8x32x1xf32, #tpu.memory_space<vmem>>, vector<8x1x1xf32>,
    %89 = vector.extract_strided_slice %68 {offsets = [0, 1], sizes = [8, 1], strides = [1, 1]} : vector<8x32xf32> to vector<8x1xf32>
    %c0_48 = arith.constant 0 : index
    %c1_49 = arith.constant 1 : index
    %c0_50 = arith.constant 0 : index
    %90 = vector.load %arg20[%c0_48, %c1_49, %c0_50] : memref<8x32x1xf32, #tpu.memory_space<vmem>>, vector<8x1x1xf32>
    %91 = vector.shape_cast %90 : vector<8x1x1xf32> to vector<8x1xf32>
    %92 = vector.shape_cast %89 : vector<8x1xf32> to vector<8x1x1xf32>
    tpu.vector_store %arg20[%c0_48, %c1_49, %c0_50], %92 {strides = array<i32>} : memref<8x32x1xf32, #tpu.memory_space<vmem>>, vector<8x1x1xf32>,
    %93 = vector.extract_strided_slice %68 {offsets = [0, 2], sizes = [8, 1], strides = [1, 1]} : vector<8x32xf32> to vector<8x1xf32>
    %c0_51 = arith.constant 0 : index
    %c2_52 = arith.constant 2 : index
    %c0_53 = arith.constant 0 : index
    %94 = vector.load %arg20[%c0_51, %c2_52, %c0_53] : memref<8x32x1xf32, #tpu.memory_space<vmem>>, vector<8x1x1xf32>
    %95 = vector.shape_cast %94 : vector<8x1x1xf32> to vector<8x1xf32>
    %96 = vector.shape_cast %93 : vector<8x1xf32> to vector<8x1x1xf32>
    tpu.vector_store %arg20[%c0_51, %c2_52, %c0_53], %96 {strides = array<i32>} : memref<8x32x1xf32, #tpu.memory_space<vmem>>, vector<8x1x1xf32>,
    %97 = vector.extract_strided_slice %68 {offsets = [0, 3], sizes = [8, 1], strides = [1, 1]} : vector<8x32xf32> to vector<8x1xf32>
    %c0_54 = arith.constant 0 : index
    %c3_55 = arith.constant 3 : index
    %c0_56 = arith.constant 0 : index
    %98 = vector.load %arg20[%c0_54, %c3_55, %c0_56] : memref<8x32x1xf32, #tpu.memory_space<vmem>>, vector<8x1x1xf32>
    %99 = vector.shape_cast %98 : vector<8x1x1xf32> to vector<8x1xf32>
    %100 = vector.shape_cast %97 : vector<8x1xf32> to vector<8x1x1xf32>
    tpu.vector_store %arg20[%c0_54, %c3_55, %c0_56], %100 {strides = array<i32>} : memref<8x32x1xf32, #tpu.memory_space<vmem>>, vector<8x1x1xf32>,
    %101 = vector.extract_strided_slice %68 {offsets = [0, 4], sizes = [8, 1], strides = [1, 1]} : vector<8x32xf32> to vector<8x1xf32>
    %c0_57 = arith.constant 0 : index
    %c4 = arith.constant 4 : index
    %c0_58 = arith.constant 0 : index
    %102 = vector.load %arg20[%c0_57, %c4, %c0_58] : memref<8x32x1xf32, #tpu.memory_space<vmem>>, vector<8x1x1xf32>
    %103 = vector.shape_cast %102 : vector<8x1x1xf32> to vector<8x1xf32>
    %104 = vector.shape_cast %101 : vector<8x1xf32> to vector<8x1x1xf32>
    tpu.vector_store %arg20[%c0_57, %c4, %c0_58], %104 {strides = array<i32>} : memref<8x32x1xf32, #tpu.memory_space<vmem>>, vector<8x1x1xf32>,
    %105 = vector.extract_strided_slice %68 {offsets = [0, 5], sizes = [8, 1], strides = [1, 1]} : vector<8x32xf32> to vector<8x1xf32>
    %c0_59 = arith.constant 0 : index
    %c5 = arith.constant 5 : index
    %c0_60 = arith.constant 0 : index
    %106 = vector.load %arg20[%c0_59, %c5, %c0_60] : memref<8x32x1xf32, #tpu.memory_space<vmem>>, vector<8x1x1xf32>
    %107 = vector.shape_cast %106 : vector<8x1x1xf32> to vector<8x1xf32>
    %108 = vector.shape_cast %105 : vector<8x1xf32> to vector<8x1x1xf32>
    tpu.vector_store %arg20[%c0_59, %c5, %c0_60], %108 {strides = array<i32>} : memref<8x32x1xf32, #tpu.memory_space<vmem>>, vector<8x1x1xf32>,
    %109 = vector.extract_strided_slice %68 {offsets = [0, 6], sizes = [8, 1], strides = [1, 1]} : vector<8x32xf32> to vector<8x1xf32>
    %c0_61 = arith.constant 0 : index
    %c6 = arith.constant 6 : index
    %c0_62 = arith.constant 0 : index
    %110 = vector.load %arg20[%c0_61, %c6, %c0_62] : memref<8x32x1xf32, #tpu.memory_space<vmem>>, vector<8x1x1xf32>
    %111 = vector.shape_cast %110 : vector<8x1x1xf32> to vector<8x1xf32>
    %112 = vector.shape_cast %109 : vector<8x1xf32> to vector<8x1x1xf32>
    tpu.vector_store %arg20[%c0_61, %c6, %c0_62], %112 {strides = array<i32>} : memref<8x32x1xf32, #tpu.memory_space<vmem>>, vector<8x1x1xf32>,
    %113 = vector.extract_strided_slice %68 {offsets = [0, 7], sizes = [8, 1], strides = [1, 1]} : vector<8x32xf32> to vector<8x1xf32>
    %c0_63 = arith.constant 0 : index
    %c7 = arith.constant 7 : index
    %c0_64 = arith.constant 0 : index
    %114 = vector.load %arg20[%c0_63, %c7, %c0_64] : memref<8x32x1xf32, #tpu.memory_space<vmem>>, vector<8x1x1xf32>
    %115 = vector.shape_cast %114 : vector<8x1x1xf32> to vector<8x1xf32>
    %116 = vector.shape_cast %113 : vector<8x1xf32> to vector<8x1x1xf32>
    tpu.vector_store %arg20[%c0_63, %c7, %c0_64], %116 {strides = array<i32>} : memref<8x32x1xf32, #tpu.memory_space<vmem>>, vector<8x1x1xf32>,
    %117 = vector.extract_strided_slice %68 {offsets = [0, 8], sizes = [8, 1], strides = [1, 1]} : vector<8x32xf32> to vector<8x1xf32>
    %c0_65 = arith.constant 0 : index
    %c8_66 = arith.constant 8 : index
    %c0_67 = arith.constant 0 : index
    %118 = vector.load %arg20[%c0_65, %c8_66, %c0_67] : memref<8x32x1xf32, #tpu.memory_space<vmem>>, vector<8x1x1xf32>
    %119 = vector.shape_cast %118 : vector<8x1x1xf32> to vector<8x1xf32>
    %120 = vector.shape_cast %117 : vector<8x1xf32> to vector<8x1x1xf32>
    tpu.vector_store %arg20[%c0_65, %c8_66, %c0_67], %120 {strides = array<i32>} : memref<8x32x1xf32, #tpu.memory_space<vmem>>, vector<8x1x1xf32>,
    %121 = vector.extract_strided_slice %68 {offsets = [0, 9], sizes = [8, 1], strides = [1, 1]} : vector<8x32xf32> to vector<8x1xf32>
    %c0_68 = arith.constant 0 : index
    %c9 = arith.constant 9 : index
    %c0_69 = arith.constant 0 : index
    %122 = vector.load %arg20[%c0_68, %c9, %c0_69] : memref<8x32x1xf32, #tpu.memory_space<vmem>>, vector<8x1x1xf32>
    %123 = vector.shape_cast %122 : vector<8x1x1xf32> to vector<8x1xf32>
    %124 = vector.shape_cast %121 : vector<8x1xf32> to vector<8x1x1xf32>
    tpu.vector_store %arg20[%c0_68, %c9, %c0_69], %124 {strides = array<i32>} : memref<8x32x1xf32, #tpu.memory_space<vmem>>, vector<8x1x1xf32>,
    %125 = vector.extract_strided_slice %68 {offsets = [0, 10], sizes = [8, 1], strides = [1, 1]} : vector<8x32xf32> to vector<8x1xf32>
    %c0_70 = arith.constant 0 : index
    %c10 = arith.constant 10 : index
    %c0_71 = arith.constant 0 : index
    %126 = vector.load %arg20[%c0_70, %c10, %c0_71] : memref<8x32x1xf32, #tpu.memory_space<vmem>>, vector<8x1x1xf32>
    %127 = vector.shape_cast %126 : vector<8x1x1xf32> to vector<8x1xf32>
    %128 = vector.shape_cast %125 : vector<8x1xf32> to vector<8x1x1xf32>
    tpu.vector_store %arg20[%c0_70, %c10, %c0_71], %128 {strides = array<i32>} : memref<8x32x1xf32, #tpu.memory_space<vmem>>, vector<8x1x1xf32>,
    %129 = vector.extract_strided_slice %68 {offsets = [0, 11], sizes = [8, 1], strides = [1, 1]} : vector<8x32xf32> to vector<8x1xf32>
    %c0_72 = arith.constant 0 : index
    %c11 = arith.constant 11 : index
    %c0_73 = arith.constant 0 : index
    %130 = vector.load %arg20[%c0_72, %c11, %c0_73] : memref<8x32x1xf32, #tpu.memory_space<vmem>>, vector<8x1x1xf32>
    %131 = vector.shape_cast %130 : vector<8x1x1xf32> to vector<8x1xf32>
    %132 = vector.shape_cast %129 : vector<8x1xf32> to vector<8x1x1xf32>
    tpu.vector_store %arg20[%c0_72, %c11, %c0_73], %132 {strides = array<i32>} : memref<8x32x1xf32, #tpu.memory_space<vmem>>, vector<8x1x1xf32>,
    %133 = vector.extract_strided_slice %68 {offsets = [0, 12], sizes = [8, 1], strides = [1, 1]} : vector<8x32xf32> to vector<8x1xf32>
    %c0_74 = arith.constant 0 : index
    %c12 = arith.constant 12 : index
    %c0_75 = arith.constant 0 : index
    %134 = vector.load %arg20[%c0_74, %c12, %c0_75] : memref<8x32x1xf32, #tpu.memory_space<vmem>>, vector<8x1x1xf32>
    %135 = vector.shape_cast %134 : vector<8x1x1xf32> to vector<8x1xf32>
    %136 = vector.shape_cast %133 : vector<8x1xf32> to vector<8x1x1xf32>
    tpu.vector_store %arg20[%c0_74, %c12, %c0_75], %136 {strides = array<i32>} : memref<8x32x1xf32, #tpu.memory_space<vmem>>, vector<8x1x1xf32>,
    %137 = vector.extract_strided_slice %68 {offsets = [0, 13], sizes = [8, 1], strides = [1, 1]} : vector<8x32xf32> to vector<8x1xf32>
    %c0_76 = arith.constant 0 : index
    %c13 = arith.constant 13 : index
    %c0_77 = arith.constant 0 : index
    %138 = vector.load %arg20[%c0_76, %c13, %c0_77] : memref<8x32x1xf32, #tpu.memory_space<vmem>>, vector<8x1x1xf32>
    %139 = vector.shape_cast %138 : vector<8x1x1xf32> to vector<8x1xf32>
    %140 = vector.shape_cast %137 : vector<8x1xf32> to vector<8x1x1xf32>
    tpu.vector_store %arg20[%c0_76, %c13, %c0_77], %140 {strides = array<i32>} : memref<8x32x1xf32, #tpu.memory_space<vmem>>, vector<8x1x1xf32>,
    %141 = vector.extract_strided_slice %68 {offsets = [0, 14], sizes = [8, 1], strides = [1, 1]} : vector<8x32xf32> to vector<8x1xf32>
    %c0_78 = arith.constant 0 : index
    %c14 = arith.constant 14 : index
    %c0_79 = arith.constant 0 : index
    %142 = vector.load %arg20[%c0_78, %c14, %c0_79] : memref<8x32x1xf32, #tpu.memory_space<vmem>>, vector<8x1x1xf32>
    %143 = vector.shape_cast %142 : vector<8x1x1xf32> to vector<8x1xf32>
    %144 = vector.shape_cast %141 : vector<8x1xf32> to vector<8x1x1xf32>
    tpu.vector_store %arg20[%c0_78, %c14, %c0_79], %144 {strides = array<i32>} : memref<8x32x1xf32, #tpu.memory_space<vmem>>, vector<8x1x1xf32>,
    %145 = vector.extract_strided_slice %68 {offsets = [0, 15], sizes = [8, 1], strides = [1, 1]} : vector<8x32xf32> to vector<8x1xf32>
    %c0_80 = arith.constant 0 : index
    %c15 = arith.constant 15 : index
    %c0_81 = arith.constant 0 : index
    %146 = vector.load %arg20[%c0_80, %c15, %c0_81] : memref<8x32x1xf32, #tpu.memory_space<vmem>>, vector<8x1x1xf32>
    %147 = vector.shape_cast %146 : vector<8x1x1xf32> to vector<8x1xf32>
    %148 = vector.shape_cast %145 : vector<8x1xf32> to vector<8x1x1xf32>
    tpu.vector_store %arg20[%c0_80, %c15, %c0_81], %148 {strides = array<i32>} : memref<8x32x1xf32, #tpu.memory_space<vmem>>, vector<8x1x1xf32>,
    %149 = vector.extract_strided_slice %68 {offsets = [0, 16], sizes = [8, 1], strides = [1, 1]} : vector<8x32xf32> to vector<8x1xf32>
    %c0_82 = arith.constant 0 : index
    %c16 = arith.constant 16 : index
    %c0_83 = arith.constant 0 : index
    %150 = vector.load %arg20[%c0_82, %c16, %c0_83] : memref<8x32x1xf32, #tpu.memory_space<vmem>>, vector<8x1x1xf32>
    %151 = vector.shape_cast %150 : vector<8x1x1xf32> to vector<8x1xf32>
    %152 = vector.shape_cast %149 : vector<8x1xf32> to vector<8x1x1xf32>
    tpu.vector_store %arg20[%c0_82, %c16, %c0_83], %152 {strides = array<i32>} : memref<8x32x1xf32, #tpu.memory_space<vmem>>, vector<8x1x1xf32>,
    %153 = vector.extract_strided_slice %68 {offsets = [0, 17], sizes = [8, 1], strides = [1, 1]} : vector<8x32xf32> to vector<8x1xf32>
    %c0_84 = arith.constant 0 : index
    %c17 = arith.constant 17 : index
    %c0_85 = arith.constant 0 : index
    %154 = vector.load %arg20[%c0_84, %c17, %c0_85] : memref<8x32x1xf32, #tpu.memory_space<vmem>>, vector<8x1x1xf32>
    %155 = vector.shape_cast %154 : vector<8x1x1xf32> to vector<8x1xf32>
    %156 = vector.shape_cast %153 : vector<8x1xf32> to vector<8x1x1xf32>
    tpu.vector_store %arg20[%c0_84, %c17, %c0_85], %156 {strides = array<i32>} : memref<8x32x1xf32, #tpu.memory_space<vmem>>, vector<8x1x1xf32>,
    %157 = vector.extract_strided_slice %68 {offsets = [0, 18], sizes = [8, 1], strides = [1, 1]} : vector<8x32xf32> to vector<8x1xf32>
    %c0_86 = arith.constant 0 : index
    %c18 = arith.constant 18 : index
    %c0_87 = arith.constant 0 : index
    %158 = vector.load %arg20[%c0_86, %c18, %c0_87] : memref<8x32x1xf32, #tpu.memory_space<vmem>>, vector<8x1x1xf32>
    %159 = vector.shape_cast %158 : vector<8x1x1xf32> to vector<8x1xf32>
    %160 = vector.shape_cast %157 : vector<8x1xf32> to vector<8x1x1xf32>
    tpu.vector_store %arg20[%c0_86, %c18, %c0_87], %160 {strides = array<i32>} : memref<8x32x1xf32, #tpu.memory_space<vmem>>, vector<8x1x1xf32>,
    %161 = vector.extract_strided_slice %68 {offsets = [0, 19], sizes = [8, 1], strides = [1, 1]} : vector<8x32xf32> to vector<8x1xf32>
    %c0_88 = arith.constant 0 : index
    %c19 = arith.constant 19 : index
    %c0_89 = arith.constant 0 : index
    %162 = vector.load %arg20[%c0_88, %c19, %c0_89] : memref<8x32x1xf32, #tpu.memory_space<vmem>>, vector<8x1x1xf32>
    %163 = vector.shape_cast %162 : vector<8x1x1xf32> to vector<8x1xf32>
    %164 = vector.shape_cast %161 : vector<8x1xf32> to vector<8x1x1xf32>
    tpu.vector_store %arg20[%c0_88, %c19, %c0_89], %164 {strides = array<i32>} : memref<8x32x1xf32, #tpu.memory_space<vmem>>, vector<8x1x1xf32>,
    %165 = vector.extract_strided_slice %68 {offsets = [0, 20], sizes = [8, 1], strides = [1, 1]} : vector<8x32xf32> to vector<8x1xf32>
    %c0_90 = arith.constant 0 : index
    %c20 = arith.constant 20 : index
    %c0_91 = arith.constant 0 : index
    %166 = vector.load %arg20[%c0_90, %c20, %c0_91] : memref<8x32x1xf32, #tpu.memory_space<vmem>>, vector<8x1x1xf32>
    %167 = vector.shape_cast %166 : vector<8x1x1xf32> to vector<8x1xf32>
    %168 = vector.shape_cast %165 : vector<8x1xf32> to vector<8x1x1xf32>
    tpu.vector_store %arg20[%c0_90, %c20, %c0_91], %168 {strides = array<i32>} : memref<8x32x1xf32, #tpu.memory_space<vmem>>, vector<8x1x1xf32>,
    %169 = vector.extract_strided_slice %68 {offsets = [0, 21], sizes = [8, 1], strides = [1, 1]} : vector<8x32xf32> to vector<8x1xf32>
    %c0_92 = arith.constant 0 : index
    %c21 = arith.constant 21 : index
    %c0_93 = arith.constant 0 : index
    %170 = vector.load %arg20[%c0_92, %c21, %c0_93] : memref<8x32x1xf32, #tpu.memory_space<vmem>>, vector<8x1x1xf32>
    %171 = vector.shape_cast %170 : vector<8x1x1xf32> to vector<8x1xf32>
    %172 = vector.shape_cast %169 : vector<8x1xf32> to vector<8x1x1xf32>
    tpu.vector_store %arg20[%c0_92, %c21, %c0_93], %172 {strides = array<i32>} : memref<8x32x1xf32, #tpu.memory_space<vmem>>, vector<8x1x1xf32>,
    %173 = vector.extract_strided_slice %68 {offsets = [0, 22], sizes = [8, 1], strides = [1, 1]} : vector<8x32xf32> to vector<8x1xf32>
    %c0_94 = arith.constant 0 : index
    %c22 = arith.constant 22 : index
    %c0_95 = arith.constant 0 : index
    %174 = vector.load %arg20[%c0_94, %c22, %c0_95] : memref<8x32x1xf32, #tpu.memory_space<vmem>>, vector<8x1x1xf32>
    %175 = vector.shape_cast %174 : vector<8x1x1xf32> to vector<8x1xf32>
    %176 = vector.shape_cast %173 : vector<8x1xf32> to vector<8x1x1xf32>
    tpu.vector_store %arg20[%c0_94, %c22, %c0_95], %176 {strides = array<i32>} : memref<8x32x1xf32, #tpu.memory_space<vmem>>, vector<8x1x1xf32>,
    %177 = vector.extract_strided_slice %68 {offsets = [0, 23], sizes = [8, 1], strides = [1, 1]} : vector<8x32xf32> to vector<8x1xf32>
    %c0_96 = arith.constant 0 : index
    %c23 = arith.constant 23 : index
    %c0_97 = arith.constant 0 : index
    %178 = vector.load %arg20[%c0_96, %c23, %c0_97] : memref<8x32x1xf32, #tpu.memory_space<vmem>>, vector<8x1x1xf32>
    %179 = vector.shape_cast %178 : vector<8x1x1xf32> to vector<8x1xf32>
    %180 = vector.shape_cast %177 : vector<8x1xf32> to vector<8x1x1xf32>
    tpu.vector_store %arg20[%c0_96, %c23, %c0_97], %180 {strides = array<i32>} : memref<8x32x1xf32, #tpu.memory_space<vmem>>, vector<8x1x1xf32>,
    %181 = vector.extract_strided_slice %68 {offsets = [0, 24], sizes = [8, 1], strides = [1, 1]} : vector<8x32xf32> to vector<8x1xf32>
    %c0_98 = arith.constant 0 : index
    %c24 = arith.constant 24 : index
    %c0_99 = arith.constant 0 : index
    %182 = vector.load %arg20[%c0_98, %c24, %c0_99] : memref<8x32x1xf32, #tpu.memory_space<vmem>>, vector<8x1x1xf32>
    %183 = vector.shape_cast %182 : vector<8x1x1xf32> to vector<8x1xf32>
    %184 = vector.shape_cast %181 : vector<8x1xf32> to vector<8x1x1xf32>
    tpu.vector_store %arg20[%c0_98, %c24, %c0_99], %184 {strides = array<i32>} : memref<8x32x1xf32, #tpu.memory_space<vmem>>, vector<8x1x1xf32>,
    %185 = vector.extract_strided_slice %68 {offsets = [0, 25], sizes = [8, 1], strides = [1, 1]} : vector<8x32xf32> to vector<8x1xf32>
    %c0_100 = arith.constant 0 : index
    %c25 = arith.constant 25 : index
    %c0_101 = arith.constant 0 : index
    %186 = vector.load %arg20[%c0_100, %c25, %c0_101] : memref<8x32x1xf32, #tpu.memory_space<vmem>>, vector<8x1x1xf32>
    %187 = vector.shape_cast %186 : vector<8x1x1xf32> to vector<8x1xf32>
    %188 = vector.shape_cast %185 : vector<8x1xf32> to vector<8x1x1xf32>
    tpu.vector_store %arg20[%c0_100, %c25, %c0_101], %188 {strides = array<i32>} : memref<8x32x1xf32, #tpu.memory_space<vmem>>, vector<8x1x1xf32>,
    %189 = vector.extract_strided_slice %68 {offsets = [0, 26], sizes = [8, 1], strides = [1, 1]} : vector<8x32xf32> to vector<8x1xf32>
    %c0_102 = arith.constant 0 : index
    %c26 = arith.constant 26 : index
    %c0_103 = arith.constant 0 : index
    %190 = vector.load %arg20[%c0_102, %c26, %c0_103] : memref<8x32x1xf32, #tpu.memory_space<vmem>>, vector<8x1x1xf32>
    %191 = vector.shape_cast %190 : vector<8x1x1xf32> to vector<8x1xf32>
    %192 = vector.shape_cast %189 : vector<8x1xf32> to vector<8x1x1xf32>
    tpu.vector_store %arg20[%c0_102, %c26, %c0_103], %192 {strides = array<i32>} : memref<8x32x1xf32, #tpu.memory_space<vmem>>, vector<8x1x1xf32>,
    %193 = vector.extract_strided_slice %68 {offsets = [0, 27], sizes = [8, 1], strides = [1, 1]} : vector<8x32xf32> to vector<8x1xf32>
    %c0_104 = arith.constant 0 : index
    %c27 = arith.constant 27 : index
    %c0_105 = arith.constant 0 : index
    %194 = vector.load %arg20[%c0_104, %c27, %c0_105] : memref<8x32x1xf32, #tpu.memory_space<vmem>>, vector<8x1x1xf32>
    %195 = vector.shape_cast %194 : vector<8x1x1xf32> to vector<8x1xf32>
    %196 = vector.shape_cast %193 : vector<8x1xf32> to vector<8x1x1xf32>
    tpu.vector_store %arg20[%c0_104, %c27, %c0_105], %196 {strides = array<i32>} : memref<8x32x1xf32, #tpu.memory_space<vmem>>, vector<8x1x1xf32>,
    %197 = vector.extract_strided_slice %68 {offsets = [0, 28], sizes = [8, 1], strides = [1, 1]} : vector<8x32xf32> to vector<8x1xf32>
    %c0_106 = arith.constant 0 : index
    %c28 = arith.constant 28 : index
    %c0_107 = arith.constant 0 : index
    %198 = vector.load %arg20[%c0_106, %c28, %c0_107] : memref<8x32x1xf32, #tpu.memory_space<vmem>>, vector<8x1x1xf32>
    %199 = vector.shape_cast %198 : vector<8x1x1xf32> to vector<8x1xf32>
    %200 = vector.shape_cast %197 : vector<8x1xf32> to vector<8x1x1xf32>
    tpu.vector_store %arg20[%c0_106, %c28, %c0_107], %200 {strides = array<i32>} : memref<8x32x1xf32, #tpu.memory_space<vmem>>, vector<8x1x1xf32>,
    %201 = vector.extract_strided_slice %68 {offsets = [0, 29], sizes = [8, 1], strides = [1, 1]} : vector<8x32xf32> to vector<8x1xf32>
    %c0_108 = arith.constant 0 : index
    %c29 = arith.constant 29 : index
    %c0_109 = arith.constant 0 : index
    %202 = vector.load %arg20[%c0_108, %c29, %c0_109] : memref<8x32x1xf32, #tpu.memory_space<vmem>>, vector<8x1x1xf32>
    %203 = vector.shape_cast %202 : vector<8x1x1xf32> to vector<8x1xf32>
    %204 = vector.shape_cast %201 : vector<8x1xf32> to vector<8x1x1xf32>
    tpu.vector_store %arg20[%c0_108, %c29, %c0_109], %204 {strides = array<i32>} : memref<8x32x1xf32, #tpu.memory_space<vmem>>, vector<8x1x1xf32>,
    %205 = vector.extract_strided_slice %68 {offsets = [0, 30], sizes = [8, 1], strides = [1, 1]} : vector<8x32xf32> to vector<8x1xf32>
    %c0_110 = arith.constant 0 : index
    %c30 = arith.constant 30 : index
    %c0_111 = arith.constant 0 : index
    %206 = vector.load %arg20[%c0_110, %c30, %c0_111] : memref<8x32x1xf32, #tpu.memory_space<vmem>>, vector<8x1x1xf32>
    %207 = vector.shape_cast %206 : vector<8x1x1xf32> to vector<8x1xf32>
    %208 = vector.shape_cast %205 : vector<8x1xf32> to vector<8x1x1xf32>
    tpu.vector_store %arg20[%c0_110, %c30, %c0_111], %208 {strides = array<i32>} : memref<8x32x1xf32, #tpu.memory_space<vmem>>, vector<8x1x1xf32>,
    %209 = vector.extract_strided_slice %68 {offsets = [0, 31], sizes = [8, 1], strides = [1, 1]} : vector<8x32xf32> to vector<8x1xf32>
    %c0_112 = arith.constant 0 : index
    %c31 = arith.constant 31 : index
    %c0_113 = arith.constant 0 : index
    %210 = vector.load %arg20[%c0_112, %c31, %c0_113] : memref<8x32x1xf32, #tpu.memory_space<vmem>>, vector<8x1x1xf32>
    %211 = vector.shape_cast %210 : vector<8x1x1xf32> to vector<8x1xf32>
    %212 = vector.shape_cast %209 : vector<8x1xf32> to vector<8x1x1xf32>
    tpu.vector_store %arg20[%c0_112, %c31, %c0_113], %212 {strides = array<i32>} : memref<8x32x1xf32, #tpu.memory_space<vmem>>, vector<8x1x1xf32>,
    %c0_114 = arith.constant 0 : index
    %c0_115 = arith.constant 0 : index
    %213 = vector.load %arg11[%c0_114, %c0_115] : memref<16x64xf32, #tpu.memory_space<vmem>>, vector<16x64xf32>
    %c0_116 = arith.constant 0 : index
    %c0_117 = arith.constant 0 : index
    %214 = vector.load %arg15[%c0_116, %c0_117] : memref<16x64xf32, #tpu.memory_space<vmem>>, vector<16x64xf32>
    %c0_i32_118 = arith.constant 0 : i32
    %c8_i32 = arith.constant 8 : i32
    %215 = arith.muli %c0_i32_118, %c8_i32 : i32
    %216 = tpu.assume_multiple %215, 8 : i32
    %c0_i32_119 = arith.constant 0 : i32
    %217 = arith.addi %216, %c0_i32_119 : i32
    %218 = arith.index_cast %217 : i32 to index
    %c0_120 = arith.constant 0 : index
    %219 = vector.load %arg17[%218, %c0_120] : memref<8x64xf32, #tpu.memory_space<vmem>>, vector<1x64xf32>
    %220 = arith.index_cast %217 : i32 to index
    %c0_121 = arith.constant 0 : index
    %221 = vector.load %arg18[%220, %c0_121] : memref<8x64xf32, #tpu.memory_space<vmem>>, vector<1x64xf32>
    %222 = arith.index_cast %217 : i32 to index
    %c0_122 = arith.constant 0 : index
    %c0_123 = arith.constant 0 : index
    %223 = vector.load %arg20[%222, %c0_122, %c0_123] : memref<8x32x1xf32, #tpu.memory_space<vmem>>, vector<1x32x1xf32>
    %224 = vector.shape_cast %223 : vector<1x32x1xf32> to vector<32x1xf32>
    %225 = vector.extract_strided_slice %224 {offsets = [0, 0], sizes = [16, 1], strides = [1, 1]} : vector<32x1xf32> to vector<16x1xf32>
    %226 = vector.extract_strided_slice %224 {offsets = [16, 0], sizes = [16, 1], strides = [1, 1]} : vector<32x1xf32> to vector<16x1xf32>
    %227 = vector.broadcast %219 : vector<1x64xf32> to vector<16x64xf32>
    %228 = arith.mulf %227, %213 : vector<16x64xf32>
    %229 = math.exp %228 : vector<16x64xf32>
    %230 = arith.mulf %229, %214 : vector<16x64xf32>
    %231 = vector.broadcast %225 : vector<16x1xf32> to vector<16x64xf32>
    %232 = vector.broadcast %221 : vector<1x64xf32> to vector<16x64xf32>
    %233 = arith.mulf %231, %232 : vector<16x64xf32>
    %234 = arith.addf %230, %233 : vector<16x64xf32>
    %235 = vector.broadcast %226 : vector<16x1xf32> to vector<16x64xf32>
    %236 = arith.mulf %234, %235 : vector<16x64xf32>
    %cst_124 = arith.constant dense<0.000000e+00> : vector<64xf32>
    %237 = vector.multi_reduction <add>, %236, %cst_124 [0] : vector<16x64xf32> to vector<64xf32>
    %238 = vector.shape_cast %237 : vector<64xf32> to vector<1x64xf32>
    %239 = arith.index_cast %217 : i32 to index
    %c0_125 = arith.constant 0 : index
    %240 = vector.load %arg19[%239, %c0_125] : memref<8x64xf32, #tpu.memory_space<vmem>>, vector<1x64xf32>
    tpu.vector_store %arg19[%239, %c0_125], %238 {strides = array<i32>} : memref<8x64xf32, #tpu.memory_space<vmem>>, vector<1x64xf32>,
    %c1_i32 = arith.constant 1 : i32
    %241 = arith.addi %216, %c1_i32 : i32
    %242 = arith.index_cast %241 : i32 to index
    %c0_126 = arith.constant 0 : index
    %243 = vector.load %arg17[%242, %c0_126] : memref<8x64xf32, #tpu.memory_space<vmem>>, vector<1x64xf32>
    %244 = arith.index_cast %241 : i32 to index
    %c0_127 = arith.constant 0 : index
    %245 = vector.load %arg18[%244, %c0_127] : memref<8x64xf32, #tpu.memory_space<vmem>>, vector<1x64xf32>
    %246 = arith.index_cast %241 : i32 to index
    %c0_128 = arith.constant 0 : index
    %c0_129 = arith.constant 0 : index
    %247 = vector.load %arg20[%246, %c0_128, %c0_129] : memref<8x32x1xf32, #tpu.memory_space<vmem>>, vector<1x32x1xf32>
    %248 = vector.shape_cast %247 : vector<1x32x1xf32> to vector<32x1xf32>
    %249 = vector.extract_strided_slice %248 {offsets = [0, 0], sizes = [16, 1], strides = [1, 1]} : vector<32x1xf32> to vector<16x1xf32>
    %250 = vector.extract_strided_slice %248 {offsets = [16, 0], sizes = [16, 1], strides = [1, 1]} : vector<32x1xf32> to vector<16x1xf32>
    %251 = vector.broadcast %243 : vector<1x64xf32> to vector<16x64xf32>
    %252 = arith.mulf %251, %213 : vector<16x64xf32>
    %253 = math.exp %252 : vector<16x64xf32>
    %254 = arith.mulf %253, %234 : vector<16x64xf32>
    %255 = vector.broadcast %249 : vector<16x1xf32> to vector<16x64xf32>
    %256 = vector.broadcast %245 : vector<1x64xf32> to vector<16x64xf32>
    %257 = arith.mulf %255, %256 : vector<16x64xf32>
    %258 = arith.addf %254, %257 : vector<16x64xf32>
    %259 = vector.broadcast %250 : vector<16x1xf32> to vector<16x64xf32>
    %260 = arith.mulf %258, %259 : vector<16x64xf32>
    %cst_130 = arith.constant dense<0.000000e+00> : vector<64xf32>
    %261 = vector.multi_reduction <add>, %260, %cst_130 [0] : vector<16x64xf32> to vector<64xf32>
    %262 = vector.shape_cast %261 : vector<64xf32> to vector<1x64xf32>
    %263 = arith.index_cast %241 : i32 to index
    %c0_131 = arith.constant 0 : index
    %264 = vector.load %arg19[%263, %c0_131] : memref<8x64xf32, #tpu.memory_space<vmem>>, vector<1x64xf32>
    tpu.vector_store %arg19[%263, %c0_131], %262 {strides = array<i32>} : memref<8x64xf32, #tpu.memory_space<vmem>>, vector<1x64xf32>,
    %c2_i32 = arith.constant 2 : i32
    %265 = arith.addi %216, %c2_i32 : i32
    %266 = arith.index_cast %265 : i32 to index
    %c0_132 = arith.constant 0 : index
    %267 = vector.load %arg17[%266, %c0_132] : memref<8x64xf32, #tpu.memory_space<vmem>>, vector<1x64xf32>
    %268 = arith.index_cast %265 : i32 to index
    %c0_133 = arith.constant 0 : index
    %269 = vector.load %arg18[%268, %c0_133] : memref<8x64xf32, #tpu.memory_space<vmem>>, vector<1x64xf32>
    %270 = arith.index_cast %265 : i32 to index
    %c0_134 = arith.constant 0 : index
    %c0_135 = arith.constant 0 : index
    %271 = vector.load %arg20[%270, %c0_134, %c0_135] : memref<8x32x1xf32, #tpu.memory_space<vmem>>, vector<1x32x1xf32>
    %272 = vector.shape_cast %271 : vector<1x32x1xf32> to vector<32x1xf32>
    %273 = vector.extract_strided_slice %272 {offsets = [0, 0], sizes = [16, 1], strides = [1, 1]} : vector<32x1xf32> to vector<16x1xf32>
    %274 = vector.extract_strided_slice %272 {offsets = [16, 0], sizes = [16, 1], strides = [1, 1]} : vector<32x1xf32> to vector<16x1xf32>
    %275 = vector.broadcast %267 : vector<1x64xf32> to vector<16x64xf32>
    %276 = arith.mulf %275, %213 : vector<16x64xf32>
    %277 = math.exp %276 : vector<16x64xf32>
    %278 = arith.mulf %277, %258 : vector<16x64xf32>
    %279 = vector.broadcast %273 : vector<16x1xf32> to vector<16x64xf32>
    %280 = vector.broadcast %269 : vector<1x64xf32> to vector<16x64xf32>
    %281 = arith.mulf %279, %280 : vector<16x64xf32>
    %282 = arith.addf %278, %281 : vector<16x64xf32>
    %283 = vector.broadcast %274 : vector<16x1xf32> to vector<16x64xf32>
    %284 = arith.mulf %282, %283 : vector<16x64xf32>
    %cst_136 = arith.constant dense<0.000000e+00> : vector<64xf32>
    %285 = vector.multi_reduction <add>, %284, %cst_136 [0] : vector<16x64xf32> to vector<64xf32>
    %286 = vector.shape_cast %285 : vector<64xf32> to vector<1x64xf32>
    %287 = arith.index_cast %265 : i32 to index
    %c0_137 = arith.constant 0 : index
    %288 = vector.load %arg19[%287, %c0_137] : memref<8x64xf32, #tpu.memory_space<vmem>>, vector<1x64xf32>
    tpu.vector_store %arg19[%287, %c0_137], %286 {strides = array<i32>} : memref<8x64xf32, #tpu.memory_space<vmem>>, vector<1x64xf32>,
    %c3_i32 = arith.constant 3 : i32
    %289 = arith.addi %216, %c3_i32 : i32
    %290 = arith.index_cast %289 : i32 to index
    %c0_138 = arith.constant 0 : index
    %291 = vector.load %arg17[%290, %c0_138] : memref<8x64xf32, #tpu.memory_space<vmem>>, vector<1x64xf32>
    %292 = arith.index_cast %289 : i32 to index
    %c0_139 = arith.constant 0 : index
    %293 = vector.load %arg18[%292, %c0_139] : memref<8x64xf32, #tpu.memory_space<vmem>>, vector<1x64xf32>
    %294 = arith.index_cast %289 : i32 to index
    %c0_140 = arith.constant 0 : index
    %c0_141 = arith.constant 0 : index
    %295 = vector.load %arg20[%294, %c0_140, %c0_141] : memref<8x32x1xf32, #tpu.memory_space<vmem>>, vector<1x32x1xf32>
    %296 = vector.shape_cast %295 : vector<1x32x1xf32> to vector<32x1xf32>
    %297 = vector.extract_strided_slice %296 {offsets = [0, 0], sizes = [16, 1], strides = [1, 1]} : vector<32x1xf32> to vector<16x1xf32>
    %298 = vector.extract_strided_slice %296 {offsets = [16, 0], sizes = [16, 1], strides = [1, 1]} : vector<32x1xf32> to vector<16x1xf32>
    %299 = vector.broadcast %291 : vector<1x64xf32> to vector<16x64xf32>
    %300 = arith.mulf %299, %213 : vector<16x64xf32>
    %301 = math.exp %300 : vector<16x64xf32>
    %302 = arith.mulf %301, %282 : vector<16x64xf32>
    %303 = vector.broadcast %297 : vector<16x1xf32> to vector<16x64xf32>
    %304 = vector.broadcast %293 : vector<1x64xf32> to vector<16x64xf32>
    %305 = arith.mulf %303, %304 : vector<16x64xf32>
    %306 = arith.addf %302, %305 : vector<16x64xf32>
    %307 = vector.broadcast %298 : vector<16x1xf32> to vector<16x64xf32>
    %308 = arith.mulf %306, %307 : vector<16x64xf32>
    %cst_142 = arith.constant dense<0.000000e+00> : vector<64xf32>
    %309 = vector.multi_reduction <add>, %308, %cst_142 [0] : vector<16x64xf32> to vector<64xf32>
    %310 = vector.shape_cast %309 : vector<64xf32> to vector<1x64xf32>
    %311 = arith.index_cast %289 : i32 to index
    %c0_143 = arith.constant 0 : index
    %312 = vector.load %arg19[%311, %c0_143] : memref<8x64xf32, #tpu.memory_space<vmem>>, vector<1x64xf32>
    tpu.vector_store %arg19[%311, %c0_143], %310 {strides = array<i32>} : memref<8x64xf32, #tpu.memory_space<vmem>>, vector<1x64xf32>,
    %c4_i32 = arith.constant 4 : i32
    %313 = arith.addi %216, %c4_i32 : i32
    %314 = arith.index_cast %313 : i32 to index
    %c0_144 = arith.constant 0 : index
    %315 = vector.load %arg17[%314, %c0_144] : memref<8x64xf32, #tpu.memory_space<vmem>>, vector<1x64xf32>
    %316 = arith.index_cast %313 : i32 to index
    %c0_145 = arith.constant 0 : index
    %317 = vector.load %arg18[%316, %c0_145] : memref<8x64xf32, #tpu.memory_space<vmem>>, vector<1x64xf32>
    %318 = arith.index_cast %313 : i32 to index
    %c0_146 = arith.constant 0 : index
    %c0_147 = arith.constant 0 : index
    %319 = vector.load %arg20[%318, %c0_146, %c0_147] : memref<8x32x1xf32, #tpu.memory_space<vmem>>, vector<1x32x1xf32>
    %320 = vector.shape_cast %319 : vector<1x32x1xf32> to vector<32x1xf32>
    %321 = vector.extract_strided_slice %320 {offsets = [0, 0], sizes = [16, 1], strides = [1, 1]} : vector<32x1xf32> to vector<16x1xf32>
    %322 = vector.extract_strided_slice %320 {offsets = [16, 0], sizes = [16, 1], strides = [1, 1]} : vector<32x1xf32> to vector<16x1xf32>
    %323 = vector.broadcast %315 : vector<1x64xf32> to vector<16x64xf32>
    %324 = arith.mulf %323, %213 : vector<16x64xf32>
    %325 = math.exp %324 : vector<16x64xf32>
    %326 = arith.mulf %325, %306 : vector<16x64xf32>
    %327 = vector.broadcast %321 : vector<16x1xf32> to vector<16x64xf32>
    %328 = vector.broadcast %317 : vector<1x64xf32> to vector<16x64xf32>
    %329 = arith.mulf %327, %328 : vector<16x64xf32>
    %330 = arith.addf %326, %329 : vector<16x64xf32>
    %331 = vector.broadcast %322 : vector<16x1xf32> to vector<16x64xf32>
    %332 = arith.mulf %330, %331 : vector<16x64xf32>
    %cst_148 = arith.constant dense<0.000000e+00> : vector<64xf32>
    %333 = vector.multi_reduction <add>, %332, %cst_148 [0] : vector<16x64xf32> to vector<64xf32>
    %334 = vector.shape_cast %333 : vector<64xf32> to vector<1x64xf32>
    %335 = arith.index_cast %313 : i32 to index
    %c0_149 = arith.constant 0 : index
    %336 = vector.load %arg19[%335, %c0_149] : memref<8x64xf32, #tpu.memory_space<vmem>>, vector<1x64xf32>
    tpu.vector_store %arg19[%335, %c0_149], %334 {strides = array<i32>} : memref<8x64xf32, #tpu.memory_space<vmem>>, vector<1x64xf32>,
    %c5_i32 = arith.constant 5 : i32
    %337 = arith.addi %216, %c5_i32 : i32
    %338 = arith.index_cast %337 : i32 to index
    %c0_150 = arith.constant 0 : index
    %339 = vector.load %arg17[%338, %c0_150] : memref<8x64xf32, #tpu.memory_space<vmem>>, vector<1x64xf32>
    %340 = arith.index_cast %337 : i32 to index
    %c0_151 = arith.constant 0 : index
    %341 = vector.load %arg18[%340, %c0_151] : memref<8x64xf32, #tpu.memory_space<vmem>>, vector<1x64xf32>
    %342 = arith.index_cast %337 : i32 to index
    %c0_152 = arith.constant 0 : index
    %c0_153 = arith.constant 0 : index
    %343 = vector.load %arg20[%342, %c0_152, %c0_153] : memref<8x32x1xf32, #tpu.memory_space<vmem>>, vector<1x32x1xf32>
    %344 = vector.shape_cast %343 : vector<1x32x1xf32> to vector<32x1xf32>
    %345 = vector.extract_strided_slice %344 {offsets = [0, 0], sizes = [16, 1], strides = [1, 1]} : vector<32x1xf32> to vector<16x1xf32>
    %346 = vector.extract_strided_slice %344 {offsets = [16, 0], sizes = [16, 1], strides = [1, 1]} : vector<32x1xf32> to vector<16x1xf32>
    %347 = vector.broadcast %339 : vector<1x64xf32> to vector<16x64xf32>
    %348 = arith.mulf %347, %213 : vector<16x64xf32>
    %349 = math.exp %348 : vector<16x64xf32>
    %350 = arith.mulf %349, %330 : vector<16x64xf32>
    %351 = vector.broadcast %345 : vector<16x1xf32> to vector<16x64xf32>
    %352 = vector.broadcast %341 : vector<1x64xf32> to vector<16x64xf32>
    %353 = arith.mulf %351, %352 : vector<16x64xf32>
    %354 = arith.addf %350, %353 : vector<16x64xf32>
    %355 = vector.broadcast %346 : vector<16x1xf32> to vector<16x64xf32>
    %356 = arith.mulf %354, %355 : vector<16x64xf32>
    %cst_154 = arith.constant dense<0.000000e+00> : vector<64xf32>
    %357 = vector.multi_reduction <add>, %356, %cst_154 [0] : vector<16x64xf32> to vector<64xf32>
    %358 = vector.shape_cast %357 : vector<64xf32> to vector<1x64xf32>
    %359 = arith.index_cast %337 : i32 to index
    %c0_155 = arith.constant 0 : index
    %360 = vector.load %arg19[%359, %c0_155] : memref<8x64xf32, #tpu.memory_space<vmem>>, vector<1x64xf32>
    tpu.vector_store %arg19[%359, %c0_155], %358 {strides = array<i32>} : memref<8x64xf32, #tpu.memory_space<vmem>>, vector<1x64xf32>,
    %c6_i32 = arith.constant 6 : i32
    %361 = arith.addi %216, %c6_i32 : i32
    %362 = arith.index_cast %361 : i32 to index
    %c0_156 = arith.constant 0 : index
    %363 = vector.load %arg17[%362, %c0_156] : memref<8x64xf32, #tpu.memory_space<vmem>>, vector<1x64xf32>
    %364 = arith.index_cast %361 : i32 to index
    %c0_157 = arith.constant 0 : index
    %365 = vector.load %arg18[%364, %c0_157] : memref<8x64xf32, #tpu.memory_space<vmem>>, vector<1x64xf32>
    %366 = arith.index_cast %361 : i32 to index
    %c0_158 = arith.constant 0 : index
    %c0_159 = arith.constant 0 : index
    %367 = vector.load %arg20[%366, %c0_158, %c0_159] : memref<8x32x1xf32, #tpu.memory_space<vmem>>, vector<1x32x1xf32>
    %368 = vector.shape_cast %367 : vector<1x32x1xf32> to vector<32x1xf32>
    %369 = vector.extract_strided_slice %368 {offsets = [0, 0], sizes = [16, 1], strides = [1, 1]} : vector<32x1xf32> to vector<16x1xf32>
    %370 = vector.extract_strided_slice %368 {offsets = [16, 0], sizes = [16, 1], strides = [1, 1]} : vector<32x1xf32> to vector<16x1xf32>
    %371 = vector.broadcast %363 : vector<1x64xf32> to vector<16x64xf32>
    %372 = arith.mulf %371, %213 : vector<16x64xf32>
    %373 = math.exp %372 : vector<16x64xf32>
    %374 = arith.mulf %373, %354 : vector<16x64xf32>
    %375 = vector.broadcast %369 : vector<16x1xf32> to vector<16x64xf32>
    %376 = vector.broadcast %365 : vector<1x64xf32> to vector<16x64xf32>
    %377 = arith.mulf %375, %376 : vector<16x64xf32>
    %378 = arith.addf %374, %377 : vector<16x64xf32>
    %379 = vector.broadcast %370 : vector<16x1xf32> to vector<16x64xf32>
    %380 = arith.mulf %378, %379 : vector<16x64xf32>
    %cst_160 = arith.constant dense<0.000000e+00> : vector<64xf32>
    %381 = vector.multi_reduction <add>, %380, %cst_160 [0] : vector<16x64xf32> to vector<64xf32>
    %382 = vector.shape_cast %381 : vector<64xf32> to vector<1x64xf32>
    %383 = arith.index_cast %361 : i32 to index
    %c0_161 = arith.constant 0 : index
    %384 = vector.load %arg19[%383, %c0_161] : memref<8x64xf32, #tpu.memory_space<vmem>>, vector<1x64xf32>
    tpu.vector_store %arg19[%383, %c0_161], %382 {strides = array<i32>} : memref<8x64xf32, #tpu.memory_space<vmem>>, vector<1x64xf32>,
    %c7_i32 = arith.constant 7 : i32
    %385 = arith.addi %216, %c7_i32 : i32
    %386 = arith.index_cast %385 : i32 to index
    %c0_162 = arith.constant 0 : index
    %387 = vector.load %arg17[%386, %c0_162] : memref<8x64xf32, #tpu.memory_space<vmem>>, vector<1x64xf32>
    %388 = arith.index_cast %385 : i32 to index
    %c0_163 = arith.constant 0 : index
    %389 = vector.load %arg18[%388, %c0_163] : memref<8x64xf32, #tpu.memory_space<vmem>>, vector<1x64xf32>
    %390 = arith.index_cast %385 : i32 to index
    %c0_164 = arith.constant 0 : index
    %c0_165 = arith.constant 0 : index
    %391 = vector.load %arg20[%390, %c0_164, %c0_165] : memref<8x32x1xf32, #tpu.memory_space<vmem>>, vector<1x32x1xf32>
    %392 = vector.shape_cast %391 : vector<1x32x1xf32> to vector<32x1xf32>
    %393 = vector.extract_strided_slice %392 {offsets = [0, 0], sizes = [16, 1], strides = [1, 1]} : vector<32x1xf32> to vector<16x1xf32>
    %394 = vector.extract_strided_slice %392 {offsets = [16, 0], sizes = [16, 1], strides = [1, 1]} : vector<32x1xf32> to vector<16x1xf32>
    %395 = vector.broadcast %387 : vector<1x64xf32> to vector<16x64xf32>
    %396 = arith.mulf %395, %213 : vector<16x64xf32>
    %397 = math.exp %396 : vector<16x64xf32>
    %398 = arith.mulf %397, %378 : vector<16x64xf32>
    %399 = vector.broadcast %393 : vector<16x1xf32> to vector<16x64xf32>
    %400 = vector.broadcast %389 : vector<1x64xf32> to vector<16x64xf32>
    %401 = arith.mulf %399, %400 : vector<16x64xf32>
    %402 = arith.addf %398, %401 : vector<16x64xf32>
    %403 = vector.broadcast %394 : vector<16x1xf32> to vector<16x64xf32>
    %404 = arith.mulf %402, %403 : vector<16x64xf32>
    %cst_166 = arith.constant dense<0.000000e+00> : vector<64xf32>
    %405 = vector.multi_reduction <add>, %404, %cst_166 [0] : vector<16x64xf32> to vector<64xf32>
    %406 = vector.shape_cast %405 : vector<64xf32> to vector<1x64xf32>
    %407 = arith.index_cast %385 : i32 to index
    %c0_167 = arith.constant 0 : index
    %408 = vector.load %arg19[%407, %c0_167] : memref<8x64xf32, #tpu.memory_space<vmem>>, vector<1x64xf32>
    tpu.vector_store %arg19[%407, %c0_167], %406 {strides = array<i32>} : memref<8x64xf32, #tpu.memory_space<vmem>>, vector<1x64xf32>,
    %c1_i32_168 = arith.constant 1 : i32
    %c0_169 = arith.constant 0 : index
    %c0_170 = arith.constant 0 : index
    %409 = vector.load %arg15[%c0_169, %c0_170] : memref<16x64xf32, #tpu.memory_space<vmem>>, vector<16x64xf32>
    tpu.vector_store %arg15[%c0_169, %c0_170], %402 {strides = array<i32>} : memref<16x64xf32, #tpu.memory_space<vmem>>, vector<16x64xf32>,
    %c0_171 = arith.constant 0 : index
    %c0_172 = arith.constant 0 : index
    %410 = vector.load %arg19[%c0_171, %c0_172] : memref<8x64xf32, #tpu.memory_space<vmem>>, vector<8x64xf32>
    %c0_173 = arith.constant 0 : index
    %c0_174 = arith.constant 0 : index
    %411 = vector.load %arg12[%c0_173, %c0_174] : memref<1x64xf32, #tpu.memory_space<vmem>>, vector<1x64xf32>
    %412 = vector.broadcast %411 : vector<1x64xf32> to vector<8x64xf32>
    %413 = arith.mulf %412, %64 : vector<8x64xf32>
    %414 = arith.addf %410, %413 : vector<8x64xf32>
    %cst_175 = arith.constant 0.000000e+00 : f32
    %415 = vector.broadcast %cst_175 : f32 to vector<8x64xf32>
    %416 = arith.subf %415, %30 : vector<8x64xf32>
    %417 = math.exp %416 : vector<8x64xf32>
    %cst_176 = arith.constant 1.000000e+00 : f32
    %418 = vector.broadcast %cst_176 : f32 to vector<8x64xf32>
    %419 = arith.addf %418, %417 : vector<8x64xf32>
    %cst_177 = arith.constant 1.000000e+00 : f32
    %420 = vector.broadcast %cst_177 : f32 to vector<8x64xf32>
    %421 = arith.divf %420, %419 : vector<8x64xf32>
    %422 = arith.mulf %30, %421 : vector<8x64xf32>
    %423 = arith.mulf %414, %422 : vector<8x64xf32>
    %c0_178 = arith.constant 0 : index
    %c0_179 = arith.constant 0 : index
    %424 = vector.load %arg13[%c0_178, %c0_179] : memref<64x32xf32, #tpu.memory_space<vmem>>, vector<64x32xf32>
    %cst_180 = arith.constant dense<0.000000e+00> : vector<8x32xf32>
    %425 = tpu.matmul %423, %424, %cst_180 {dimension_numbers = #tpu.dot_dimension_numbers<[1], [0], [0], [1], [0, 0, 1, 1], [], []>} : vector<8x64xf32>, vector<64x32xf32>, vector<8x32xf32> -> vector<8x32xf32>
    %426 = arith.addf %425, %4 : vector<8x32xf32>
    %c0_181 = arith.constant 0 : index
    %c0_182 = arith.constant 0 : index
    %c0_183 = arith.constant 0 : index
    %427 = vector.load %arg14[%c0_181, %c0_182, %c0_183] : memref<1x8x32xf32, #tpu.memory_space<vmem>>, vector<1x8x32xf32>
    %428 = vector.shape_cast %427 : vector<1x8x32xf32> to vector<8x32xf32>
    %429 = vector.shape_cast %426 : vector<8x32xf32> to vector<1x8x32xf32>
    tpu.vector_store %arg14[%c0_181, %c0_182, %c0_183], %429 {strides = array<i32>} : memref<1x8x32xf32, #tpu.memory_space<vmem>>, vector<1x8x32xf32>,
    return
  }
  func.func @transform_0(%arg0: i32, %arg1: i32) -> (i32, i32, i32) {
    %c0_i32 = arith.constant 0 : i32
    %c0_i32_0 = arith.constant 0 : i32
    return %arg0, %arg1, %c0_i32 : i32, i32, i32
  }
  func.func @transform_1(%arg0: i32, %arg1: i32) -> (i32, i32) {
    %c0_i32 = arith.constant 0 : i32
    %c0_i32_0 = arith.constant 0 : i32
    %c0_i32_1 = arith.constant 0 : i32
    return %c0_i32, %c0_i32_0 : i32, i32
  }
  func.func @transform_2(%arg0: i32, %arg1: i32) -> (i32, i32) {
    %c0_i32 = arith.constant 0 : i32
    %c0_i32_0 = arith.constant 0 : i32
    %c0_i32_1 = arith.constant 0 : i32
    return %c0_i32, %c0_i32_0 : i32, i32
  }
  func.func @transform_3(%arg0: i32, %arg1: i32) -> (i32, i32) {
    %c0_i32 = arith.constant 0 : i32
    %c0_i32_0 = arith.constant 0 : i32
    %c0_i32_1 = arith.constant 0 : i32
    return %c0_i32, %c0_i32_0 : i32, i32
  }
  func.func @transform_4(%arg0: i32, %arg1: i32) -> (i32, i32) {
    %c0_i32 = arith.constant 0 : i32
    %c0_i32_0 = arith.constant 0 : i32
    %c0_i32_1 = arith.constant 0 : i32
    return %c0_i32, %c0_i32_0 : i32, i32
  }
  func.func @transform_5(%arg0: i32, %arg1: i32) -> (i32, i32) {
    %c0_i32 = arith.constant 0 : i32
    %c0_i32_0 = arith.constant 0 : i32
    %c0_i32_1 = arith.constant 0 : i32
    return %c0_i32, %c0_i32_0 : i32, i32
  }
  func.func @transform_6(%arg0: i32, %arg1: i32) -> (i32, i32) {
    %c0_i32 = arith.constant 0 : i32
    %c0_i32_0 = arith.constant 0 : i32
    %c0_i32_1 = arith.constant 0 : i32
    return %c0_i32, %c0_i32_0 : i32, i32
  }
  func.func @transform_7(%arg0: i32, %arg1: i32) -> (i32, i32) {
    %c0_i32 = arith.constant 0 : i32
    %c0_i32_0 = arith.constant 0 : i32
    %c0_i32_1 = arith.constant 0 : i32
    return %c0_i32, %c0_i32_0 : i32, i32
  }
  func.func @transform_8(%arg0: i32, %arg1: i32) -> (i32, i32) {
    %c0_i32 = arith.constant 0 : i32
    %c0_i32_0 = arith.constant 0 : i32
    %c0_i32_1 = arith.constant 0 : i32
    return %c0_i32, %c0_i32_0 : i32, i32
  }
  func.func @transform_9(%arg0: i32, %arg1: i32) -> (i32, i32) {
    %c0_i32 = arith.constant 0 : i32
    %c0_i32_0 = arith.constant 0 : i32
    %c0_i32_1 = arith.constant 0 : i32
    return %c0_i32, %c0_i32_0 : i32, i32
  }
  func.func @transform_10(%arg0: i32, %arg1: i32) -> (i32, i32) {
    %c0_i32 = arith.constant 0 : i32
    %c0_i32_0 = arith.constant 0 : i32
    %c0_i32_1 = arith.constant 0 : i32
    return %c0_i32, %c0_i32_0 : i32, i32
  }
  func.func @transform_11(%arg0: i32, %arg1: i32) -> (i32, i32) {
    %c0_i32 = arith.constant 0 : i32
    %c0_i32_0 = arith.constant 0 : i32
    %c0_i32_1 = arith.constant 0 : i32
    return %c0_i32, %c0_i32_0 : i32, i32
  }
  func.func @transform_12(%arg0: i32, %arg1: i32) -> (i32, i32, i32) {
    %c0_i32 = arith.constant 0 : i32
    %c0_i32_0 = arith.constant 0 : i32
    return %arg0, %arg1, %c0_i32 : i32, i32, i32
  }
}

</mosaic_0001>

<llo_original>
// kernel: tpu_custom_call.1
$region0: #{tpu_custom_call.1}
  #allocation0 [shape = 'u32[]', space=smem, size = 0x4, offset = 0x4, fixed_abs, tag = 'smem constant byte address 0x4 - core index']
  #allocation1 [shape = 'u32[144,128]{1,0:T(1,128)}', space=vmem, size = 0x12000, scoped, tag = 'internal scratch']
  #allocation2 [shape = 'f32[16,64]{1,0:T(8,128)}', space=vmem, size = 0x2000, scoped, tag = 'scratch operand']
  #allocation3 [shape = 'f32[11,64]{1,0:T(8,128)}', space=vmem, size = 0x2000, scoped, tag = 'scratch operand']
  #allocation4 [shape = 'f32[8,64]{1,0:T(8,128)}', space=vmem, size = 0x1000, scoped, tag = 'scratch operand']
  #allocation5 [shape = 'f32[8,64]{1,0:T(8,128)}', space=vmem, size = 0x1000, scoped, tag = 'scratch operand']
  #allocation6 [shape = 'f32[8,64]{1,0:T(8,128)}', space=vmem, size = 0x1000, scoped, tag = 'scratch operand']
  #allocation7 [shape = 'f32[8,32,1]{2,1,0:T(8,128)}', space=vmem, size = 0x20000, scoped, tag = 'scratch operand']
  %s0 = inlined_call_operand.vmem [shape: f32[2,8,32], index: 0, kind: input, shape index: {}]
  %s1 = inlined_call_operand.vmem [shape: f32[1,32], index: 1, kind: input, shape index: {}]
  %s2 = inlined_call_operand.vmem [shape: f32[1,32], index: 2, kind: input, shape index: {}]
  %s3 = inlined_call_operand.vmem [shape: f32[32,128], index: 3, kind: input, shape index: {}]
  %s4 = inlined_call_operand.vmem [shape: f32[4,64], index: 4, kind: input, shape index: {}]
  %s5 = inlined_call_operand.vmem [shape: f32[1,64], index: 5, kind: input, shape index: {}]
  %s6 = inlined_call_operand.vmem [shape: f32[64,34], index: 6, kind: input, shape index: {}]
  %s7 = inlined_call_operand.vmem [shape: f32[2,64], index: 7, kind: input, shape index: {}]
  %s8 = inlined_call_operand.vmem [shape: f32[1,64], index: 8, kind: input, shape index: {}]
  %s9 = inlined_call_operand.vmem [shape: f32[16,64], index: 9, kind: input, shape index: {}]
  %s10 = inlined_call_operand.vmem [shape: f32[1,64], index: 10, kind: input, shape index: {}]
  %s11 = inlined_call_operand.vmem [shape: f32[64,32], index: 11, kind: input, shape index: {}]
  %s12 = inlined_call_operand.hbm [shape: f32[2,8,32], index: 12, kind: output, shape index: {}]
  %s13 = sld [smem:[#allocation0]]
  $region85: #{tpu_custom_call.1} parent=0
    _
  %s15 = ssub.s32 1, %s13
  %s16 = scalar_select 0, %s15, %s13
  $region1: #{tpu_custom_call.1} parent=0
    #allocation8 [shape = 'u8[8192]{0}', space=vmem, size = 0x2000, scoped, tag = 'output window, operand 0']
    #allocation9 [shape = 's32[2]{0}', space=sflag, size = 0x8, scoped, tag = 'scoped memory for tpu_custom_call.1']
    %17 = vsyncpa [#allocation9], 0
    %s18 = scalar_lea.sflag [#allocation9], 1
    %19 = vsyncpa %s18, 0
    loop: start=0, step=1, limit=4
    $region2: #{tpu_custom_call.1} parent=1 // loop_pre_header
      _
    $region3: #{tpu_custom_call.1} parent=1 // loop_header
      %s21 = sphi 0, %s25
      %p22 = scmp.ge.s32.totalorder %s21, 4
      %s28 = sphi 0, %s40
      %s29 = sphi 0, %s36
      %s30 = sphi 0, %s28
      %s31 = sphi 0, %s29
      %s32 = sphi 0, %s30
      %s33 = sphi 0, %s31
      %s45 = sphi 0, %s47
      %s48 = sphi 0, %s45
      %s49 = sphi 0, %s48
      %s65 = sphi 0, %s49
      %s69 = sphi 0, %s69
      %s71 = sphi 0, %s69
      %s72 = sphi 0, %s71
      %s86 = sphi 0, %s72
      %s90 = sphi 0, %s90
      %s92 = sphi 0, %s90
      %s93 = sphi 0, %s92
      %s107 = sphi 0, %s93
      %s111 = sphi 0, %s111
      %s113 = sphi 0, %s111
      %s114 = sphi 0, %s113
      %s128 = sphi 0, %s114
      %s132 = sphi 0, %s132
      %s134 = sphi 0, %s132
      %s135 = sphi 0, %s134
      %s149 = sphi 0, %s135
      %s153 = sphi 0, %s153
      %s155 = sphi 0, %s153
      %s156 = sphi 0, %s155
      %s170 = sphi 0, %s156
      %s174 = sphi 0, %s174
      %s176 = sphi 0, %s174
      %s177 = sphi 0, %s176
      %s191 = sphi 0, %s177
      %s195 = sphi 0, %s195
      %s197 = sphi 0, %s195
      %s198 = sphi 0, %s197
      %s212 = sphi 0, %s198
      %s216 = sphi 0, %s216
      %s218 = sphi 0, %s216
      %s219 = sphi 0, %s218
      %s233 = sphi 0, %s219
      %s237 = sphi 0, %s237
      %s239 = sphi 0, %s237
      %s240 = sphi 0, %s239
      %s254 = sphi 0, %s240
      %s258 = sphi 0, %s258
      %s260 = sphi 0, %s258
      %s261 = sphi 0, %s260
      %s275 = sphi 0, %s261
      %s279 = sphi 0, %s279
      %s281 = sphi 0, %s279
      %s282 = sphi 0, %s281
      %s296 = sphi 0, %s282
      %s304 = sphi 0, %s306
      %s307 = sphi 0, %s304
      %s308 = sphi 0, %s307
      %s324 = sphi 0, %s308
    $region4: #{tpu_custom_call.1} parent=1 // loop_header_branch
      %24 = sbr.rel (%p22) target = $region8
    $region5: #{tpu_custom_call.1} parent=1 // loop_body
      %s26 = ssub.s32 %s21, 1
      %s27 = ssub.s32 %s21, 2
      %s34 = sadd.s32 1, %s29
      %p35 = scmp.ge.s32.totalorder %s34, 1
      %s36 = scalar_select %p35, 0, %s34
      %s37 = sadd.s32 1, %s28
      %s38 = scalar_select %p35, %s37, %s28
      %p39 = scmp.ge.s32.totalorder %s38, 2
      %s40 = scalar_select %p39, 0, %s38
      %s41 = ssub.s32 %s28, %s40
      %s42 = ssub.s32 %s29, %s36
      %s43 = sor.u32 %s41, %s42
      %p44 = scmp.eq.s32.totalorder %s43, 0
      %s46 = sadd.s32 %s45, 1
      %s47 = scalar_select %p44, %s45, %s46
      %p50 = pneg %p44
      %p51 = scmp.eq.s32.totalorder %s21, 1
      %p52 = por %p50, %p51
      %p53 = scmp.ne.s32.totalorder %s45, %s48
      %p54 = scmp.eq.s32.totalorder %s21, 0
      %p55 = por %p53, %p54
      %p56 = scmp.ne.s32.totalorder %s45, %s48
      %p57 = scmp.eq.s32.totalorder %s26, 1
      %p58 = por %p56, %p57
      %p59 = scmp.ne.s32.totalorder %s48, %s49
      %p60 = scmp.eq.s32.totalorder %s26, 0
      %p61 = por %p59, %p60
      %p62 = scmp.ne.s32.totalorder %s48, %s49
      %p63 = scmp.eq.s32.totalorder %s27, 1
      %p64 = por %p62, %p63
      %p66 = scmp.ne.s32.totalorder %s49, %s65
      %p67 = scmp.eq.s32.totalorder %s27, 0
      %p68 = por %p66, %p67
      %s70 = sadd.s32 %s69, 1
      %p73 = scmp.eq.s32.totalorder %s21, 1
      %p74 = scmp.ne.s32.totalorder %s69, %s71
      %p75 = scmp.eq.s32.totalorder %s21, 0
      %p76 = por %p74, %p75
      %p77 = scmp.ne.s32.totalorder %s69, %s71
      %p78 = scmp.eq.s32.totalorder %s26, 1
      %p79 = por %p77, %p78
      %p80 = scmp.ne.s32.totalorder %s71, %s72
      %p81 = scmp.eq.s32.totalorder %s26, 0
      %p82 = por %p80, %p81
      %p83 = scmp.ne.s32.totalorder %s71, %s72
      %p84 = scmp.eq.s32.totalorder %s27, 1
      %p85 = por %p83, %p84
      %p87 = scmp.ne.s32.totalorder %s72, %s86
      %p88 = scmp.eq.s32.totalorder %s27, 0
      %p89 = por %p87, %p88
      %s91 = sadd.s32 %s90, 1
      %p94 = scmp.eq.s32.totalorder %s21, 1
      %p95 = scmp.ne.s32.totalorder %s90, %s92
      %p96 = scmp.eq.s32.totalorder %s21, 0
      %p97 = por %p95, %p96
      %p98 = scmp.ne.s32.totalorder %s90, %s92
      %p99 = scmp.eq.s32.totalorder %s26, 1
      %p100 = por %p98, %p99
      %p101 = scmp.ne.s32.totalorder %s92, %s93
      %p102 = scmp.eq.s32.totalorder %s26, 0
      %p103 = por %p101, %p102
      %p104 = scmp.ne.s32.totalorder %s92, %s93
      %p105 = scmp.eq.s32.totalorder %s27, 1
      %p106 = por %p104, %p105
      %p108 = scmp.ne.s32.totalorder %s93, %s107
      %p109 = scmp.eq.s32.totalorder %s27, 0
      %p110 = por %p108, %p109
      %s112 = sadd.s32 %s111, 1
      %p115 = scmp.eq.s32.totalorder %s21, 1
      %p116 = scmp.ne.s32.totalorder %s111, %s113
      %p117 = scmp.eq.s32.totalorder %s21, 0
      %p118 = por %p116, %p117
      %p119 = scmp.ne.s32.totalorder %s111, %s113
      %p120 = scmp.eq.s32.totalorder %s26, 1
      %p121 = por %p119, %p120
      %p122 = scmp.ne.s32.totalorder %s113, %s114
      %p123 = scmp.eq.s32.totalorder %s26, 0
      %p124 = por %p122, %p123
      %p125 = scmp.ne.s32.totalorder %s113, %s114
      %p126 = scmp.eq.s32.totalorder %s27, 1
      %p127 = por %p125, %p126
      %p129 = scmp.ne.s32.totalorder %s114, %s128
      %p130 = scmp.eq.s32.totalorder %s27, 0
      %p131 = por %p129, %p130
      %s133 = sadd.s32 %s132, 1
      %p136 = scmp.eq.s32.totalorder %s21, 1
      %p137 = scmp.ne.s32.totalorder %s132, %s134
      %p138 = scmp.eq.s32.totalorder %s21, 0
      %p139 = por %p137, %p138
      %p140 = scmp.ne.s32.totalorder %s132, %s134
      %p141 = scmp.eq.s32.totalorder %s26, 1
      %p142 = por %p140, %p141
      %p143 = scmp.ne.s32.totalorder %s134, %s135
      %p144 = scmp.eq.s32.totalorder %s26, 0
      %p145 = por %p143, %p144
      %p146 = scmp.ne.s32.totalorder %s134, %s135
      %p147 = scmp.eq.s32.totalorder %s27, 1
      %p148 = por %p146, %p147
      %p150 = scmp.ne.s32.totalorder %s135, %s149
      %p151 = scmp.eq.s32.totalorder %s27, 0
      %p152 = por %p150, %p151
      %s154 = sadd.s32 %s153, 1
      %p157 = scmp.eq.s32.totalorder %s21, 1
      %p158 = scmp.ne.s32.totalorder %s153, %s155
      %p159 = scmp.eq.s32.totalorder %s21, 0
      %p160 = por %p158, %p159
      %p161 = scmp.ne.s32.totalorder %s153, %s155
      %p162 = scmp.eq.s32.totalorder %s26, 1
      %p163 = por %p161, %p162
      %p164 = scmp.ne.s32.totalorder %s155, %s156
      %p165 = scmp.eq.s32.totalorder %s26, 0
      %p166 = por %p164, %p165
      %p167 = scmp.ne.s32.totalorder %s155, %s156
      %p168 = scmp.eq.s32.totalorder %s27, 1
      %p169 = por %p167, %p168
      %p171 = scmp.ne.s32.totalorder %s156, %s170
      %p172 = scmp.eq.s32.totalorder %s27, 0
      %p173 = por %p171, %p172
      %s175 = sadd.s32 %s174, 1
      %p178 = scmp.eq.s32.totalorder %s21, 1
      %p179 = scmp.ne.s32.totalorder %s174, %s176
      %p180 = scmp.eq.s32.totalorder %s21, 0
      %p181 = por %p179, %p180
      %p182 = scmp.ne.s32.totalorder %s174, %s176
      %p183 = scmp.eq.s32.totalorder %s26, 1
      %p184 = por %p182, %p183
      %p185 = scmp.ne.s32.totalorder %s176, %s177
      %p186 = scmp.eq.s32.totalorder %s26, 0
      %p187 = por %p185, %p186
      %p188 = scmp.ne.s32.totalorder %s176, %s177
      %p189 = scmp.eq.s32.totalorder %s27, 1
      %p190 = por %p188, %p189
      %p192 = scmp.ne.s32.totalorder %s177, %s191
      %p193 = scmp.eq.s32.totalorder %s27, 0
      %p194 = por %p192, %p193
      %s196 = sadd.s32 %s195, 1
      %p199 = scmp.eq.s32.totalorder %s21, 1
      %p200 = scmp.ne.s32.totalorder %s195, %s197
      %p201 = scmp.eq.s32.totalorder %s21, 0
      %p202 = por %p200, %p201
      %p203 = scmp.ne.s32.totalorder %s195, %s197
      %p204 = scmp.eq.s32.totalorder %s26, 1
      %p205 = por %p203, %p204
      %p206 = scmp.ne.s32.totalorder %s197, %s198
      %p207 = scmp.eq.s32.totalorder %s26, 0
      %p208 = por %p206, %p207
      %p209 = scmp.ne.s32.totalorder %s197, %s198
      %p210 = scmp.eq.s32.totalorder %s27, 1
      %p211 = por %p209, %p210
      %p213 = scmp.ne.s32.totalorder %s198, %s212
      %p214 = scmp.eq.s32.totalorder %s27, 0
      %p215 = por %p213, %p214
      %s217 = sadd.s32 %s216, 1
      %p220 = scmp.eq.s32.totalorder %s21, 1
      %p221 = scmp.ne.s32.totalorder %s216, %s218
      %p222 = scmp.eq.s32.totalorder %s21, 0
      %p223 = por %p221, %p222
      %p224 = scmp.ne.s32.totalorder %s216, %s218
      %p225 = scmp.eq.s32.totalorder %s26, 1
      %p226 = por %p224, %p225
      %p227 = scmp.ne.s32.totalorder %s218, %s219
      %p228 = scmp.eq.s32.totalorder %s26, 0
      %p229 = por %p227, %p228
      %p230 = scmp.ne.s32.totalorder %s218, %s219
      %p231 = scmp.eq.s32.totalorder %s27, 1
      %p232 = por %p230, %p231
      %p234 = scmp.ne.s32.totalorder %s219, %s233
      %p235 = scmp.eq.s32.totalorder %s27, 0
      %p236 = por %p234, %p235
      %s238 = sadd.s32 %s237, 1
      %p241 = scmp.eq.s32.totalorder %s21, 1
      %p242 = scmp.ne.s32.totalorder %s237, %s239
      %p243 = scmp.eq.s32.totalorder %s21, 0
      %p244 = por %p242, %p243
      %p245 = scmp.ne.s32.totalorder %s237, %s239
      %p246 = scmp.eq.s32.totalorder %s26, 1
      %p247 = por %p245, %p246
      %p248 = scmp.ne.s32.totalorder %s239, %s240
      %p249 = scmp.eq.s32.totalorder %s26, 0
      %p250 = por %p248, %p249
      %p251 = scmp.ne.s32.totalorder %s239, %s240
      %p252 = scmp.eq.s32.totalorder %s27, 1
      %p253 = por %p251, %p252
      %p255 = scmp.ne.s32.totalorder %s240, %s254
      %p256 = scmp.eq.s32.totalorder %s27, 0
      %p257 = por %p255, %p256
      %s259 = sadd.s32 %s258, 1
      %p262 = scmp.eq.s32.totalorder %s21, 1
      %p263 = scmp.ne.s32.totalorder %s258, %s260
      %p264 = scmp.eq.s32.totalorder %s21, 0
      %p265 = por %p263, %p264
      %p266 = scmp.ne.s32.totalorder %s258, %s260
      %p267 = scmp.eq.s32.totalorder %s26, 1
      %p268 = por %p266, %p267
      %p269 = scmp.ne.s32.totalorder %s260, %s261
      %p270 = scmp.eq.s32.totalorder %s26, 0
      %p271 = por %p269, %p270
      %p272 = scmp.ne.s32.totalorder %s260, %s261
      %p273 = scmp.eq.s32.totalorder %s27, 1
      %p274 = por %p272, %p273
      %p276 = scmp.ne.s32.totalorder %s261, %s275
      %p277 = scmp.eq.s32.totalorder %s27, 0
      %p278 = por %p276, %p277
      %s280 = sadd.s32 %s279, 1
      %p283 = scmp.eq.s32.totalorder %s21, 1
      %p284 = scmp.ne.s32.totalorder %s279, %s281
      %p285 = scmp.eq.s32.totalorder %s21, 0
      %p286 = por %p284, %p285
      %p287 = scmp.ne.s32.totalorder %s279, %s281
      %p288 = scmp.eq.s32.totalorder %s26, 1
      %p289 = por %p287, %p288
      %p290 = scmp.ne.s32.totalorder %s281, %s282
      %p291 = scmp.eq.s32.totalorder %s26, 0
      %p292 = por %p290, %p291
      %p293 = scmp.ne.s32.totalorder %s281, %s282
      %p294 = scmp.eq.s32.totalorder %s27, 1
      %p295 = por %p293, %p294
      %p297 = scmp.ne.s32.totalorder %s282, %s296
      %p298 = scmp.eq.s32.totalorder %s27, 0
      %p299 = por %p297, %p298
      %s300 = ssub.s32 %s28, %s40
      %s301 = ssub.s32 %s29, %s36
      %s302 = sor.u32 %s300, %s301
      %p303 = scmp.eq.s32.totalorder %s302, 0
      %s305 = sadd.s32 %s304, 1
      %s306 = scalar_select %p303, %s304, %s305
      %p309 = pneg %p303
      %p310 = scmp.eq.s32.totalorder %s21, 1
      %p311 = por %p309, %p310
      %p312 = scmp.ne.s32.totalorder %s304, %s307
      %p313 = scmp.eq.s32.totalorder %s21, 0
      %p314 = por %p312, %p313
      %p315 = scmp.ne.s32.totalorder %s304, %s307
      %p316 = scmp.eq.s32.totalorder %s26, 1
      %p317 = por %p315, %p316
      %p318 = scmp.ne.s32.totalorder %s307, %s308
      %p319 = scmp.eq.s32.totalorder %s26, 0
      %p320 = por %p318, %p319
      %p321 = scmp.ne.s32.totalorder %s307, %s308
      %p322 = scmp.eq.s32.totalorder %s27, 1
      %p323 = por %p321, %p322
      %p325 = scmp.ne.s32.totalorder %s308, %s324
      %p326 = scmp.eq.s32.totalorder %s27, 0
      %p327 = por %p325, %p326
      %p328 = scmp.le.s32.totalorder 1, %s21
      %p329 = scmp.lt.s32.totalorder %s21, 3
      %p330 = pnand %p328, %p329
      %p331 = pneg %p330
      // Predicated region
      $region9: #{tpu_custom_call.1} parent=5 // pred_check
        _
      $region10: #{tpu_custom_call.1} parent=5 // pred_check_branch
        %333 = sbr.rel (%p330) target = $region12
      $region11: #{tpu_custom_call.1} parent=5 // pred_region
        %s334 = ssub.s32 %s21, 1
        // Predicated region
        $region13: #{tpu_custom_call.1} parent=11 // pred_check
          %p335 = pneg %p82
        $region14: #{tpu_custom_call.1} parent=11 // pred_check_branch
          %337 = sbr.rel (%p335) target = $region16
        $region15: #{tpu_custom_call.1} parent=11 // pred_region
          _
        $region16: #{tpu_custom_call.1} parent=11 // pred_fallthru
          _
        // Predicated region
        $region17: #{tpu_custom_call.1} parent=11 // pred_check
          %p338 = pneg %p103
        $region18: #{tpu_custom_call.1} parent=11 // pred_check_branch
          %340 = sbr.rel (%p338) target = $region20
        $region19: #{tpu_custom_call.1} parent=11 // pred_region
          _
        $region20: #{tpu_custom_call.1} parent=11 // pred_fallthru
          _
        // Predicated region
        $region21: #{tpu_custom_call.1} parent=11 // pred_check
          %p341 = pneg %p124
        $region22: #{tpu_custom_call.1} parent=11 // pred_check_branch
          %343 = sbr.rel (%p341) target = $region24
        $region23: #{tpu_custom_call.1} parent=11 // pred_region
          _
        $region24: #{tpu_custom_call.1} parent=11 // pred_fallthru
          _
        // Predicated region
        $region25: #{tpu_custom_call.1} parent=11 // pred_check
          %p344 = pneg %p145
        $region26: #{tpu_custom_call.1} parent=11 // pred_check_branch
          %346 = sbr.rel (%p344) target = $region28
        $region27: #{tpu_custom_call.1} parent=11 // pred_region
          _
        $region28: #{tpu_custom_call.1} parent=11 // pred_fallthru
          _
        // Predicated region
        $region29: #{tpu_custom_call.1} parent=11 // pred_check
          %p347 = pneg %p166
        $region30: #{tpu_custom_call.1} parent=11 // pred_check_branch
          %349 = sbr.rel (%p347) target = $region32
        $region31: #{tpu_custom_call.1} parent=11 // pred_region
          _
        $region32: #{tpu_custom_call.1} parent=11 // pred_fallthru
          _
        // Predicated region
        $region33: #{tpu_custom_call.1} parent=11 // pred_check
          %p350 = pneg %p187
        $region34: #{tpu_custom_call.1} parent=11 // pred_check_branch
          %352 = sbr.rel (%p350) target = $region36
        $region35: #{tpu_custom_call.1} parent=11 // pred_region
          _
        $region36: #{tpu_custom_call.1} parent=11 // pred_fallthru
          _
        // Predicated region
        $region37: #{tpu_custom_call.1} parent=11 // pred_check
          %p353 = pneg %p208
        $region38: #{tpu_custom_call.1} parent=11 // pred_check_branch
          %355 = sbr.rel (%p353) target = $region40
        $region39: #{tpu_custom_call.1} parent=11 // pred_region
          _
        $region40: #{tpu_custom_call.1} parent=11 // pred_fallthru
          _
        // Predicated region
        $region41: #{tpu_custom_call.1} parent=11 // pred_check
          %p356 = pneg %p229
        $region42: #{tpu_custom_call.1} parent=11 // pred_check_branch
          %358 = sbr.rel (%p356) target = $region44
        $region43: #{tpu_custom_call.1} parent=11 // pred_region
          _
        $region44: #{tpu_custom_call.1} parent=11 // pred_fallthru
          _
        // Predicated region
        $region45: #{tpu_custom_call.1} parent=11 // pred_check
          %p359 = pneg %p250
        $region46: #{tpu_custom_call.1} parent=11 // pred_check_branch
          %361 = sbr.rel (%p359) target = $region48
        $region47: #{tpu_custom_call.1} parent=11 // pred_region
          _
        $region48: #{tpu_custom_call.1} parent=11 // pred_fallthru
          _
        // Predicated region
        $region49: #{tpu_custom_call.1} parent=11 // pred_check
          %p362 = pneg %p271
        $region50: #{tpu_custom_call.1} parent=11 // pred_check_branch
          %364 = sbr.rel (%p362) target = $region52
        $region51: #{tpu_custom_call.1} parent=11 // pred_region
          _
        $region52: #{tpu_custom_call.1} parent=11 // pred_fallthru
          _
        // Predicated region
        $region53: #{tpu_custom_call.1} parent=11 // pred_check
          %p365 = pneg %p292
        $region54: #{tpu_custom_call.1} parent=11 // pred_check_branch
          %367 = sbr.rel (%p365) target = $region56
        $region55: #{tpu_custom_call.1} parent=11 // pred_region
          _
        $region56: #{tpu_custom_call.1} parent=11 // pred_fallthru
          _
      $region12: #{tpu_custom_call.1} parent=5 // pred_fallthru
        _
      %p368 = scmp.lt.s32.totalorder %s21, 2
      // Predicated region
      $region57: #{tpu_custom_call.1} parent=5 // pred_check
        %p369 = pneg %p368
      $region58: #{tpu_custom_call.1} parent=5 // pred_check_branch
        %371 = sbr.rel (%p369) target = $region60
      $region59: #{tpu_custom_call.1} parent=5 // pred_region
        // Predicated region
        $region61: #{tpu_custom_call.1} parent=59 // pred_check
          %p372 = pneg %p55
        $region62: #{tpu_custom_call.1} parent=59 // pred_check_branch
          %374 = sbr.rel (%p372) target = $region64
        $region63: #{tpu_custom_call.1} parent=59 // pred_region
          %p375 = scmp.lt.s32.totalorder %s28, 1
          %s376 = scalar_select %p375, %s28, 1
          %p377 = scmp.lt.s32.totalorder %s29, 0
          %s378 = scalar_select %p377, %s29, 0
          %s379 = sadd.s32 %s378, %s376
          %s380 = smul.addr %s379, 8
          %s381 = scalar_lea.vmem %s0, %s380
        $region64: #{tpu_custom_call.1} parent=59 // pred_fallthru
          _
      $region60: #{tpu_custom_call.1} parent=5 // pred_fallthru
        _
      %p382 = scmp.le.s32.totalorder 1, %s21
      %p383 = scmp.lt.s32.totalorder %s21, 3
      %p384 = pnand %p382, %p383
      %p385 = pneg %p384
      // Predicated region
      $region65: #{tpu_custom_call.1} parent=5 // pred_check
        _
      $region66: #{tpu_custom_call.1} parent=5 // pred_check_branch
        %387 = sbr.rel (%p384) target = $region68
      $region67: #{tpu_custom_call.1} parent=5 // pred_region
        %s388 = ssub.s32 %s21, 1
        %p389 = scmp.lt.s32.totalorder %s30, 1
        %s390 = scalar_select %p389, %s30, 1
        %p391 = scmp.lt.s32.totalorder %s31, 0
        %s392 = scalar_select %p391, %s31, 0
        %s393 = sadd.s32 %s392, %s390
        %s394 = smul.addr %s393, 8
        %s395 = scalar_lea.vmem %s0, %s394
        %p396 = pneg %p61
        %p397 = pneg %p58
        %p398 = pneg %p82
        %p399 = pneg %p79
        %p400 = pneg %p103
        %p401 = pneg %p100
        %p402 = pneg %p124
        %p403 = pneg %p121
        %p404 = pneg %p145
        %p405 = pneg %p142
        %p406 = pneg %p166
        %p407 = pneg %p163
        %p408 = pneg %p187
        %p409 = pneg %p184
        %p410 = pneg %p208
        %p411 = pneg %p205
        %p412 = pneg %p229
        %p413 = pneg %p226
        %p414 = pneg %p250
        %p415 = pneg %p247
        %p416 = pneg %p271
        %p417 = pneg %p268
        %p418 = pneg %p292
        %p419 = pneg %p289
        %p420 = pneg %p320
        %p421 = pneg %p317
        %s422 = sand.u32 %s307, 1
        %s423 = scalar_lea.sflag [#allocation9], %s422
        %s424 = sand.u32 %s307, 1
        %s425 = smul.addr %s424, 8
        %s426 = scalar_lea.vmem [#allocation8], %s425
        %p427 = scmp.lt.s32.totalorder %s30, 1
        %s428 = scalar_select %p427, %s30, 1
        %p429 = scmp.lt.s32.totalorder %s31, 0
        %s430 = scalar_select %p429, %s31, 0
        %s431 = sadd.s32 %s430, %s428
        %s432 = smul.addr %s431, 8
        %s433 = scalar_lea.vmem %s0, %s432
        %p434 = scmp.eq.s32.totalorder %s31, 0
        // Predicated region
        $region69: #{tpu_custom_call.1} parent=67 // pred_check
          %p435 = pneg %p434
        $region70: #{tpu_custom_call.1} parent=67 // pred_check_branch
          %437 = sbr.rel (%p435) target = $region72
        $region71: #{tpu_custom_call.1} parent=67 // pred_region
          %vm438 = vcmask 523264
          %439 = vst.msk [vmem:[#allocation2] sm:$0xff] %vm438, 0.0
          %440 = vst.msk [vmem:[#allocation2 + $0x8] sm:$0xff] %vm438, 0.0
          %vm441 = vcmask 518144
          %442 = vst.msk [vmem:[#allocation3] sm:$0x7] %vm441, 0.0
        $region72: #{tpu_custom_call.1} parent=67 // pred_fallthru
          _
        %v443 = vld [vmem:[%s433] sm:$0xff]
        %vm444 = vcmask 261120
        %v445 = vsel %vm444, %v443, 0.0
        %446 = vadd.xlane.f32.xlu0 %v445
        %v447 = vpop.xlane.xlu0 %446
        %v448 = vrcp.pop 32.0
        %v449 = vmul.f32 %v447, %v448
        %v450 = vsub.f32 %v443, %v449
        %v451 = vmul.f32 %v450, %v450
        %v452 = vsel %vm444, %v451, 0.0
        %453 = vadd.xlane.f32.xlu0 %v452
        %v454 = vpop.xlane.xlu0 %453
        %v455 = vmul.f32 %v454, %v448
        %v456 = vadd.f32 %v455, 1e-05
        %v457 = vrsqrt.pop %v456
        %v458 = vmul.f32 %v450, %v457
        %v459 = vld [vmem:[%s1] sm:$0x1]
        %v461 = vlaneseq
        %v462 = vshrl.u32 %v461, 7
        %v463 = vsub.s32 0, %v462
        %v464 = vrot.slane %v459, %v463
        %v466 = vmul.f32 %v458, %v464
        %v467 = vld [vmem:[%s2] sm:$0x1]
        %v469 = vlaneseq
        %v470 = vshrl.u32 %v469, 7
        %v471 = vsub.s32 0, %v470
        %v472 = vrot.slane %v467, %v471
        %v474 = vadd.f32 %v466, %v472
        %v475 = vld [vmem:[%s3] sm:$0xff]
        %v476 = vld [vmem:[%s3 + $0x8] sm:$0xff]
        %v477 = vld [vmem:[%s3 + $0x10] sm:$0xff]
        %v478 = vld [vmem:[%s3 + $0x18] sm:$0xff]
        %v480 = vsel %vm444, %v474, 0
        %482 = vmatprep.subr.mxu0 0.0
        %483 = vmatpush1.msra.mxu0 %v475
        %484 = vmatprep.subr.mxu0 0.0
        %485 = vmatpush1.msra.mxu0 %v476
        %486 = vmatprep.subr.mxu0 0.0
        %487 = vmatpush1.msra.mxu0 %v477
        %488 = vmatprep.subr.mxu0 0.0
        %489 = vmatpush1.msra.mxu0 %v478
        %490 = vmatprep.subr.mxu0 0.0
        %491 = vmatpush1.msra.mxu0 0.0
        %492 = vmatprep.subr.mxu0 0.0
        %493 = vmatpush1.msra.mxu0 0.0
        %494 = vmatprep.subr.mxu0 0.0
        %495 = vmatpush1.msra.mxu0 0.0
        %496 = vmatprep.subr.mxu0 0.0
        %497 = vmatpush1.msra.mxu0 0.0
        %498 = vmatprep.subr.mxu0 0.0
        %499 = vmatpush1.msra.mxu0 0.0
        %500 = vmatprep.subr.mxu0 0.0
        %501 = vmatpush1.msra.mxu0 0.0
        %502 = vmatprep.subr.mxu0 0.0
        %503 = vmatpush1.msra.mxu0 0.0
        %504 = vmatprep.subr.mxu0 0.0
        %505 = vmatpush1.msra.mxu0 0.0
        %506 = vmatprep.subr.mxu0 0.0
        %507 = vmatpush1.msra.mxu0 0.0
        %508 = vmatprep.subr.mxu0 0.0
        %509 = vmatpush1.msra.mxu0 0.0
        %510 = vmatprep.subr.mxu0 0.0
        %511 = vmatpush1.msra.mxu0 0.0
        %512 = vmatprep.subr.mxu0 0.0
        %513 = vmatpush1.msra.mxu0 0.0
        %514 = vmatprep.subr.mxu0 0.0
        %515 = vmatpush1.msra.mxu0 0.0
        %516 = vmatprep.subr.mxu0 0.0
        %517 = vmatpush1.msra.mxu0 0.0
        %518 = vmatprep.subr.mxu0 0.0
        %519 = vmatpush1.msra.mxu0 0.0
        %520 = vmatprep.subr.mxu0 0.0
        %521 = vmatpush1.msra.mxu0 0.0
        %522 = vmatprep.subr.mxu0 0.0
        %523 = vmatpush1.msra.mxu0 0.0
        %524 = vmatprep.subr.mxu0 0.0
        %525 = vmatpush1.msra.mxu0 0.0
        %526 = vmatprep.subr.mxu0 0.0
        %527 = vmatpush1.msra.mxu0 0.0
        %528 = vmatprep.subr.mxu0 0.0
        %529 = vmatpush1.msra.mxu0 0.0
        %530 = vmatprep.subr.mxu0 0.0
        %531 = vmatpush1.msra.mxu0 0.0
        %532 = vmatprep.subr.mxu0 0.0
        %533 = vmatpush1.msra.mxu0 0.0
        %534 = vmatprep.subr.mxu0 0.0
        %535 = vmatpush1.msra.mxu0 0.0
        %536 = vmatprep.subr.mxu0 0.0
        %537 = vmatpush1.msra.mxu0 0.0
        %538 = vmatprep.subr.mxu0 0.0
        %539 = vmatpush1.msra.mxu0 0.0
        %540 = vmatprep.subr.mxu0 0.0
        %541 = vmatpush1.msra.mxu0 0.0
        %542 = vmatprep.subr.mxu0 0.0
        %543 = vmatpush1.msra.mxu0 0.0
        %544 = vmatprep.subr.mxu0 0.0
        %545 = vmatpush1.msra.mxu0 0.0
        %546 = vmatprep.mubr.f32.mxu0 0.0
        %547 = vmatmul.mubr.f32.gmra.mrb[0].mxu0 %v480
        %v548 = vpop.f32.mrb[0].mxu0
        %v549 = vadd.f32 0.0, %v548
        %v550 = vpop.f32.mrb[0].mxu0
        %551 = vdwg.mxu0
        %vm552 = vcmask 523264
        %553 = vst.msk [vmem:[#allocation3 + $0x3] sm:$0xff] %vm552, %v549
        %v554 = vld [vmem:[%s4] sm:$0xf]
        %v555 = vld [vmem:[%s5] sm:$0x1]
        %v556 = vld [vmem:[#allocation3] sm:$0xff]
        %v557 = vlaneseq
        %v558 = vshrl.u32 %v557, 7
        %v559 = vsub.s32 0, %v558
        %v560 = vrot.slane %v554, %v559
        %v561 = vmul.f32 %v560, %v556
        %v563 = vlaneseq
        %v564 = vshrl.u32 %v563, 7
        %v565 = vsub.s32 0, %v564
        %v566 = vrot.slane %v555, %v565
        %v568 = vadd.f32 %v566, %v561
        %v569 = vld [vmem:[#allocation3 + $0x1] sm:$0xff]
        %v570 = vlaneseq
        %v571 = vshrl.u32 %v570, 7
        %v572 = vsub.s32 1, %v571
        %v573 = vrot.slane %v554, %v572
        %v574 = vmul.f32 %v573, %v569
        %v575 = vadd.f32 %v568, %v574
        %v576 = vld [vmem:[#allocation3 + $0x2] sm:$0xff]
        %v577 = vlaneseq
        %v578 = vshrl.u32 %v577, 7
        %v579 = vsub.s32 2, %v578
        %v580 = vrot.slane %v554, %v579
        %v581 = vmul.f32 %v580, %v576
        %v582 = vadd.f32 %v575, %v581
        %v583 = vld [vmem:[#allocation3 + $0x3] sm:$0xff]
        %v584 = vlaneseq
        %v585 = vshrl.u32 %v584, 7
        %v586 = vsub.s32 3, %v585
        %v587 = vrot.slane %v554, %v586
        %v588 = vmul.f32 %v587, %v583
        %v589 = vadd.f32 %v582, %v588
        %v590 = vld [vmem:[#allocation3 + $0x8] sm:$0x7]
        %vm591 = vcmask 518144
        %592 = vst.msk [vmem:[#allocation3] sm:$0x7] %vm591, %v590
        %v593 = vsub.f32 0.0, %v589
        %v594 = vmul.f32 %v593, 1.442695
        %v595 = vpow.pop %v594
        %v596 = vadd.f32 %v595, 1.0
        %v597 = vrcp.pop %v596
        %v598 = vmul.f32 1.0, %v597
        %v599 = vmul.f32 %v589, %v598
        %v600 = vld [vmem:[%s6] sm:$0xff]
        %v601 = vld [vmem:[%s6 + $0x8] sm:$0xff]
        %v602 = vld [vmem:[%s6 + $0x10] sm:$0xff]
        %v603 = vld [vmem:[%s6 + $0x18] sm:$0xff]
        %v604 = vld [vmem:[%s6 + $0x20] sm:$0xff]
        %v605 = vld [vmem:[%s6 + $0x28] sm:$0xff]
        %v606 = vld [vmem:[%s6 + $0x30] sm:$0xff]
        %v607 = vld [vmem:[%s6 + $0x38] sm:$0xff]
        %v609 = vsel %vm552, %v599, 0
        %611 = vmatprep.subr.mxu0 0.0
        %612 = vmatpush1.msra.mxu0 %v600
        %613 = vmatprep.subr.mxu0 0.0
        %614 = vmatpush1.msra.mxu0 %v601
        %615 = vmatprep.subr.mxu0 0.0
        %616 = vmatpush1.msra.mxu0 %v602
        %617 = vmatprep.subr.mxu0 0.0
        %618 = vmatpush1.msra.mxu0 %v603
        %619 = vmatprep.subr.mxu0 0.0
        %620 = vmatpush1.msra.mxu0 %v604
        %621 = vmatprep.subr.mxu0 0.0
        %622 = vmatpush1.msra.mxu0 %v605
        %623 = vmatprep.subr.mxu0 0.0
        %624 = vmatpush1.msra.mxu0 %v606
        %625 = vmatprep.subr.mxu0 0.0
        %626 = vmatpush1.msra.mxu0 %v607
        %627 = vmatprep.subr.mxu0 0.0
        %628 = vmatpush1.msra.mxu0 0.0
        %629 = vmatprep.subr.mxu0 0.0
        %630 = vmatpush1.msra.mxu0 0.0
        %631 = vmatprep.subr.mxu0 0.0
        %632 = vmatpush1.msra.mxu0 0.0
        %633 = vmatprep.subr.mxu0 0.0
        %634 = vmatpush1.msra.mxu0 0.0
        %635 = vmatprep.subr.mxu0 0.0
        %636 = vmatpush1.msra.mxu0 0.0
        %637 = vmatprep.subr.mxu0 0.0
        %638 = vmatpush1.msra.mxu0 0.0
        %639 = vmatprep.subr.mxu0 0.0
        %640 = vmatpush1.msra.mxu0 0.0
        %641 = vmatprep.subr.mxu0 0.0
        %642 = vmatpush1.msra.mxu0 0.0
        %643 = vmatprep.subr.mxu0 0.0
        %644 = vmatpush1.msra.mxu0 0.0
        %645 = vmatprep.subr.mxu0 0.0
        %646 = vmatpush1.msra.mxu0 0.0
        %647 = vmatprep.subr.mxu0 0.0
        %648 = vmatpush1.msra.mxu0 0.0
        %649 = vmatprep.subr.mxu0 0.0
        %650 = vmatpush1.msra.mxu0 0.0
        %651 = vmatprep.subr.mxu0 0.0
        %652 = vmatpush1.msra.mxu0 0.0
        %653 = vmatprep.subr.mxu0 0.0
        %654 = vmatpush1.msra.mxu0 0.0
        %655 = vmatprep.subr.mxu0 0.0
        %656 = vmatpush1.msra.mxu0 0.0
        %657 = vmatprep.subr.mxu0 0.0
        %658 = vmatpush1.msra.mxu0 0.0
        %659 = vmatprep.subr.mxu0 0.0
        %660 = vmatpush1.msra.mxu0 0.0
        %661 = vmatprep.subr.mxu0 0.0
        %662 = vmatpush1.msra.mxu0 0.0
        %663 = vmatprep.subr.mxu0 0.0
        %664 = vmatpush1.msra.mxu0 0.0
        %665 = vmatprep.subr.mxu0 0.0
        %666 = vmatpush1.msra.mxu0 0.0
        %667 = vmatprep.subr.mxu0 0.0
        %668 = vmatpush1.msra.mxu0 0.0
        %669 = vmatprep.subr.mxu0 0.0
        %670 = vmatpush1.msra.mxu0 0.0
        %671 = vmatprep.subr.mxu0 0.0
        %672 = vmatpush1.msra.mxu0 0.0
        %673 = vmatprep.subr.mxu0 0.0
        %674 = vmatpush1.msra.mxu0 0.0
        %675 = vmatprep.mubr.f32.mxu0 0.0
        %676 = vmatmul.mubr.f32.gmra.mrb[0].mxu0 %v609
        %v677 = vpop.f32.mrb[0].mxu0
        %v678 = vadd.f32 0.0, %v677
        %v679 = vpop.f32.mrb[0].mxu0
        %680 = vdwg.mxu0
        %v681 = vld [vmem:[%s7] sm:$0x3]
        %v682 = vld [vmem:[%s8] sm:$0x1]
        %v684 = vlaneseq
        %v685 = vshrl.u32 %v684, 7
        %v686 = vsub.s32 0, %v685
        %v687 = vrot.slane %v682, %v686
        %vm689 = vcmask 15360
        %v691 = vsel %vm689, %v678, 0
        %vm693 = vcmask 1041408
        %v695 = vsel %vm693, %v681, 0
        %697 = vmatprep.subr.mxu0 0.0
        %698 = vmatpush1.msra.mxu0 %v695
        %699 = vmatprep.subr.mxu0 0.0
        %700 = vmatpush1.msra.mxu0 0.0
        %701 = vmatprep.subr.mxu0 0.0
        %702 = vmatpush1.msra.mxu0 0.0
        %703 = vmatprep.subr.mxu0 0.0
        %704 = vmatpush1.msra.mxu0 0.0
        %705 = vmatprep.subr.mxu0 0.0
        %706 = vmatpush1.msra.mxu0 0.0
        %707 = vmatprep.subr.mxu0 0.0
        %708 = vmatpush1.msra.mxu0 0.0
        %709 = vmatprep.subr.mxu0 0.0
        %710 = vmatpush1.msra.mxu0 0.0
        %711 = vmatprep.subr.mxu0 0.0
        %712 = vmatpush1.msra.mxu0 0.0
        %713 = vmatprep.subr.mxu0 0.0
        %714 = vmatpush1.msra.mxu0 0.0
        %715 = vmatprep.subr.mxu0 0.0
        %716 = vmatpush1.msra.mxu0 0.0
        %717 = vmatprep.subr.mxu0 0.0
        %718 = vmatpush1.msra.mxu0 0.0
        %719 = vmatprep.subr.mxu0 0.0
        %720 = vmatpush1.msra.mxu0 0.0
        %721 = vmatprep.subr.mxu0 0.0
        %722 = vmatpush1.msra.mxu0 0.0
        %723 = vmatprep.subr.mxu0 0.0
        %724 = vmatpush1.msra.mxu0 0.0
        %725 = vmatprep.subr.mxu0 0.0
        %726 = vmatpush1.msra.mxu0 0.0
        %727 = vmatprep.subr.mxu0 0.0
        %728 = vmatpush1.msra.mxu0 0.0
        %729 = vmatprep.subr.mxu0 0.0
        %730 = vmatpush1.msra.mxu0 0.0
        %731 = vmatprep.subr.mxu0 0.0
        %732 = vmatpush1.msra.mxu0 0.0
        %733 = vmatprep.subr.mxu0 0.0
        %734 = vmatpush1.msra.mxu0 0.0
        %735 = vmatprep.subr.mxu0 0.0
        %736 = vmatpush1.msra.mxu0 0.0
        %737 = vmatprep.subr.mxu0 0.0
        %738 = vmatpush1.msra.mxu0 0.0
        %739 = vmatprep.subr.mxu0 0.0
        %740 = vmatpush1.msra.mxu0 0.0
        %741 = vmatprep.subr.mxu0 0.0
        %742 = vmatpush1.msra.mxu0 0.0
        %743 = vmatprep.subr.mxu0 0.0
        %744 = vmatpush1.msra.mxu0 0.0
        %745 = vmatprep.subr.mxu0 0.0
        %746 = vmatpush1.msra.mxu0 0.0
        %747 = vmatprep.subr.mxu0 0.0
        %748 = vmatpush1.msra.mxu0 0.0
        %749 = vmatprep.subr.mxu0 0.0
        %750 = vmatpush1.msra.mxu0 0.0
        %751 = vmatprep.subr.mxu0 0.0
        %752 = vmatpush1.msra.mxu0 0.0
        %753 = vmatprep.subr.mxu0 0.0
        %754 = vmatpush1.msra.mxu0 0.0
        %755 = vmatprep.subr.mxu0 0.0
        %756 = vmatpush1.msra.mxu0 0.0
        %757 = vmatprep.subr.mxu0 0.0
        %758 = vmatpush1.msra.mxu0 0.0
        %759 = vmatprep.subr.mxu0 0.0
        %760 = vmatpush1.msra.mxu0 0.0
        %761 = vmatprep.mubr.f32.mxu0 0.0
        %762 = vmatmul.mubr.f32.gmra.mrb[0].mxu0 %v691
        %v763 = vpop.f32.mrb[0].mxu0
        %v764 = vadd.f32 %v687, %v763
        %v765 = vpop.f32.mrb[0].mxu0
        %766 = vdwg.mxu0
        %v767 = vmax.f32 %v764, 0.0
        %v768 = vand.u32 2147483647, %v764
        %v769 = vsub.f32 0.0, %v768
        %v770 = vmul.f32 %v769, 1.442695
        %v771 = vpow.pop %v770
        %v772 = vadd.f32 %v771, 1.0
        %v773 = vlog2.pop %v772
        %v774 = vmul.f32 %v773, 0.6931472
        %v775 = vmul.f32 -0.5, %v771
        %v776 = vadd.f32 %v775, 1.0
        %v777 = vmul.f32 %v776, %v771
        %v778 = vand.u32 2147483647, %v771
        %vm779 = vcmp.lt.f32.partialorder %v778, 0.0004427343
        %v780 = vsel %vm779, %v777, %v774
        %v781 = vadd.f32 %v767, %v780
        %782 = vst.msk [vmem:[#allocation4] sm:$0xff] %vm552, %v781
        %v783 = vmul.f32 %v781, %v599
        %784 = vst.msk [vmem:[#allocation5] sm:$0xff] %vm552, %v783
        %v785 = vcombine.high %v678, %v678
        %v787 = vunpack.c.l.s4 1966171168
        %v788 = vunpack.c.0.s8 %v787
        %v789 = vlaneseq
        %v790 = vshrl.u32 %v789, 7
        %v791 = vsub.s32 %v788, %v790
        %v792 = vrot.slane %v678, %v791
        %v794 = vunpack.c.l.s4 1966171168
        %v795 = vunpack.c.0.s8 %v794
        %v796 = vlaneseq
        %v797 = vshrl.u32 %v796, 7
        %v798 = vsub.s32 %v795, %v797
        %v799 = vrot.slane %v785, %v798
        %v800 = vcombine.high %v792, %v792
        %v801 = vcombine.high %v799, %v799
        %v803 = vunpack.c.l.s4 1966171168
        %v804 = vunpack.c.0.s8 %v803
        %v805 = vlaneseq
        %v806 = vshrl.u32 %v805, 7
        %v807 = vsub.s32 %v804, %v806
        %v808 = vrot.slane %v792, %v807
        %v810 = vunpack.c.l.s4 1966171168
        %v811 = vunpack.c.0.s8 %v810
        %v812 = vlaneseq
        %v813 = vshrl.u32 %v812, 7
        %v814 = vsub.s32 %v811, %v813
        %v815 = vrot.slane %v799, %v814
        %v817 = vunpack.c.l.s4 1966171168
        %v818 = vunpack.c.0.s8 %v817
        %v819 = vlaneseq
        %v820 = vshrl.u32 %v819, 7
        %v821 = vsub.s32 %v818, %v820
        %v822 = vrot.slane %v800, %v821
        %v824 = vunpack.c.l.s4 1966171168
        %v825 = vunpack.c.0.s8 %v824
        %v826 = vlaneseq
        %v827 = vshrl.u32 %v826, 7
        %v828 = vsub.s32 %v825, %v827
        %v829 = vrot.slane %v801, %v828
        %v830 = vcombine.high %v808, %v808
        %v831 = vcombine.high %v815, %v815
        %v832 = vcombine.high %v822, %v822
        %v833 = vcombine.high %v829, %v829
        %v834 = vlaneseq
        %v835 = vshrl.u32 %v834, 7
        %v836 = vsub.s32 0, %v835
        %v837 = vrot.slane %v808, %v836
        %v838 = vlaneseq
        %v839 = vshrl.u32 %v838, 7
        %v840 = vsub.s32 0, %v839
        %v841 = vrot.slane %v822, %v840
        %v842 = vlaneseq
        %v843 = vshrl.u32 %v842, 7
        %v844 = vsub.s32 0, %v843
        %v845 = vrot.slane %v830, %v844
        %v846 = vlaneseq
        %v847 = vshrl.u32 %v846, 7
        %v848 = vsub.s32 0, %v847
        %v849 = vrot.slane %v832, %v848
        %v850 = vlaneseq
        %v851 = vshrl.u32 %v850, 7
        %v852 = vsub.s32 0, %v851
        %v853 = vrot.slane %v815, %v852
        %v854 = vlaneseq
        %v855 = vshrl.u32 %v854, 7
        %v856 = vsub.s32 0, %v855
        %v857 = vrot.slane %v829, %v856
        %v858 = vlaneseq
        %v859 = vshrl.u32 %v858, 7
        %v860 = vsub.s32 0, %v859
        %v861 = vrot.slane %v831, %v860
        %v862 = vlaneseq
        %v863 = vshrl.u32 %v862, 7
        %v864 = vsub.s32 0, %v863
        %v865 = vrot.slane %v833, %v864
        %866 = vrot.lane.b32.xlu0 %v837, 126
        %v867 = vpop.permute.xlu0 %866
        %868 = vrot.lane.b32.xlu0 %v841, 126
        %v869 = vpop.permute.xlu0 %868
        %870 = vrot.lane.b32.xlu0 %v845, 126
        %v871 = vpop.permute.xlu0 %870
        %872 = vrot.lane.b32.xlu0 %v849, 126
        %v873 = vpop.permute.xlu0 %872
        %874 = vrot.lane.b32.xlu0 %v853, 126
        %v875 = vpop.permute.xlu0 %874
        %876 = vrot.lane.b32.xlu0 %v857, 126
        %v877 = vpop.permute.xlu0 %876
        %878 = vrot.lane.b32.xlu0 %v861, 126
        %v879 = vpop.permute.xlu0 %878
        %880 = vrot.lane.b32.xlu0 %v865, 126
        %v881 = vpop.permute.xlu0 %880
        %vm890 = vcmask 0
        %891 = vst.msk [vmem:[#allocation7] sm:$0x1] %vm890, %v867
        %892 = vst.msk [vmem:[#allocation7 + $0x20] sm:$0x1] %vm890, %v869
        %893 = vst.msk [vmem:[#allocation7 + $0x40] sm:$0x1] %vm890, %v871
        %894 = vst.msk [vmem:[#allocation7 + $0x60] sm:$0x1] %vm890, %v873
        %895 = vst.msk [vmem:[#allocation7 + $0x80] sm:$0x1] %vm890, %v875
        %896 = vst.msk [vmem:[#allocation7 + $0xa0] sm:$0x1] %vm890, %v877
        %897 = vst.msk [vmem:[#allocation7 + $0xc0] sm:$0x1] %vm890, %v879
        %898 = vst.msk [vmem:[#allocation7 + $0xe0] sm:$0x1] %vm890, %v881
        %899 = vrot.lane.b32.xlu0 %v837, 125
        %v900 = vpop.permute.xlu0 %899
        %901 = vrot.lane.b32.xlu0 %v841, 125
        %v902 = vpop.permute.xlu0 %901
        %903 = vrot.lane.b32.xlu0 %v845, 125
        %v904 = vpop.permute.xlu0 %903
        %905 = vrot.lane.b32.xlu0 %v849, 125
        %v906 = vpop.permute.xlu0 %905
        %907 = vrot.lane.b32.xlu0 %v853, 125
        %v908 = vpop.permute.xlu0 %907
        %909 = vrot.lane.b32.xlu0 %v857, 125
        %v910 = vpop.permute.xlu0 %909
        %911 = vrot.lane.b32.xlu0 %v861, 125
        %v912 = vpop.permute.xlu0 %911
        %913 = vrot.lane.b32.xlu0 %v865, 125
        %v914 = vpop.permute.xlu0 %913
        %923 = vst.msk [vmem:[#allocation7 + $0x1] sm:$0x1] %vm890, %v900
        %924 = vst.msk [vmem:[#allocation7 + $0x21] sm:$0x1] %vm890, %v902
        %925 = vst.msk [vmem:[#allocation7 + $0x41] sm:$0x1] %vm890, %v904
        %926 = vst.msk [vmem:[#allocation7 + $0x61] sm:$0x1] %vm890, %v906
        %927 = vst.msk [vmem:[#allocation7 + $0x81] sm:$0x1] %vm890, %v908
        %928 = vst.msk [vmem:[#allocation7 + $0xa1] sm:$0x1] %vm890, %v910
        %929 = vst.msk [vmem:[#allocation7 + $0xc1] sm:$0x1] %vm890, %v912
        %930 = vst.msk [vmem:[#allocation7 + $0xe1] sm:$0x1] %vm890, %v914
        %931 = vrot.lane.b32.xlu0 %v837, 124
        %v932 = vpop.permute.xlu0 %931
        %933 = vrot.lane.b32.xlu0 %v841, 124
        %v934 = vpop.permute.xlu0 %933
        %935 = vrot.lane.b32.xlu0 %v845, 124
        %v936 = vpop.permute.xlu0 %935
        %937 = vrot.lane.b32.xlu0 %v849, 124
        %v938 = vpop.permute.xlu0 %937
        %939 = vrot.lane.b32.xlu0 %v853, 124
        %v940 = vpop.permute.xlu0 %939
        %941 = vrot.lane.b32.xlu0 %v857, 124
        %v942 = vpop.permute.xlu0 %941
        %943 = vrot.lane.b32.xlu0 %v861, 124
        %v944 = vpop.permute.xlu0 %943
        %945 = vrot.lane.b32.xlu0 %v865, 124
        %v946 = vpop.permute.xlu0 %945
        %955 = vst.msk [vmem:[#allocation7 + $0x2] sm:$0x1] %vm890, %v932
        %956 = vst.msk [vmem:[#allocation7 + $0x22] sm:$0x1] %vm890, %v934
        %957 = vst.msk [vmem:[#allocation7 + $0x42] sm:$0x1] %vm890, %v936
        %958 = vst.msk [vmem:[#allocation7 + $0x62] sm:$0x1] %vm890, %v938
        %959 = vst.msk [vmem:[#allocation7 + $0x82] sm:$0x1] %vm890, %v940
        %960 = vst.msk [vmem:[#allocation7 + $0xa2] sm:$0x1] %vm890, %v942
        %961 = vst.msk [vmem:[#allocation7 + $0xc2] sm:$0x1] %vm890, %v944
        %962 = vst.msk [vmem:[#allocation7 + $0xe2] sm:$0x1] %vm890, %v946
        %963 = vrot.lane.b32.xlu0 %v837, 123
        %v964 = vpop.permute.xlu0 %963
        %965 = vrot.lane.b32.xlu0 %v841, 123
        %v966 = vpop.permute.xlu0 %965
        %967 = vrot.lane.b32.xlu0 %v845, 123
        %v968 = vpop.permute.xlu0 %967
        %969 = vrot.lane.b32.xlu0 %v849, 123
        %v970 = vpop.permute.xlu0 %969
        %971 = vrot.lane.b32.xlu0 %v853, 123
        %v972 = vpop.permute.xlu0 %971
        %973 = vrot.lane.b32.xlu0 %v857, 123
        %v974 = vpop.permute.xlu0 %973
        %975 = vrot.lane.b32.xlu0 %v861, 123
        %v976 = vpop.permute.xlu0 %975
        %977 = vrot.lane.b32.xlu0 %v865, 123
        %v978 = vpop.permute.xlu0 %977
        %987 = vst.msk [vmem:[#allocation7 + $0x3] sm:$0x1] %vm890, %v964
        %988 = vst.msk [vmem:[#allocation7 + $0x23] sm:$0x1] %vm890, %v966
        %989 = vst.msk [vmem:[#allocation7 + $0x43] sm:$0x1] %vm890, %v968
        %990 = vst.msk [vmem:[#allocation7 + $0x63] sm:$0x1] %vm890, %v970
        %991 = vst.msk [vmem:[#allocation7 + $0x83] sm:$0x1] %vm890, %v972
        %992 = vst.msk [vmem:[#allocation7 + $0xa3] sm:$0x1] %vm890, %v974
        %993 = vst.msk [vmem:[#allocation7 + $0xc3] sm:$0x1] %vm890, %v976
        %994 = vst.msk [vmem:[#allocation7 + $0xe3] sm:$0x1] %vm890, %v978
        %995 = vrot.lane.b32.xlu0 %v837, 122
        %v996 = vpop.permute.xlu0 %995
        %997 = vrot.lane.b32.xlu0 %v841, 122
        %v998 = vpop.permute.xlu0 %997
        %999 = vrot.lane.b32.xlu0 %v845, 122
        %v1000 = vpop.permute.xlu0 %999
        %1001 = vrot.lane.b32.xlu0 %v849, 122
        %v1002 = vpop.permute.xlu0 %1001
        %1003 = vrot.lane.b32.xlu0 %v853, 122
        %v1004 = vpop.permute.xlu0 %1003
        %1005 = vrot.lane.b32.xlu0 %v857, 122
        %v1006 = vpop.permute.xlu0 %1005
        %1007 = vrot.lane.b32.xlu0 %v861, 122
        %v1008 = vpop.permute.xlu0 %1007
        %1009 = vrot.lane.b32.xlu0 %v865, 122
        %v1010 = vpop.permute.xlu0 %1009
        %1019 = vst.msk [vmem:[#allocation7 + $0x4] sm:$0x1] %vm890, %v996
        %1020 = vst.msk [vmem:[#allocation7 + $0x24] sm:$0x1] %vm890, %v998
        %1021 = vst.msk [vmem:[#allocation7 + $0x44] sm:$0x1] %vm890, %v1000
        %1022 = vst.msk [vmem:[#allocation7 + $0x64] sm:$0x1] %vm890, %v1002
        %1023 = vst.msk [vmem:[#allocation7 + $0x84] sm:$0x1] %vm890, %v1004
        %1024 = vst.msk [vmem:[#allocation7 + $0xa4] sm:$0x1] %vm890, %v1006
        %1025 = vst.msk [vmem:[#allocation7 + $0xc4] sm:$0x1] %vm890, %v1008
        %1026 = vst.msk [vmem:[#allocation7 + $0xe4] sm:$0x1] %vm890, %v1010
        %1027 = vrot.lane.b32.xlu0 %v837, 121
        %v1028 = vpop.permute.xlu0 %1027
        %1029 = vrot.lane.b32.xlu0 %v841, 121
        %v1030 = vpop.permute.xlu0 %1029
        %1031 = vrot.lane.b32.xlu0 %v845, 121
        %v1032 = vpop.permute.xlu0 %1031
        %1033 = vrot.lane.b32.xlu0 %v849, 121
        %v1034 = vpop.permute.xlu0 %1033
        %1035 = vrot.lane.b32.xlu0 %v853, 121
        %v1036 = vpop.permute.xlu0 %1035
        %1037 = vrot.lane.b32.xlu0 %v857, 121
        %v1038 = vpop.permute.xlu0 %1037
        %1039 = vrot.lane.b32.xlu0 %v861, 121
        %v1040 = vpop.permute.xlu0 %1039
        %1041 = vrot.lane.b32.xlu0 %v865, 121
        %v1042 = vpop.permute.xlu0 %1041
        %1051 = vst.msk [vmem:[#allocation7 + $0x5] sm:$0x1] %vm890, %v1028
        %1052 = vst.msk [vmem:[#allocation7 + $0x25] sm:$0x1] %vm890, %v1030
        %1053 = vst.msk [vmem:[#allocation7 + $0x45] sm:$0x1] %vm890, %v1032
        %1054 = vst.msk [vmem:[#allocation7 + $0x65] sm:$0x1] %vm890, %v1034
        %1055 = vst.msk [vmem:[#allocation7 + $0x85] sm:$0x1] %vm890, %v1036
        %1056 = vst.msk [vmem:[#allocation7 + $0xa5] sm:$0x1] %vm890, %v1038
        %1057 = vst.msk [vmem:[#allocation7 + $0xc5] sm:$0x1] %vm890, %v1040
        %1058 = vst.msk [vmem:[#allocation7 + $0xe5] sm:$0x1] %vm890, %v1042
        %1059 = vrot.lane.b32.xlu0 %v837, 120
        %v1060 = vpop.permute.xlu0 %1059
        %1061 = vrot.lane.b32.xlu0 %v841, 120
        %v1062 = vpop.permute.xlu0 %1061
        %1063 = vrot.lane.b32.xlu0 %v845, 120
        %v1064 = vpop.permute.xlu0 %1063
        %1065 = vrot.lane.b32.xlu0 %v849, 120
        %v1066 = vpop.permute.xlu0 %1065
        %1067 = vrot.lane.b32.xlu0 %v853, 120
        %v1068 = vpop.permute.xlu0 %1067
        %1069 = vrot.lane.b32.xlu0 %v857, 120
        %v1070 = vpop.permute.xlu0 %1069
        %1071 = vrot.lane.b32.xlu0 %v861, 120
        %v1072 = vpop.permute.xlu0 %1071
        %1073 = vrot.lane.b32.xlu0 %v865, 120
        %v1074 = vpop.permute.xlu0 %1073
        %1083 = vst.msk [vmem:[#allocation7 + $0x6] sm:$0x1] %vm890, %v1060
        %1084 = vst.msk [vmem:[#allocation7 + $0x26] sm:$0x1] %vm890, %v1062
        %1085 = vst.msk [vmem:[#allocation7 + $0x46] sm:$0x1] %vm890, %v1064
        %1086 = vst.msk [vmem:[#allocation7 + $0x66] sm:$0x1] %vm890, %v1066
        %1087 = vst.msk [vmem:[#allocation7 + $0x86] sm:$0x1] %vm890, %v1068
        %1088 = vst.msk [vmem:[#allocation7 + $0xa6] sm:$0x1] %vm890, %v1070
        %1089 = vst.msk [vmem:[#allocation7 + $0xc6] sm:$0x1] %vm890, %v1072
        %1090 = vst.msk [vmem:[#allocation7 + $0xe6] sm:$0x1] %vm890, %v1074
        %1091 = vrot.lane.b32.xlu0 %v837, 119
        %v1092 = vpop.permute.xlu0 %1091
        %1093 = vrot.lane.b32.xlu0 %v841, 119
        %v1094 = vpop.permute.xlu0 %1093
        %1095 = vrot.lane.b32.xlu0 %v845, 119
        %v1096 = vpop.permute.xlu0 %1095
        %1097 = vrot.lane.b32.xlu0 %v849, 119
        %v1098 = vpop.permute.xlu0 %1097
        %1099 = vrot.lane.b32.xlu0 %v853, 119
        %v1100 = vpop.permute.xlu0 %1099
        %1101 = vrot.lane.b32.xlu0 %v857, 119
        %v1102 = vpop.permute.xlu0 %1101
        %1103 = vrot.lane.b32.xlu0 %v861, 119
        %v1104 = vpop.permute.xlu0 %1103
        %1105 = vrot.lane.b32.xlu0 %v865, 119
        %v1106 = vpop.permute.xlu0 %1105
        %1115 = vst.msk [vmem:[#allocation7 + $0x7] sm:$0x1] %vm890, %v1092
        %1116 = vst.msk [vmem:[#allocation7 + $0x27] sm:$0x1] %vm890, %v1094
        %1117 = vst.msk [vmem:[#allocation7 + $0x47] sm:$0x1] %vm890, %v1096
        %1118 = vst.msk [vmem:[#allocation7 + $0x67] sm:$0x1] %vm890, %v1098
        %1119 = vst.msk [vmem:[#allocation7 + $0x87] sm:$0x1] %vm890, %v1100
        %1120 = vst.msk [vmem:[#allocation7 + $0xa7] sm:$0x1] %vm890, %v1102
        %1121 = vst.msk [vmem:[#allocation7 + $0xc7] sm:$0x1] %vm890, %v1104
        %1122 = vst.msk [vmem:[#allocation7 + $0xe7] sm:$0x1] %vm890, %v1106
        %1123 = vrot.lane.b32.xlu0 %v837, 118
        %v1124 = vpop.permute.xlu0 %1123
        %1125 = vrot.lane.b32.xlu0 %v841, 118
        %v1126 = vpop.permute.xlu0 %1125
        %1127 = vrot.lane.b32.xlu0 %v845, 118
        %v1128 = vpop.permute.xlu0 %1127
        %1129 = vrot.lane.b32.xlu0 %v849, 118
        %v1130 = vpop.permute.xlu0 %1129
        %1131 = vrot.lane.b32.xlu0 %v853, 118
        %v1132 = vpop.permute.xlu0 %1131
        %1133 = vrot.lane.b32.xlu0 %v857, 118
        %v1134 = vpop.permute.xlu0 %1133
        %1135 = vrot.lane.b32.xlu0 %v861, 118
        %v1136 = vpop.permute.xlu0 %1135
        %1137 = vrot.lane.b32.xlu0 %v865, 118
        %v1138 = vpop.permute.xlu0 %1137
        %1147 = vst.msk [vmem:[#allocation7 + $0x8] sm:$0x1] %vm890, %v1124
        %1148 = vst.msk [vmem:[#allocation7 + $0x28] sm:$0x1] %vm890, %v1126
        %1149 = vst.msk [vmem:[#allocation7 + $0x48] sm:$0x1] %vm890, %v1128
        %1150 = vst.msk [vmem:[#allocation7 + $0x68] sm:$0x1] %vm890, %v1130
        %1151 = vst.msk [vmem:[#allocation7 + $0x88] sm:$0x1] %vm890, %v1132
        %1152 = vst.msk [vmem:[#allocation7 + $0xa8] sm:$0x1] %vm890, %v1134
        %1153 = vst.msk [vmem:[#allocation7 + $0xc8] sm:$0x1] %vm890, %v1136
        %1154 = vst.msk [vmem:[#allocation7 + $0xe8] sm:$0x1] %vm890, %v1138
        %1155 = vrot.lane.b32.xlu0 %v837, 117
        %v1156 = vpop.permute.xlu0 %1155
        %1157 = vrot.lane.b32.xlu0 %v841, 117
        %v1158 = vpop.permute.xlu0 %1157
        %1159 = vrot.lane.b32.xlu0 %v845, 117
        %v1160 = vpop.permute.xlu0 %1159
        %1161 = vrot.lane.b32.xlu0 %v849, 117
        %v1162 = vpop.permute.xlu0 %1161
        %1163 = vrot.lane.b32.xlu0 %v853, 117
        %v1164 = vpop.permute.xlu0 %1163
        %1165 = vrot.lane.b32.xlu0 %v857, 117
        %v1166 = vpop.permute.xlu0 %1165
        %1167 = vrot.lane.b32.xlu0 %v861, 117
        %v1168 = vpop.permute.xlu0 %1167
        %1169 = vrot.lane.b32.xlu0 %v865, 117
        %v1170 = vpop.permute.xlu0 %1169
        %1179 = vst.msk [vmem:[#allocation7 + $0x9] sm:$0x1] %vm890, %v1156
        %1180 = vst.msk [vmem:[#allocation7 + $0x29] sm:$0x1] %vm890, %v1158
        %1181 = vst.msk [vmem:[#allocation7 + $0x49] sm:$0x1] %vm890, %v1160
        %1182 = vst.msk [vmem:[#allocation7 + $0x69] sm:$0x1] %vm890, %v1162
        %1183 = vst.msk [vmem:[#allocation7 + $0x89] sm:$0x1] %vm890, %v1164
        %1184 = vst.msk [vmem:[#allocation7 + $0xa9] sm:$0x1] %vm890, %v1166
        %1185 = vst.msk [vmem:[#allocation7 + $0xc9] sm:$0x1] %vm890, %v1168
        %1186 = vst.msk [vmem:[#allocation7 + $0xe9] sm:$0x1] %vm890, %v1170
        %1187 = vrot.lane.b32.xlu0 %v837, 116
        %v1188 = vpop.permute.xlu0 %1187
        %1189 = vrot.lane.b32.xlu0 %v841, 116
        %v1190 = vpop.permute.xlu0 %1189
        %1191 = vrot.lane.b32.xlu0 %v845, 116
        %v1192 = vpop.permute.xlu0 %1191
        %1193 = vrot.lane.b32.xlu0 %v849, 116
        %v1194 = vpop.permute.xlu0 %1193
        %1195 = vrot.lane.b32.xlu0 %v853, 116
        %v1196 = vpop.permute.xlu0 %1195
        %1197 = vrot.lane.b32.xlu0 %v857, 116
        %v1198 = vpop.permute.xlu0 %1197
        %1199 = vrot.lane.b32.xlu0 %v861, 116
        %v1200 = vpop.permute.xlu0 %1199
        %1201 = vrot.lane.b32.xlu0 %v865, 116
        %v1202 = vpop.permute.xlu0 %1201
        %1211 = vst.msk [vmem:[#allocation7 + $0xa] sm:$0x1] %vm890, %v1188
        %1212 = vst.msk [vmem:[#allocation7 + $0x2a] sm:$0x1] %vm890, %v1190
        %1213 = vst.msk [vmem:[#allocation7 + $0x4a] sm:$0x1] %vm890, %v1192
        %1214 = vst.msk [vmem:[#allocation7 + $0x6a] sm:$0x1] %vm890, %v1194
        %1215 = vst.msk [vmem:[#allocation7 + $0x8a] sm:$0x1] %vm890, %v1196
        %1216 = vst.msk [vmem:[#allocation7 + $0xaa] sm:$0x1] %vm890, %v1198
        %1217 = vst.msk [vmem:[#allocation7 + $0xca] sm:$0x1] %vm890, %v1200
        %1218 = vst.msk [vmem:[#allocation7 + $0xea] sm:$0x1] %vm890, %v1202
        %1219 = vrot.lane.b32.xlu0 %v837, 115
        %v1220 = vpop.permute.xlu0 %1219
        %1221 = vrot.lane.b32.xlu0 %v841, 115
        %v1222 = vpop.permute.xlu0 %1221
        %1223 = vrot.lane.b32.xlu0 %v845, 115
        %v1224 = vpop.permute.xlu0 %1223
        %1225 = vrot.lane.b32.xlu0 %v849, 115
        %v1226 = vpop.permute.xlu0 %1225
        %1227 = vrot.lane.b32.xlu0 %v853, 115
        %v1228 = vpop.permute.xlu0 %1227
        %1229 = vrot.lane.b32.xlu0 %v857, 115
        %v1230 = vpop.permute.xlu0 %1229
        %1231 = vrot.lane.b32.xlu0 %v861, 115
        %v1232 = vpop.permute.xlu0 %1231
        %1233 = vrot.lane.b32.xlu0 %v865, 115
        %v1234 = vpop.permute.xlu0 %1233
        %1243 = vst.msk [vmem:[#allocation7 + $0xb] sm:$0x1] %vm890, %v1220
        %1244 = vst.msk [vmem:[#allocation7 + $0x2b] sm:$0x1] %vm890, %v1222
        %1245 = vst.msk [vmem:[#allocation7 + $0x4b] sm:$0x1] %vm890, %v1224
        %1246 = vst.msk [vmem:[#allocation7 + $0x6b] sm:$0x1] %vm890, %v1226
        %1247 = vst.msk [vmem:[#allocation7 + $0x8b] sm:$0x1] %vm890, %v1228
        %1248 = vst.msk [vmem:[#allocation7 + $0xab] sm:$0x1] %vm890, %v1230
        %1249 = vst.msk [vmem:[#allocation7 + $0xcb] sm:$0x1] %vm890, %v1232
        %1250 = vst.msk [vmem:[#allocation7 + $0xeb] sm:$0x1] %vm890, %v1234
        %1251 = vrot.lane.b32.xlu0 %v837, 114
        %v1252 = vpop.permute.xlu0 %1251
        %1253 = vrot.lane.b32.xlu0 %v841, 114
        %v1254 = vpop.permute.xlu0 %1253
        %1255 = vrot.lane.b32.xlu0 %v845, 114
        %v1256 = vpop.permute.xlu0 %1255
        %1257 = vrot.lane.b32.xlu0 %v849, 114
        %v1258 = vpop.permute.xlu0 %1257
        %1259 = vrot.lane.b32.xlu0 %v853, 114
        %v1260 = vpop.permute.xlu0 %1259
        %1261 = vrot.lane.b32.xlu0 %v857, 114
        %v1262 = vpop.permute.xlu0 %1261
        %1263 = vrot.lane.b32.xlu0 %v861, 114
        %v1264 = vpop.permute.xlu0 %1263
        %1265 = vrot.lane.b32.xlu0 %v865, 114
        %v1266 = vpop.permute.xlu0 %1265
        %1275 = vst.msk [vmem:[#allocation7 + $0xc] sm:$0x1] %vm890, %v1252
        %1276 = vst.msk [vmem:[#allocation7 + $0x2c] sm:$0x1] %vm890, %v1254
        %1277 = vst.msk [vmem:[#allocation7 + $0x4c] sm:$0x1] %vm890, %v1256
        %1278 = vst.msk [vmem:[#allocation7 + $0x6c] sm:$0x1] %vm890, %v1258
        %1279 = vst.msk [vmem:[#allocation7 + $0x8c] sm:$0x1] %vm890, %v1260
        %1280 = vst.msk [vmem:[#allocation7 + $0xac] sm:$0x1] %vm890, %v1262
        %1281 = vst.msk [vmem:[#allocation7 + $0xcc] sm:$0x1] %vm890, %v1264
        %1282 = vst.msk [vmem:[#allocation7 + $0xec] sm:$0x1] %vm890, %v1266
        %1283 = vrot.lane.b32.xlu0 %v837, 113
        %v1284 = vpop.permute.xlu0 %1283
        %1285 = vrot.lane.b32.xlu0 %v841, 113
        %v1286 = vpop.permute.xlu0 %1285
        %1287 = vrot.lane.b32.xlu0 %v845, 113
        %v1288 = vpop.permute.xlu0 %1287
        %1289 = vrot.lane.b32.xlu0 %v849, 113
        %v1290 = vpop.permute.xlu0 %1289
        %1291 = vrot.lane.b32.xlu0 %v853, 113
        %v1292 = vpop.permute.xlu0 %1291
        %1293 = vrot.lane.b32.xlu0 %v857, 113
        %v1294 = vpop.permute.xlu0 %1293
        %1295 = vrot.lane.b32.xlu0 %v861, 113
        %v1296 = vpop.permute.xlu0 %1295
        %1297 = vrot.lane.b32.xlu0 %v865, 113
        %v1298 = vpop.permute.xlu0 %1297
        %1307 = vst.msk [vmem:[#allocation7 + $0xd] sm:$0x1] %vm890, %v1284
        %1308 = vst.msk [vmem:[#allocation7 + $0x2d] sm:$0x1] %vm890, %v1286
        %1309 = vst.msk [vmem:[#allocation7 + $0x4d] sm:$0x1] %vm890, %v1288
        %1310 = vst.msk [vmem:[#allocation7 + $0x6d] sm:$0x1] %vm890, %v1290
        %1311 = vst.msk [vmem:[#allocation7 + $0x8d] sm:$0x1] %vm890, %v1292
        %1312 = vst.msk [vmem:[#allocation7 + $0xad] sm:$0x1] %vm890, %v1294
        %1313 = vst.msk [vmem:[#allocation7 + $0xcd] sm:$0x1] %vm890, %v1296
        %1314 = vst.msk [vmem:[#allocation7 + $0xed] sm:$0x1] %vm890, %v1298
        %1315 = vrot.lane.b32.xlu0 %v837, 112
        %v1316 = vpop.permute.xlu0 %1315
        %1317 = vrot.lane.b32.xlu0 %v841, 112
        %v1318 = vpop.permute.xlu0 %1317
        %1319 = vrot.lane.b32.xlu0 %v845, 112
        %v1320 = vpop.permute.xlu0 %1319
        %1321 = vrot.lane.b32.xlu0 %v849, 112
        %v1322 = vpop.permute.xlu0 %1321
        %1323 = vrot.lane.b32.xlu0 %v853, 112
        %v1324 = vpop.permute.xlu0 %1323
        %1325 = vrot.lane.b32.xlu0 %v857, 112
        %v1326 = vpop.permute.xlu0 %1325
        %1327 = vrot.lane.b32.xlu0 %v861, 112
        %v1328 = vpop.permute.xlu0 %1327
        %1329 = vrot.lane.b32.xlu0 %v865, 112
        %v1330 = vpop.permute.xlu0 %1329
        %1339 = vst.msk [vmem:[#allocation7 + $0xe] sm:$0x1] %vm890, %v1316
        %1340 = vst.msk [vmem:[#allocation7 + $0x2e] sm:$0x1] %vm890, %v1318
        %1341 = vst.msk [vmem:[#allocation7 + $0x4e] sm:$0x1] %vm890, %v1320
        %1342 = vst.msk [vmem:[#allocation7 + $0x6e] sm:$0x1] %vm890, %v1322
        %1343 = vst.msk [vmem:[#allocation7 + $0x8e] sm:$0x1] %vm890, %v1324
        %1344 = vst.msk [vmem:[#allocation7 + $0xae] sm:$0x1] %vm890, %v1326
        %1345 = vst.msk [vmem:[#allocation7 + $0xce] sm:$0x1] %vm890, %v1328
        %1346 = vst.msk [vmem:[#allocation7 + $0xee] sm:$0x1] %vm890, %v1330
        %1347 = vrot.lane.b32.xlu0 %v837, 111
        %v1348 = vpop.permute.xlu0 %1347
        %1349 = vrot.lane.b32.xlu0 %v841, 111
        %v1350 = vpop.permute.xlu0 %1349
        %1351 = vrot.lane.b32.xlu0 %v845, 111
        %v1352 = vpop.permute.xlu0 %1351
        %1353 = vrot.lane.b32.xlu0 %v849, 111
        %v1354 = vpop.permute.xlu0 %1353
        %1355 = vrot.lane.b32.xlu0 %v853, 111
        %v1356 = vpop.permute.xlu0 %1355
        %1357 = vrot.lane.b32.xlu0 %v857, 111
        %v1358 = vpop.permute.xlu0 %1357
        %1359 = vrot.lane.b32.xlu0 %v861, 111
        %v1360 = vpop.permute.xlu0 %1359
        %1361 = vrot.lane.b32.xlu0 %v865, 111
        %v1362 = vpop.permute.xlu0 %1361
        %1371 = vst.msk [vmem:[#allocation7 + $0xf] sm:$0x1] %vm890, %v1348
        %1372 = vst.msk [vmem:[#allocation7 + $0x2f] sm:$0x1] %vm890, %v1350
        %1373 = vst.msk [vmem:[#allocation7 + $0x4f] sm:$0x1] %vm890, %v1352
        %1374 = vst.msk [vmem:[#allocation7 + $0x6f] sm:$0x1] %vm890, %v1354
        %1375 = vst.msk [vmem:[#allocation7 + $0x8f] sm:$0x1] %vm890, %v1356
        %1376 = vst.msk [vmem:[#allocation7 + $0xaf] sm:$0x1] %vm890, %v1358
        %1377 = vst.msk [vmem:[#allocation7 + $0xcf] sm:$0x1] %vm890, %v1360
        %1378 = vst.msk [vmem:[#allocation7 + $0xef] sm:$0x1] %vm890, %v1362
        %1379 = vrot.lane.b32.xlu0 %v837, 110
        %v1380 = vpop.permute.xlu0 %1379
        %1381 = vrot.lane.b32.xlu0 %v841, 110
        %v1382 = vpop.permute.xlu0 %1381
        %1383 = vrot.lane.b32.xlu0 %v845, 110
        %v1384 = vpop.permute.xlu0 %1383
        %1385 = vrot.lane.b32.xlu0 %v849, 110
        %v1386 = vpop.permute.xlu0 %1385
        %1387 = vrot.lane.b32.xlu0 %v853, 110
        %v1388 = vpop.permute.xlu0 %1387
        %1389 = vrot.lane.b32.xlu0 %v857, 110
        %v1390 = vpop.permute.xlu0 %1389
        %1391 = vrot.lane.b32.xlu0 %v861, 110
        %v1392 = vpop.permute.xlu0 %1391
        %1393 = vrot.lane.b32.xlu0 %v865, 110
        %v1394 = vpop.permute.xlu0 %1393
        %1403 = vst.msk [vmem:[#allocation7 + $0x10] sm:$0x1] %vm890, %v1380
        %1404 = vst.msk [vmem:[#allocation7 + $0x30] sm:$0x1] %vm890, %v1382
        %1405 = vst.msk [vmem:[#allocation7 + $0x50] sm:$0x1] %vm890, %v1384
        %1406 = vst.msk [vmem:[#allocation7 + $0x70] sm:$0x1] %vm890, %v1386
        %1407 = vst.msk [vmem:[#allocation7 + $0x90] sm:$0x1] %vm890, %v1388
        %1408 = vst.msk [vmem:[#allocation7 + $0xb0] sm:$0x1] %vm890, %v1390
        %1409 = vst.msk [vmem:[#allocation7 + $0xd0] sm:$0x1] %vm890, %v1392
        %1410 = vst.msk [vmem:[#allocation7 + $0xf0] sm:$0x1] %vm890, %v1394
        %1411 = vrot.lane.b32.xlu0 %v837, 109
        %v1412 = vpop.permute.xlu0 %1411
        %1413 = vrot.lane.b32.xlu0 %v841, 109
        %v1414 = vpop.permute.xlu0 %1413
        %1415 = vrot.lane.b32.xlu0 %v845, 109
        %v1416 = vpop.permute.xlu0 %1415
        %1417 = vrot.lane.b32.xlu0 %v849, 109
        %v1418 = vpop.permute.xlu0 %1417
        %1419 = vrot.lane.b32.xlu0 %v853, 109
        %v1420 = vpop.permute.xlu0 %1419
        %1421 = vrot.lane.b32.xlu0 %v857, 109
        %v1422 = vpop.permute.xlu0 %1421
        %1423 = vrot.lane.b32.xlu0 %v861, 109
        %v1424 = vpop.permute.xlu0 %1423
        %1425 = vrot.lane.b32.xlu0 %v865, 109
        %v1426 = vpop.permute.xlu0 %1425
        %1435 = vst.msk [vmem:[#allocation7 + $0x11] sm:$0x1] %vm890, %v1412
        %1436 = vst.msk [vmem:[#allocation7 + $0x31] sm:$0x1] %vm890, %v1414
        %1437 = vst.msk [vmem:[#allocation7 + $0x51] sm:$0x1] %vm890, %v1416
        %1438 = vst.msk [vmem:[#allocation7 + $0x71] sm:$0x1] %vm890, %v1418
        %1439 = vst.msk [vmem:[#allocation7 + $0x91] sm:$0x1] %vm890, %v1420
        %1440 = vst.msk [vmem:[#allocation7 + $0xb1] sm:$0x1] %vm890, %v1422
        %1441 = vst.msk [vmem:[#allocation7 + $0xd1] sm:$0x1] %vm890, %v1424
        %1442 = vst.msk [vmem:[#allocation7 + $0xf1] sm:$0x1] %vm890, %v1426
        %1443 = vrot.lane.b32.xlu0 %v837, 108
        %v1444 = vpop.permute.xlu0 %1443
        %1445 = vrot.lane.b32.xlu0 %v841, 108
        %v1446 = vpop.permute.xlu0 %1445
        %1447 = vrot.lane.b32.xlu0 %v845, 108
        %v1448 = vpop.permute.xlu0 %1447
        %1449 = vrot.lane.b32.xlu0 %v849, 108
        %v1450 = vpop.permute.xlu0 %1449
        %1451 = vrot.lane.b32.xlu0 %v853, 108
        %v1452 = vpop.permute.xlu0 %1451
        %1453 = vrot.lane.b32.xlu0 %v857, 108
        %v1454 = vpop.permute.xlu0 %1453
        %1455 = vrot.lane.b32.xlu0 %v861, 108
        %v1456 = vpop.permute.xlu0 %1455
        %1457 = vrot.lane.b32.xlu0 %v865, 108
        %v1458 = vpop.permute.xlu0 %1457
        %1467 = vst.msk [vmem:[#allocation7 + $0x12] sm:$0x1] %vm890, %v1444
        %1468 = vst.msk [vmem:[#allocation7 + $0x32] sm:$0x1] %vm890, %v1446
        %1469 = vst.msk [vmem:[#allocation7 + $0x52] sm:$0x1] %vm890, %v1448
        %1470 = vst.msk [vmem:[#allocation7 + $0x72] sm:$0x1] %vm890, %v1450
        %1471 = vst.msk [vmem:[#allocation7 + $0x92] sm:$0x1] %vm890, %v1452
        %1472 = vst.msk [vmem:[#allocation7 + $0xb2] sm:$0x1] %vm890, %v1454
        %1473 = vst.msk [vmem:[#allocation7 + $0xd2] sm:$0x1] %vm890, %v1456
        %1474 = vst.msk [vmem:[#allocation7 + $0xf2] sm:$0x1] %vm890, %v1458
        %1475 = vrot.lane.b32.xlu0 %v837, 107
        %v1476 = vpop.permute.xlu0 %1475
        %1477 = vrot.lane.b32.xlu0 %v841, 107
        %v1478 = vpop.permute.xlu0 %1477
        %1479 = vrot.lane.b32.xlu0 %v845, 107
        %v1480 = vpop.permute.xlu0 %1479
        %1481 = vrot.lane.b32.xlu0 %v849, 107
        %v1482 = vpop.permute.xlu0 %1481
        %1483 = vrot.lane.b32.xlu0 %v853, 107
        %v1484 = vpop.permute.xlu0 %1483
        %1485 = vrot.lane.b32.xlu0 %v857, 107
        %v1486 = vpop.permute.xlu0 %1485
        %1487 = vrot.lane.b32.xlu0 %v861, 107
        %v1488 = vpop.permute.xlu0 %1487
        %1489 = vrot.lane.b32.xlu0 %v865, 107
        %v1490 = vpop.permute.xlu0 %1489
        %1499 = vst.msk [vmem:[#allocation7 + $0x13] sm:$0x1] %vm890, %v1476
        %1500 = vst.msk [vmem:[#allocation7 + $0x33] sm:$0x1] %vm890, %v1478
        %1501 = vst.msk [vmem:[#allocation7 + $0x53] sm:$0x1] %vm890, %v1480
        %1502 = vst.msk [vmem:[#allocation7 + $0x73] sm:$0x1] %vm890, %v1482
        %1503 = vst.msk [vmem:[#allocation7 + $0x93] sm:$0x1] %vm890, %v1484
        %1504 = vst.msk [vmem:[#allocation7 + $0xb3] sm:$0x1] %vm890, %v1486
        %1505 = vst.msk [vmem:[#allocation7 + $0xd3] sm:$0x1] %vm890, %v1488
        %1506 = vst.msk [vmem:[#allocation7 + $0xf3] sm:$0x1] %vm890, %v1490
        %1507 = vrot.lane.b32.xlu0 %v837, 106
        %v1508 = vpop.permute.xlu0 %1507
        %1509 = vrot.lane.b32.xlu0 %v841, 106
        %v1510 = vpop.permute.xlu0 %1509
        %1511 = vrot.lane.b32.xlu0 %v845, 106
        %v1512 = vpop.permute.xlu0 %1511
        %1513 = vrot.lane.b32.xlu0 %v849, 106
        %v1514 = vpop.permute.xlu0 %1513
        %1515 = vrot.lane.b32.xlu0 %v853, 106
        %v1516 = vpop.permute.xlu0 %1515
        %1517 = vrot.lane.b32.xlu0 %v857, 106
        %v1518 = vpop.permute.xlu0 %1517
        %1519 = vrot.lane.b32.xlu0 %v861, 106
        %v1520 = vpop.permute.xlu0 %1519
        %1521 = vrot.lane.b32.xlu0 %v865, 106
        %v1522 = vpop.permute.xlu0 %1521
        %1531 = vst.msk [vmem:[#allocation7 + $0x14] sm:$0x1] %vm890, %v1508
        %1532 = vst.msk [vmem:[#allocation7 + $0x34] sm:$0x1] %vm890, %v1510
        %1533 = vst.msk [vmem:[#allocation7 + $0x54] sm:$0x1] %vm890, %v1512
        %1534 = vst.msk [vmem:[#allocation7 + $0x74] sm:$0x1] %vm890, %v1514
        %1535 = vst.msk [vmem:[#allocation7 + $0x94] sm:$0x1] %vm890, %v1516
        %1536 = vst.msk [vmem:[#allocation7 + $0xb4] sm:$0x1] %vm890, %v1518
        %1537 = vst.msk [vmem:[#allocation7 + $0xd4] sm:$0x1] %vm890, %v1520
        %1538 = vst.msk [vmem:[#allocation7 + $0xf4] sm:$0x1] %vm890, %v1522
        %1539 = vrot.lane.b32.xlu0 %v837, 105
        %v1540 = vpop.permute.xlu0 %1539
        %1541 = vrot.lane.b32.xlu0 %v841, 105
        %v1542 = vpop.permute.xlu0 %1541
        %1543 = vrot.lane.b32.xlu0 %v845, 105
        %v1544 = vpop.permute.xlu0 %1543
        %1545 = vrot.lane.b32.xlu0 %v849, 105
        %v1546 = vpop.permute.xlu0 %1545
        %1547 = vrot.lane.b32.xlu0 %v853, 105
        %v1548 = vpop.permute.xlu0 %1547
        %1549 = vrot.lane.b32.xlu0 %v857, 105
        %v1550 = vpop.permute.xlu0 %1549
        %1551 = vrot.lane.b32.xlu0 %v861, 105
        %v1552 = vpop.permute.xlu0 %1551
        %1553 = vrot.lane.b32.xlu0 %v865, 105
        %v1554 = vpop.permute.xlu0 %1553
        %1563 = vst.msk [vmem:[#allocation7 + $0x15] sm:$0x1] %vm890, %v1540
        %1564 = vst.msk [vmem:[#allocation7 + $0x35] sm:$0x1] %vm890, %v1542
        %1565 = vst.msk [vmem:[#allocation7 + $0x55] sm:$0x1] %vm890, %v1544
        %1566 = vst.msk [vmem:[#allocation7 + $0x75] sm:$0x1] %vm890, %v1546
        %1567 = vst.msk [vmem:[#allocation7 + $0x95] sm:$0x1] %vm890, %v1548
        %1568 = vst.msk [vmem:[#allocation7 + $0xb5] sm:$0x1] %vm890, %v1550
        %1569 = vst.msk [vmem:[#allocation7 + $0xd5] sm:$0x1] %vm890, %v1552
        %1570 = vst.msk [vmem:[#allocation7 + $0xf5] sm:$0x1] %vm890, %v1554
        %1571 = vrot.lane.b32.xlu0 %v837, 104
        %v1572 = vpop.permute.xlu0 %1571
        %1573 = vrot.lane.b32.xlu0 %v841, 104
        %v1574 = vpop.permute.xlu0 %1573
        %1575 = vrot.lane.b32.xlu0 %v845, 104
        %v1576 = vpop.permute.xlu0 %1575
        %1577 = vrot.lane.b32.xlu0 %v849, 104
        %v1578 = vpop.permute.xlu0 %1577
        %1579 = vrot.lane.b32.xlu0 %v853, 104
        %v1580 = vpop.permute.xlu0 %1579
        %1581 = vrot.lane.b32.xlu0 %v857, 104
        %v1582 = vpop.permute.xlu0 %1581
        %1583 = vrot.lane.b32.xlu0 %v861, 104
        %v1584 = vpop.permute.xlu0 %1583
        %1585 = vrot.lane.b32.xlu0 %v865, 104
        %v1586 = vpop.permute.xlu0 %1585
        %1595 = vst.msk [vmem:[#allocation7 + $0x16] sm:$0x1] %vm890, %v1572
        %1596 = vst.msk [vmem:[#allocation7 + $0x36] sm:$0x1] %vm890, %v1574
        %1597 = vst.msk [vmem:[#allocation7 + $0x56] sm:$0x1] %vm890, %v1576
        %1598 = vst.msk [vmem:[#allocation7 + $0x76] sm:$0x1] %vm890, %v1578
        %1599 = vst.msk [vmem:[#allocation7 + $0x96] sm:$0x1] %vm890, %v1580
        %1600 = vst.msk [vmem:[#allocation7 + $0xb6] sm:$0x1] %vm890, %v1582
        %1601 = vst.msk [vmem:[#allocation7 + $0xd6] sm:$0x1] %vm890, %v1584
        %1602 = vst.msk [vmem:[#allocation7 + $0xf6] sm:$0x1] %vm890, %v1586
        %1603 = vrot.lane.b32.xlu0 %v837, 103
        %v1604 = vpop.permute.xlu0 %1603
        %1605 = vrot.lane.b32.xlu0 %v841, 103
        %v1606 = vpop.permute.xlu0 %1605
        %1607 = vrot.lane.b32.xlu0 %v845, 103
        %v1608 = vpop.permute.xlu0 %1607
        %1609 = vrot.lane.b32.xlu0 %v849, 103
        %v1610 = vpop.permute.xlu0 %1609
        %1611 = vrot.lane.b32.xlu0 %v853, 103
        %v1612 = vpop.permute.xlu0 %1611
        %1613 = vrot.lane.b32.xlu0 %v857, 103
        %v1614 = vpop.permute.xlu0 %1613
        %1615 = vrot.lane.b32.xlu0 %v861, 103
        %v1616 = vpop.permute.xlu0 %1615
        %1617 = vrot.lane.b32.xlu0 %v865, 103
        %v1618 = vpop.permute.xlu0 %1617
        %1627 = vst.msk [vmem:[#allocation7 + $0x17] sm:$0x1] %vm890, %v1604
        %1628 = vst.msk [vmem:[#allocation7 + $0x37] sm:$0x1] %vm890, %v1606
        %1629 = vst.msk [vmem:[#allocation7 + $0x57] sm:$0x1] %vm890, %v1608
        %1630 = vst.msk [vmem:[#allocation7 + $0x77] sm:$0x1] %vm890, %v1610
        %1631 = vst.msk [vmem:[#allocation7 + $0x97] sm:$0x1] %vm890, %v1612
        %1632 = vst.msk [vmem:[#allocation7 + $0xb7] sm:$0x1] %vm890, %v1614
        %1633 = vst.msk [vmem:[#allocation7 + $0xd7] sm:$0x1] %vm890, %v1616
        %1634 = vst.msk [vmem:[#allocation7 + $0xf7] sm:$0x1] %vm890, %v1618
        %1635 = vrot.lane.b32.xlu0 %v837, 102
        %v1636 = vpop.permute.xlu0 %1635
        %1637 = vrot.lane.b32.xlu0 %v841, 102
        %v1638 = vpop.permute.xlu0 %1637
        %1639 = vrot.lane.b32.xlu0 %v845, 102
        %v1640 = vpop.permute.xlu0 %1639
        %1641 = vrot.lane.b32.xlu0 %v849, 102
        %v1642 = vpop.permute.xlu0 %1641
        %1643 = vrot.lane.b32.xlu0 %v853, 102
        %v1644 = vpop.permute.xlu0 %1643
        %1645 = vrot.lane.b32.xlu0 %v857, 102
        %v1646 = vpop.permute.xlu0 %1645
        %1647 = vrot.lane.b32.xlu0 %v861, 102
        %v1648 = vpop.permute.xlu0 %1647
        %1649 = vrot.lane.b32.xlu0 %v865, 102
        %v1650 = vpop.permute.xlu0 %1649
        %1659 = vst.msk [vmem:[#allocation7 + $0x18] sm:$0x1] %vm890, %v1636
        %1660 = vst.msk [vmem:[#allocation7 + $0x38] sm:$0x1] %vm890, %v1638
        %1661 = vst.msk [vmem:[#allocation7 + $0x58] sm:$0x1] %vm890, %v1640
        %1662 = vst.msk [vmem:[#allocation7 + $0x78] sm:$0x1] %vm890, %v1642
        %1663 = vst.msk [vmem:[#allocation7 + $0x98] sm:$0x1] %vm890, %v1644
        %1664 = vst.msk [vmem:[#allocation7 + $0xb8] sm:$0x1] %vm890, %v1646
        %1665 = vst.msk [vmem:[#allocation7 + $0xd8] sm:$0x1] %vm890, %v1648
        %1666 = vst.msk [vmem:[#allocation7 + $0xf8] sm:$0x1] %vm890, %v1650
        %1667 = vrot.lane.b32.xlu0 %v837, 101
        %v1668 = vpop.permute.xlu0 %1667
        %1669 = vrot.lane.b32.xlu0 %v841, 101
        %v1670 = vpop.permute.xlu0 %1669
        %1671 = vrot.lane.b32.xlu0 %v845, 101
        %v1672 = vpop.permute.xlu0 %1671
        %1673 = vrot.lane.b32.xlu0 %v849, 101
        %v1674 = vpop.permute.xlu0 %1673
        %1675 = vrot.lane.b32.xlu0 %v853, 101
        %v1676 = vpop.permute.xlu0 %1675
        %1677 = vrot.lane.b32.xlu0 %v857, 101
        %v1678 = vpop.permute.xlu0 %1677
        %1679 = vrot.lane.b32.xlu0 %v861, 101
        %v1680 = vpop.permute.xlu0 %1679
        %1681 = vrot.lane.b32.xlu0 %v865, 101
        %v1682 = vpop.permute.xlu0 %1681
        %1691 = vst.msk [vmem:[#allocation7 + $0x19] sm:$0x1] %vm890, %v1668
        %1692 = vst.msk [vmem:[#allocation7 + $0x39] sm:$0x1] %vm890, %v1670
        %1693 = vst.msk [vmem:[#allocation7 + $0x59] sm:$0x1] %vm890, %v1672
        %1694 = vst.msk [vmem:[#allocation7 + $0x79] sm:$0x1] %vm890, %v1674
        %1695 = vst.msk [vmem:[#allocation7 + $0x99] sm:$0x1] %vm890, %v1676
        %1696 = vst.msk [vmem:[#allocation7 + $0xb9] sm:$0x1] %vm890, %v1678
        %1697 = vst.msk [vmem:[#allocation7 + $0xd9] sm:$0x1] %vm890, %v1680
        %1698 = vst.msk [vmem:[#allocation7 + $0xf9] sm:$0x1] %vm890, %v1682
        %1699 = vrot.lane.b32.xlu0 %v837, 100
        %v1700 = vpop.permute.xlu0 %1699
        %1701 = vrot.lane.b32.xlu0 %v841, 100
        %v1702 = vpop.permute.xlu0 %1701
        %1703 = vrot.lane.b32.xlu0 %v845, 100
        %v1704 = vpop.permute.xlu0 %1703
        %1705 = vrot.lane.b32.xlu0 %v849, 100
        %v1706 = vpop.permute.xlu0 %1705
        %1707 = vrot.lane.b32.xlu0 %v853, 100
        %v1708 = vpop.permute.xlu0 %1707
        %1709 = vrot.lane.b32.xlu0 %v857, 100
        %v1710 = vpop.permute.xlu0 %1709
        %1711 = vrot.lane.b32.xlu0 %v861, 100
        %v1712 = vpop.permute.xlu0 %1711
        %1713 = vrot.lane.b32.xlu0 %v865, 100
        %v1714 = vpop.permute.xlu0 %1713
        %1723 = vst.msk [vmem:[#allocation7 + $0x1a] sm:$0x1] %vm890, %v1700
        %1724 = vst.msk [vmem:[#allocation7 + $0x3a] sm:$0x1] %vm890, %v1702
        %1725 = vst.msk [vmem:[#allocation7 + $0x5a] sm:$0x1] %vm890, %v1704
        %1726 = vst.msk [vmem:[#allocation7 + $0x7a] sm:$0x1] %vm890, %v1706
        %1727 = vst.msk [vmem:[#allocation7 + $0x9a] sm:$0x1] %vm890, %v1708
        %1728 = vst.msk [vmem:[#allocation7 + $0xba] sm:$0x1] %vm890, %v1710
        %1729 = vst.msk [vmem:[#allocation7 + $0xda] sm:$0x1] %vm890, %v1712
        %1730 = vst.msk [vmem:[#allocation7 + $0xfa] sm:$0x1] %vm890, %v1714
        %1731 = vrot.lane.b32.xlu0 %v837, 99
        %v1732 = vpop.permute.xlu0 %1731
        %1733 = vrot.lane.b32.xlu0 %v841, 99
        %v1734 = vpop.permute.xlu0 %1733
        %1735 = vrot.lane.b32.xlu0 %v845, 99
        %v1736 = vpop.permute.xlu0 %1735
        %1737 = vrot.lane.b32.xlu0 %v849, 99
        %v1738 = vpop.permute.xlu0 %1737
        %1739 = vrot.lane.b32.xlu0 %v853, 99
        %v1740 = vpop.permute.xlu0 %1739
        %1741 = vrot.lane.b32.xlu0 %v857, 99
        %v1742 = vpop.permute.xlu0 %1741
        %1743 = vrot.lane.b32.xlu0 %v861, 99
        %v1744 = vpop.permute.xlu0 %1743
        %1745 = vrot.lane.b32.xlu0 %v865, 99
        %v1746 = vpop.permute.xlu0 %1745
        %1755 = vst.msk [vmem:[#allocation7 + $0x1b] sm:$0x1] %vm890, %v1732
        %1756 = vst.msk [vmem:[#allocation7 + $0x3b] sm:$0x1] %vm890, %v1734
        %1757 = vst.msk [vmem:[#allocation7 + $0x5b] sm:$0x1] %vm890, %v1736
        %1758 = vst.msk [vmem:[#allocation7 + $0x7b] sm:$0x1] %vm890, %v1738
        %1759 = vst.msk [vmem:[#allocation7 + $0x9b] sm:$0x1] %vm890, %v1740
        %1760 = vst.msk [vmem:[#allocation7 + $0xbb] sm:$0x1] %vm890, %v1742
        %1761 = vst.msk [vmem:[#allocation7 + $0xdb] sm:$0x1] %vm890, %v1744
        %1762 = vst.msk [vmem:[#allocation7 + $0xfb] sm:$0x1] %vm890, %v1746
        %1763 = vrot.lane.b32.xlu0 %v837, 98
        %v1764 = vpop.permute.xlu0 %1763
        %1765 = vrot.lane.b32.xlu0 %v841, 98
        %v1766 = vpop.permute.xlu0 %1765
        %1767 = vrot.lane.b32.xlu0 %v845, 98
        %v1768 = vpop.permute.xlu0 %1767
        %1769 = vrot.lane.b32.xlu0 %v849, 98
        %v1770 = vpop.permute.xlu0 %1769
        %1771 = vrot.lane.b32.xlu0 %v853, 98
        %v1772 = vpop.permute.xlu0 %1771
        %1773 = vrot.lane.b32.xlu0 %v857, 98
        %v1774 = vpop.permute.xlu0 %1773
        %1775 = vrot.lane.b32.xlu0 %v861, 98
        %v1776 = vpop.permute.xlu0 %1775
        %1777 = vrot.lane.b32.xlu0 %v865, 98
        %v1778 = vpop.permute.xlu0 %1777
        %1787 = vst.msk [vmem:[#allocation7 + $0x1c] sm:$0x1] %vm890, %v1764
        %1788 = vst.msk [vmem:[#allocation7 + $0x3c] sm:$0x1] %vm890, %v1766
        %1789 = vst.msk [vmem:[#allocation7 + $0x5c] sm:$0x1] %vm890, %v1768
        %1790 = vst.msk [vmem:[#allocation7 + $0x7c] sm:$0x1] %vm890, %v1770
        %1791 = vst.msk [vmem:[#allocation7 + $0x9c] sm:$0x1] %vm890, %v1772
        %1792 = vst.msk [vmem:[#allocation7 + $0xbc] sm:$0x1] %vm890, %v1774
        %1793 = vst.msk [vmem:[#allocation7 + $0xdc] sm:$0x1] %vm890, %v1776
        %1794 = vst.msk [vmem:[#allocation7 + $0xfc] sm:$0x1] %vm890, %v1778
        %1795 = vrot.lane.b32.xlu0 %v837, 97
        %v1796 = vpop.permute.xlu0 %1795
        %1797 = vrot.lane.b32.xlu0 %v841, 97
        %v1798 = vpop.permute.xlu0 %1797
        %1799 = vrot.lane.b32.xlu0 %v845, 97
        %v1800 = vpop.permute.xlu0 %1799
        %1801 = vrot.lane.b32.xlu0 %v849, 97
        %v1802 = vpop.permute.xlu0 %1801
        %1803 = vrot.lane.b32.xlu0 %v853, 97
        %v1804 = vpop.permute.xlu0 %1803
        %1805 = vrot.lane.b32.xlu0 %v857, 97
        %v1806 = vpop.permute.xlu0 %1805
        %1807 = vrot.lane.b32.xlu0 %v861, 97
        %v1808 = vpop.permute.xlu0 %1807
        %1809 = vrot.lane.b32.xlu0 %v865, 97
        %v1810 = vpop.permute.xlu0 %1809
        %1819 = vst.msk [vmem:[#allocation7 + $0x1d] sm:$0x1] %vm890, %v1796
        %1820 = vst.msk [vmem:[#allocation7 + $0x3d] sm:$0x1] %vm890, %v1798
        %1821 = vst.msk [vmem:[#allocation7 + $0x5d] sm:$0x1] %vm890, %v1800
        %1822 = vst.msk [vmem:[#allocation7 + $0x7d] sm:$0x1] %vm890, %v1802
        %1823 = vst.msk [vmem:[#allocation7 + $0x9d] sm:$0x1] %vm890, %v1804
        %1824 = vst.msk [vmem:[#allocation7 + $0xbd] sm:$0x1] %vm890, %v1806
        %1825 = vst.msk [vmem:[#allocation7 + $0xdd] sm:$0x1] %vm890, %v1808
        %1826 = vst.msk [vmem:[#allocation7 + $0xfd] sm:$0x1] %vm890, %v1810
        %1827 = vrot.lane.b32.xlu0 %v837, 96
        %v1828 = vpop.permute.xlu0 %1827
        %1829 = vrot.lane.b32.xlu0 %v841, 96
        %v1830 = vpop.permute.xlu0 %1829
        %1831 = vrot.lane.b32.xlu0 %v845, 96
        %v1832 = vpop.permute.xlu0 %1831
        %1833 = vrot.lane.b32.xlu0 %v849, 96
        %v1834 = vpop.permute.xlu0 %1833
        %1835 = vrot.lane.b32.xlu0 %v853, 96
        %v1836 = vpop.permute.xlu0 %1835
        %1837 = vrot.lane.b32.xlu0 %v857, 96
        %v1838 = vpop.permute.xlu0 %1837
        %1839 = vrot.lane.b32.xlu0 %v861, 96
        %v1840 = vpop.permute.xlu0 %1839
        %1841 = vrot.lane.b32.xlu0 %v865, 96
        %v1842 = vpop.permute.xlu0 %1841
        %1851 = vst.msk [vmem:[#allocation7 + $0x1e] sm:$0x1] %vm890, %v1828
        %1852 = vst.msk [vmem:[#allocation7 + $0x3e] sm:$0x1] %vm890, %v1830
        %1853 = vst.msk [vmem:[#allocation7 + $0x5e] sm:$0x1] %vm890, %v1832
        %1854 = vst.msk [vmem:[#allocation7 + $0x7e] sm:$0x1] %vm890, %v1834
        %1855 = vst.msk [vmem:[#allocation7 + $0x9e] sm:$0x1] %vm890, %v1836
        %1856 = vst.msk [vmem:[#allocation7 + $0xbe] sm:$0x1] %vm890, %v1838
        %1857 = vst.msk [vmem:[#allocation7 + $0xde] sm:$0x1] %vm890, %v1840
        %1858 = vst.msk [vmem:[#allocation7 + $0xfe] sm:$0x1] %vm890, %v1842
        %1859 = vrot.lane.b32.xlu0 %v837, 95
        %v1860 = vpop.permute.xlu0 %1859
        %1861 = vrot.lane.b32.xlu0 %v841, 95
        %v1862 = vpop.permute.xlu0 %1861
        %1863 = vrot.lane.b32.xlu0 %v845, 95
        %v1864 = vpop.permute.xlu0 %1863
        %1865 = vrot.lane.b32.xlu0 %v849, 95
        %v1866 = vpop.permute.xlu0 %1865
        %1867 = vrot.lane.b32.xlu0 %v853, 95
        %v1868 = vpop.permute.xlu0 %1867
        %1869 = vrot.lane.b32.xlu0 %v857, 95
        %v1870 = vpop.permute.xlu0 %1869
        %1871 = vrot.lane.b32.xlu0 %v861, 95
        %v1872 = vpop.permute.xlu0 %1871
        %1873 = vrot.lane.b32.xlu0 %v865, 95
        %v1874 = vpop.permute.xlu0 %1873
        %1883 = vst.msk [vmem:[#allocation7 + $0x1f] sm:$0x1] %vm890, %v1860
        %1884 = vst.msk [vmem:[#allocation7 + $0x3f] sm:$0x1] %vm890, %v1862
        %1885 = vst.msk [vmem:[#allocation7 + $0x5f] sm:$0x1] %vm890, %v1864
        %1886 = vst.msk [vmem:[#allocation7 + $0x7f] sm:$0x1] %vm890, %v1866
        %1887 = vst.msk [vmem:[#allocation7 + $0x9f] sm:$0x1] %vm890, %v1868
        %1888 = vst.msk [vmem:[#allocation7 + $0xbf] sm:$0x1] %vm890, %v1870
        %1889 = vst.msk [vmem:[#allocation7 + $0xdf] sm:$0x1] %vm890, %v1872
        %1890 = vst.msk [vmem:[#allocation7 + $0xff] sm:$0x1] %vm890, %v1874
        %v1891 = vld [vmem:[%s9] sm:$0xff]
        %v1892 = vld [vmem:[%s9 + $0x8] sm:$0xff]
        %v1893 = vld [vmem:[#allocation2] sm:$0xff]
        %v1894 = vld [vmem:[#allocation2 + $0x8] sm:$0xff]
        %v1895 = vld [vmem:[#allocation4] sm:$0x1]
        %v1896 = vld [vmem:[#allocation5] sm:$0x1]
        %s1897 = smul.u32 0, 32
        %s1898 = scalar_lea.vmem [#allocation7], %s1897
        %v1899 = vld [vmem:[%s1898] sm:$0xff]
        %v1900 = vld [vmem:[%s1898 + $0x8] sm:$0xff]
        %v1901 = vld [vmem:[%s1898 + $0x10] sm:$0xff]
        %v1902 = vld [vmem:[%s1898 + $0x18] sm:$0xff]
        %v1903 = vlaneseq
        %v1904 = vshrl.u32 %v1903, 7
        %v1905 = vsub.s32 0, %v1904
        %v1906 = vrot.slane %v1895, %v1905
        %v1907 = vmul.f32 %v1906, %v1891
        %v1908 = vmul.f32 %v1906, %v1892
        %v1909 = vmul.f32 %v1907, 1.442695
        %v1910 = vpow.pop %v1909
        %v1911 = vmul.f32 %v1908, 1.442695
        %v1912 = vpow.pop %v1911
        %v1913 = vmul.f32 %v1910, %v1893
        %v1914 = vmul.f32 %v1912, %v1894
        %1916 = vset.pattern.permute.xlu0 0
        %1917 = vperm.xlu0 %1916, %v1899
        %v1918 = vpop.permute.xlu0 %1917
        %1921 = vset.pattern.permute.xlu0 0
        %1922 = vperm.xlu0 %1921, %v1900
        %v1923 = vpop.permute.xlu0 %1922
        %v1925 = vlaneseq
        %v1926 = vshrl.u32 %v1925, 7
        %v1927 = vsub.s32 0, %v1926
        %v1928 = vrot.slane %v1896, %v1927
        %v1929 = vmul.f32 %v1918, %v1928
        %v1930 = vmul.f32 %v1923, %v1928
        %v1931 = vadd.f32 %v1913, %v1929
        %v1932 = vadd.f32 %v1914, %v1930
        %1934 = vset.pattern.permute.xlu0 0
        %1935 = vperm.xlu0 %1934, %v1901
        %v1936 = vpop.permute.xlu0 %1935
        %1939 = vset.pattern.permute.xlu0 0
        %1940 = vperm.xlu0 %1939, %v1902
        %v1941 = vpop.permute.xlu0 %1940
        %v1943 = vmul.f32 %v1931, %v1936
        %v1944 = vmul.f32 %v1932, %v1941
        %v1945 = vsel %vm552, %v1943, 0.0
        %v1946 = vsel %vm552, %v1944, 0.0
        %v1947 = vadd.f32 %v1945, %v1946
        %v1948 = vrot.slane %v1947, 4
        %v1949 = vadd.f32 %v1947, %v1948
        %v1950 = vrot.slane %v1949, 2
        %v1951 = vadd.f32 %v1949, %v1950
        %v1952 = vrot.slane %v1951, 1
        %v1953 = vadd.f32 %v1951, %v1952
        %vm1954 = vcmask 516096
        %1955 = vst.msk [vmem:[#allocation6] sm:$0x1] %vm1954, %v1953
        %s1956 = sadd.s32 0, 1
        %s1957 = scalar_lea.vmem [#allocation4], %s1956
        %v1958 = vld [vmem:[%s1957] sm:$0x1]
        %s1959 = scalar_lea.vmem [#allocation5], %s1956
        %v1960 = vld [vmem:[%s1959] sm:$0x1]
        %s1961 = smul.u32 %s1956, 32
        %s1962 = scalar_lea.vmem [#allocation7], %s1961
        %v1963 = vld [vmem:[%s1962] sm:$0xff]
        %v1964 = vld [vmem:[%s1962 + $0x8] sm:$0xff]
        %v1965 = vld [vmem:[%s1962 + $0x10] sm:$0xff]
        %v1966 = vld [vmem:[%s1962 + $0x18] sm:$0xff]
        %v1967 = vlaneseq
        %v1968 = vshrl.u32 %v1967, 7
        %v1969 = vsub.s32 0, %v1968
        %v1970 = vrot.slane %v1958, %v1969
        %v1971 = vmul.f32 %v1970, %v1891
        %v1972 = vmul.f32 %v1970, %v1892
        %v1973 = vmul.f32 %v1971, 1.442695
        %v1974 = vpow.pop %v1973
        %v1975 = vmul.f32 %v1972, 1.442695
        %v1976 = vpow.pop %v1975
        %v1977 = vmul.f32 %v1974, %v1931
        %v1978 = vmul.f32 %v1976, %v1932
        %1980 = vset.pattern.permute.xlu0 0
        %1981 = vperm.xlu0 %1980, %v1963
        %v1982 = vpop.permute.xlu0 %1981
        %1985 = vset.pattern.permute.xlu0 0
        %1986 = vperm.xlu0 %1985, %v1964
        %v1987 = vpop.permute.xlu0 %1986
        %v1989 = vlaneseq
        %v1990 = vshrl.u32 %v1989, 7
        %v1991 = vsub.s32 0, %v1990
        %v1992 = vrot.slane %v1960, %v1991
        %v1993 = vmul.f32 %v1982, %v1992
        %v1994 = vmul.f32 %v1987, %v1992
        %v1995 = vadd.f32 %v1977, %v1993
        %v1996 = vadd.f32 %v1978, %v1994
        %1998 = vset.pattern.permute.xlu0 0
        %1999 = vperm.xlu0 %1998, %v1965
        %v2000 = vpop.permute.xlu0 %1999
        %2003 = vset.pattern.permute.xlu0 0
        %2004 = vperm.xlu0 %2003, %v1966
        %v2005 = vpop.permute.xlu0 %2004
        %v2007 = vmul.f32 %v1995, %v2000
        %v2008 = vmul.f32 %v1996, %v2005
        %v2009 = vsel %vm552, %v2007, 0.0
        %v2010 = vsel %vm552, %v2008, 0.0
        %v2011 = vadd.f32 %v2009, %v2010
        %v2012 = vrot.slane %v2011, 4
        %v2013 = vadd.f32 %v2011, %v2012
        %v2014 = vrot.slane %v2013, 2
        %v2015 = vadd.f32 %v2013, %v2014
        %v2016 = vrot.slane %v2015, 1
        %v2017 = vadd.f32 %v2015, %v2016
        %s2018 = scalar_lea.vmem [#allocation6], %s1956
        %2019 = vst.msk [vmem:[%s2018] sm:$0x1] %vm1954, %v2017
        %s2020 = sadd.s32 0, 2
        %s2021 = scalar_lea.vmem [#allocation4], %s2020
        %v2022 = vld [vmem:[%s2021] sm:$0x1]
        %s2023 = scalar_lea.vmem [#allocation5], %s2020
        %v2024 = vld [vmem:[%s2023] sm:$0x1]
        %s2025 = smul.u32 %s2020, 32
        %s2026 = scalar_lea.vmem [#allocation7], %s2025
        %v2027 = vld [vmem:[%s2026] sm:$0xff]
        %v2028 = vld [vmem:[%s2026 + $0x8] sm:$0xff]
        %v2029 = vld [vmem:[%s2026 + $0x10] sm:$0xff]
        %v2030 = vld [vmem:[%s2026 + $0x18] sm:$0xff]
        %v2031 = vlaneseq
        %v2032 = vshrl.u32 %v2031, 7
        %v2033 = vsub.s32 0, %v2032
        %v2034 = vrot.slane %v2022, %v2033
        %v2035 = vmul.f32 %v2034, %v1891
        %v2036 = vmul.f32 %v2034, %v1892
        %v2037 = vmul.f32 %v2035, 1.442695
        %v2038 = vpow.pop %v2037
        %v2039 = vmul.f32 %v2036, 1.442695
        %v2040 = vpow.pop %v2039
        %v2041 = vmul.f32 %v2038, %v1995
        %v2042 = vmul.f32 %v2040, %v1996
        %2044 = vset.pattern.permute.xlu0 0
        %2045 = vperm.xlu0 %2044, %v2027
        %v2046 = vpop.permute.xlu0 %2045
        %2049 = vset.pattern.permute.xlu0 0
        %2050 = vperm.xlu0 %2049, %v2028
        %v2051 = vpop.permute.xlu0 %2050
        %v2053 = vlaneseq
        %v2054 = vshrl.u32 %v2053, 7
        %v2055 = vsub.s32 0, %v2054
        %v2056 = vrot.slane %v2024, %v2055
        %v2057 = vmul.f32 %v2046, %v2056
        %v2058 = vmul.f32 %v2051, %v2056
        %v2059 = vadd.f32 %v2041, %v2057
        %v2060 = vadd.f32 %v2042, %v2058
        %2062 = vset.pattern.permute.xlu0 0
        %2063 = vperm.xlu0 %2062, %v2029
        %v2064 = vpop.permute.xlu0 %2063
        %2067 = vset.pattern.permute.xlu0 0
        %2068 = vperm.xlu0 %2067, %v2030
        %v2069 = vpop.permute.xlu0 %2068
        %v2071 = vmul.f32 %v2059, %v2064
        %v2072 = vmul.f32 %v2060, %v2069
        %v2073 = vsel %vm552, %v2071, 0.0
        %v2074 = vsel %vm552, %v2072, 0.0
        %v2075 = vadd.f32 %v2073, %v2074
        %v2076 = vrot.slane %v2075, 4
        %v2077 = vadd.f32 %v2075, %v2076
        %v2078 = vrot.slane %v2077, 2
        %v2079 = vadd.f32 %v2077, %v2078
        %v2080 = vrot.slane %v2079, 1
        %v2081 = vadd.f32 %v2079, %v2080
        %s2082 = scalar_lea.vmem [#allocation6], %s2020
        %2083 = vst.msk [vmem:[%s2082] sm:$0x1] %vm1954, %v2081
        %s2084 = sadd.s32 0, 3
        %s2085 = scalar_lea.vmem [#allocation4], %s2084
        %v2086 = vld [vmem:[%s2085] sm:$0x1]
        %s2087 = scalar_lea.vmem [#allocation5], %s2084
        %v2088 = vld [vmem:[%s2087] sm:$0x1]
        %s2089 = smul.u32 %s2084, 32
        %s2090 = scalar_lea.vmem [#allocation7], %s2089
        %v2091 = vld [vmem:[%s2090] sm:$0xff]
        %v2092 = vld [vmem:[%s2090 + $0x8] sm:$0xff]
        %v2093 = vld [vmem:[%s2090 + $0x10] sm:$0xff]
        %v2094 = vld [vmem:[%s2090 + $0x18] sm:$0xff]
        %v2095 = vlaneseq
        %v2096 = vshrl.u32 %v2095, 7
        %v2097 = vsub.s32 0, %v2096
        %v2098 = vrot.slane %v2086, %v2097
        %v2099 = vmul.f32 %v2098, %v1891
        %v2100 = vmul.f32 %v2098, %v1892
        %v2101 = vmul.f32 %v2099, 1.442695
        %v2102 = vpow.pop %v2101
        %v2103 = vmul.f32 %v2100, 1.442695
        %v2104 = vpow.pop %v2103
        %v2105 = vmul.f32 %v2102, %v2059
        %v2106 = vmul.f32 %v2104, %v2060
        %2108 = vset.pattern.permute.xlu0 0
        %2109 = vperm.xlu0 %2108, %v2091
        %v2110 = vpop.permute.xlu0 %2109
        %2113 = vset.pattern.permute.xlu0 0
        %2114 = vperm.xlu0 %2113, %v2092
        %v2115 = vpop.permute.xlu0 %2114
        %v2117 = vlaneseq
        %v2118 = vshrl.u32 %v2117, 7
        %v2119 = vsub.s32 0, %v2118
        %v2120 = vrot.slane %v2088, %v2119
        %v2121 = vmul.f32 %v2110, %v2120
        %v2122 = vmul.f32 %v2115, %v2120
        %v2123 = vadd.f32 %v2105, %v2121
        %v2124 = vadd.f32 %v2106, %v2122
        %2126 = vset.pattern.permute.xlu0 0
        %2127 = vperm.xlu0 %2126, %v2093
        %v2128 = vpop.permute.xlu0 %2127
        %2131 = vset.pattern.permute.xlu0 0
        %2132 = vperm.xlu0 %2131, %v2094
        %v2133 = vpop.permute.xlu0 %2132
        %v2135 = vmul.f32 %v2123, %v2128
        %v2136 = vmul.f32 %v2124, %v2133
        %v2137 = vsel %vm552, %v2135, 0.0
        %v2138 = vsel %vm552, %v2136, 0.0
        %v2139 = vadd.f32 %v2137, %v2138
        %v2140 = vrot.slane %v2139, 4
        %v2141 = vadd.f32 %v2139, %v2140
        %v2142 = vrot.slane %v2141, 2
        %v2143 = vadd.f32 %v2141, %v2142
        %v2144 = vrot.slane %v2143, 1
        %v2145 = vadd.f32 %v2143, %v2144
        %s2146 = scalar_lea.vmem [#allocation6], %s2084
        %2147 = vst.msk [vmem:[%s2146] sm:$0x1] %vm1954, %v2145
        %s2148 = sadd.s32 0, 4
        %s2149 = scalar_lea.vmem [#allocation4], %s2148
        %v2150 = vld [vmem:[%s2149] sm:$0x1]
        %s2151 = scalar_lea.vmem [#allocation5], %s2148
        %v2152 = vld [vmem:[%s2151] sm:$0x1]
        %s2153 = smul.u32 %s2148, 32
        %s2154 = scalar_lea.vmem [#allocation7], %s2153
        %v2155 = vld [vmem:[%s2154] sm:$0xff]
        %v2156 = vld [vmem:[%s2154 + $0x8] sm:$0xff]
        %v2157 = vld [vmem:[%s2154 + $0x10] sm:$0xff]
        %v2158 = vld [vmem:[%s2154 + $0x18] sm:$0xff]
        %v2159 = vlaneseq
        %v2160 = vshrl.u32 %v2159, 7
        %v2161 = vsub.s32 0, %v2160
        %v2162 = vrot.slane %v2150, %v2161
        %v2163 = vmul.f32 %v2162, %v1891
        %v2164 = vmul.f32 %v2162, %v1892
        %v2165 = vmul.f32 %v2163, 1.442695
        %v2166 = vpow.pop %v2165
        %v2167 = vmul.f32 %v2164, 1.442695
        %v2168 = vpow.pop %v2167
        %v2169 = vmul.f32 %v2166, %v2123
        %v2170 = vmul.f32 %v2168, %v2124
        %2172 = vset.pattern.permute.xlu0 0
        %2173 = vperm.xlu0 %2172, %v2155
        %v2174 = vpop.permute.xlu0 %2173
        %2177 = vset.pattern.permute.xlu0 0
        %2178 = vperm.xlu0 %2177, %v2156
        %v2179 = vpop.permute.xlu0 %2178
        %v2181 = vlaneseq
        %v2182 = vshrl.u32 %v2181, 7
        %v2183 = vsub.s32 0, %v2182
        %v2184 = vrot.slane %v2152, %v2183
        %v2185 = vmul.f32 %v2174, %v2184
        %v2186 = vmul.f32 %v2179, %v2184
        %v2187 = vadd.f32 %v2169, %v2185
        %v2188 = vadd.f32 %v2170, %v2186
        %2190 = vset.pattern.permute.xlu0 0
        %2191 = vperm.xlu0 %2190, %v2157
        %v2192 = vpop.permute.xlu0 %2191
        %2195 = vset.pattern.permute.xlu0 0
        %2196 = vperm.xlu0 %2195, %v2158
        %v2197 = vpop.permute.xlu0 %2196
        %v2199 = vmul.f32 %v2187, %v2192
        %v2200 = vmul.f32 %v2188, %v2197
        %v2201 = vsel %vm552, %v2199, 0.0
        %v2202 = vsel %vm552, %v2200, 0.0
        %v2203 = vadd.f32 %v2201, %v2202
        %v2204 = vrot.slane %v2203, 4
        %v2205 = vadd.f32 %v2203, %v2204
        %v2206 = vrot.slane %v2205, 2
        %v2207 = vadd.f32 %v2205, %v2206
        %v2208 = vrot.slane %v2207, 1
        %v2209 = vadd.f32 %v2207, %v2208
        %s2210 = scalar_lea.vmem [#allocation6], %s2148
        %2211 = vst.msk [vmem:[%s2210] sm:$0x1] %vm1954, %v2209
        %s2212 = sadd.s32 0, 5
        %s2213 = scalar_lea.vmem [#allocation4], %s2212
        %v2214 = vld [vmem:[%s2213] sm:$0x1]
        %s2215 = scalar_lea.vmem [#allocation5], %s2212
        %v2216 = vld [vmem:[%s2215] sm:$0x1]
        %s2217 = smul.u32 %s2212, 32
        %s2218 = scalar_lea.vmem [#allocation7], %s2217
        %v2219 = vld [vmem:[%s2218] sm:$0xff]
        %v2220 = vld [vmem:[%s2218 + $0x8] sm:$0xff]
        %v2221 = vld [vmem:[%s2218 + $0x10] sm:$0xff]
        %v2222 = vld [vmem:[%s2218 + $0x18] sm:$0xff]
        %v2223 = vlaneseq
        %v2224 = vshrl.u32 %v2223, 7
        %v2225 = vsub.s32 0, %v2224
        %v2226 = vrot.slane %v2214, %v2225
        %v2227 = vmul.f32 %v2226, %v1891
        %v2228 = vmul.f32 %v2226, %v1892
        %v2229 = vmul.f32 %v2227, 1.442695
        %v2230 = vpow.pop %v2229
        %v2231 = vmul.f32 %v2228, 1.442695
        %v2232 = vpow.pop %v2231
        %v2233 = vmul.f32 %v2230, %v2187
        %v2234 = vmul.f32 %v2232, %v2188
        %2236 = vset.pattern.permute.xlu0 0
        %2237 = vperm.xlu0 %2236, %v2219
        %v2238 = vpop.permute.xlu0 %2237
        %2241 = vset.pattern.permute.xlu0 0
        %2242 = vperm.xlu0 %2241, %v2220
        %v2243 = vpop.permute.xlu0 %2242
        %v2245 = vlaneseq
        %v2246 = vshrl.u32 %v2245, 7
        %v2247 = vsub.s32 0, %v2246
        %v2248 = vrot.slane %v2216, %v2247
        %v2249 = vmul.f32 %v2238, %v2248
        %v2250 = vmul.f32 %v2243, %v2248
        %v2251 = vadd.f32 %v2233, %v2249
        %v2252 = vadd.f32 %v2234, %v2250
        %2254 = vset.pattern.permute.xlu0 0
        %2255 = vperm.xlu0 %2254, %v2221
        %v2256 = vpop.permute.xlu0 %2255
        %2259 = vset.pattern.permute.xlu0 0
        %2260 = vperm.xlu0 %2259, %v2222
        %v2261 = vpop.permute.xlu0 %2260
        %v2263 = vmul.f32 %v2251, %v2256
        %v2264 = vmul.f32 %v2252, %v2261
        %v2265 = vsel %vm552, %v2263, 0.0
        %v2266 = vsel %vm552, %v2264, 0.0
        %v2267 = vadd.f32 %v2265, %v2266
        %v2268 = vrot.slane %v2267, 4
        %v2269 = vadd.f32 %v2267, %v2268
        %v2270 = vrot.slane %v2269, 2
        %v2271 = vadd.f32 %v2269, %v2270
        %v2272 = vrot.slane %v2271, 1
        %v2273 = vadd.f32 %v2271, %v2272
        %s2274 = scalar_lea.vmem [#allocation6], %s2212
        %2275 = vst.msk [vmem:[%s2274] sm:$0x1] %vm1954, %v2273
        %s2276 = sadd.s32 0, 6
        %s2277 = scalar_lea.vmem [#allocation4], %s2276
        %v2278 = vld [vmem:[%s2277] sm:$0x1]
        %s2279 = scalar_lea.vmem [#allocation5], %s2276
        %v2280 = vld [vmem:[%s2279] sm:$0x1]
        %s2281 = smul.u32 %s2276, 32
        %s2282 = scalar_lea.vmem [#allocation7], %s2281
        %v2283 = vld [vmem:[%s2282] sm:$0xff]
        %v2284 = vld [vmem:[%s2282 + $0x8] sm:$0xff]
        %v2285 = vld [vmem:[%s2282 + $0x10] sm:$0xff]
        %v2286 = vld [vmem:[%s2282 + $0x18] sm:$0xff]
        %v2287 = vlaneseq
        %v2288 = vshrl.u32 %v2287, 7
        %v2289 = vsub.s32 0, %v2288
        %v2290 = vrot.slane %v2278, %v2289
        %v2291 = vmul.f32 %v2290, %v1891
        %v2292 = vmul.f32 %v2290, %v1892
        %v2293 = vmul.f32 %v2291, 1.442695
        %v2294 = vpow.pop %v2293
        %v2295 = vmul.f32 %v2292, 1.442695
        %v2296 = vpow.pop %v2295
        %v2297 = vmul.f32 %v2294, %v2251
        %v2298 = vmul.f32 %v2296, %v2252
        %2300 = vset.pattern.permute.xlu0 0
        %2301 = vperm.xlu0 %2300, %v2283
        %v2302 = vpop.permute.xlu0 %2301
        %2305 = vset.pattern.permute.xlu0 0
        %2306 = vperm.xlu0 %2305, %v2284
        %v2307 = vpop.permute.xlu0 %2306
        %v2309 = vlaneseq
        %v2310 = vshrl.u32 %v2309, 7
        %v2311 = vsub.s32 0, %v2310
        %v2312 = vrot.slane %v2280, %v2311
        %v2313 = vmul.f32 %v2302, %v2312
        %v2314 = vmul.f32 %v2307, %v2312
        %v2315 = vadd.f32 %v2297, %v2313
        %v2316 = vadd.f32 %v2298, %v2314
        %2318 = vset.pattern.permute.xlu0 0
        %2319 = vperm.xlu0 %2318, %v2285
        %v2320 = vpop.permute.xlu0 %2319
        %2323 = vset.pattern.permute.xlu0 0
        %2324 = vperm.xlu0 %2323, %v2286
        %v2325 = vpop.permute.xlu0 %2324
        %v2327 = vmul.f32 %v2315, %v2320
        %v2328 = vmul.f32 %v2316, %v2325
        %v2329 = vsel %vm552, %v2327, 0.0
        %v2330 = vsel %vm552, %v2328, 0.0
        %v2331 = vadd.f32 %v2329, %v2330
        %v2332 = vrot.slane %v2331, 4
        %v2333 = vadd.f32 %v2331, %v2332
        %v2334 = vrot.slane %v2333, 2
        %v2335 = vadd.f32 %v2333, %v2334
        %v2336 = vrot.slane %v2335, 1
        %v2337 = vadd.f32 %v2335, %v2336
        %s2338 = scalar_lea.vmem [#allocation6], %s2276
        %2339 = vst.msk [vmem:[%s2338] sm:$0x1] %vm1954, %v2337
        %s2340 = sadd.s32 0, 7
        %s2341 = scalar_lea.vmem [#allocation4], %s2340
        %v2342 = vld [vmem:[%s2341] sm:$0x1]
        %s2343 = scalar_lea.vmem [#allocation5], %s2340
        %v2344 = vld [vmem:[%s2343] sm:$0x1]
        %s2345 = smul.u32 %s2340, 32
        %s2346 = scalar_lea.vmem [#allocation7], %s2345
        %v2347 = vld [vmem:[%s2346] sm:$0xff]
        %v2348 = vld [vmem:[%s2346 + $0x8] sm:$0xff]
        %v2349 = vld [vmem:[%s2346 + $0x10] sm:$0xff]
        %v2350 = vld [vmem:[%s2346 + $0x18] sm:$0xff]
        %v2351 = vlaneseq
        %v2352 = vshrl.u32 %v2351, 7
        %v2353 = vsub.s32 0, %v2352
        %v2354 = vrot.slane %v2342, %v2353
        %v2355 = vmul.f32 %v2354, %v1891
        %v2356 = vmul.f32 %v2354, %v1892
        %v2357 = vmul.f32 %v2355, 1.442695
        %v2358 = vpow.pop %v2357
        %v2359 = vmul.f32 %v2356, 1.442695
        %v2360 = vpow.pop %v2359
        %v2361 = vmul.f32 %v2358, %v2315
        %v2362 = vmul.f32 %v2360, %v2316
        %2364 = vset.pattern.permute.xlu0 0
        %2365 = vperm.xlu0 %2364, %v2347
        %v2366 = vpop.permute.xlu0 %2365
        %2369 = vset.pattern.permute.xlu0 0
        %2370 = vperm.xlu0 %2369, %v2348
        %v2371 = vpop.permute.xlu0 %2370
        %v2373 = vlaneseq
        %v2374 = vshrl.u32 %v2373, 7
        %v2375 = vsub.s32 0, %v2374
        %v2376 = vrot.slane %v2344, %v2375
        %v2377 = vmul.f32 %v2366, %v2376
        %v2378 = vmul.f32 %v2371, %v2376
        %v2379 = vadd.f32 %v2361, %v2377
        %v2380 = vadd.f32 %v2362, %v2378
        %2382 = vset.pattern.permute.xlu0 0
        %2383 = vperm.xlu0 %2382, %v2349
        %v2384 = vpop.permute.xlu0 %2383
        %2387 = vset.pattern.permute.xlu0 0
        %2388 = vperm.xlu0 %2387, %v2350
        %v2389 = vpop.permute.xlu0 %2388
        %v2391 = vmul.f32 %v2379, %v2384
        %v2392 = vmul.f32 %v2380, %v2389
        %v2393 = vsel %vm552, %v2391, 0.0
        %v2394 = vsel %vm552, %v2392, 0.0
        %v2395 = vadd.f32 %v2393, %v2394
        %v2396 = vrot.slane %v2395, 4
        %v2397 = vadd.f32 %v2395, %v2396
        %v2398 = vrot.slane %v2397, 2
        %v2399 = vadd.f32 %v2397, %v2398
        %v2400 = vrot.slane %v2399, 1
        %v2401 = vadd.f32 %v2399, %v2400
        %s2402 = scalar_lea.vmem [#allocation6], %s2340
        %2403 = vst.msk [vmem:[%s2402] sm:$0x1] %vm1954, %v2401
        %2404 = vst.msk [vmem:[#allocation2] sm:$0xff] %vm552, %v2379
        %2405 = vst.msk [vmem:[#allocation2 + $0x8] sm:$0xff] %vm552, %v2380
        %v2406 = vld [vmem:[#allocation6] sm:$0xff]
        %v2407 = vld [vmem:[%s10] sm:$0x1]
        %v2409 = vlaneseq
        %v2410 = vshrl.u32 %v2409, 7
        %v2411 = vsub.s32 0, %v2410
        %v2412 = vrot.slane %v2407, %v2411
        %v2414 = vmul.f32 %v2412, %v599
        %v2415 = vadd.f32 %v2406, %v2414
        %v2416 = vsub.f32 0.0, %v549
        %v2417 = vmul.f32 %v2416, 1.442695
        %v2418 = vpow.pop %v2417
        %v2419 = vadd.f32 %v2418, 1.0
        %v2420 = vrcp.pop %v2419
        %v2421 = vmul.f32 1.0, %v2420
        %v2422 = vmul.f32 %v549, %v2421
        %2424 = vrot.lane.b32.xlu0 %v2422, 64
        %v2425 = vpop.permute.xlu0 %2424
        %v2427 = vmul.f32 %v2415, %v2425
        %v2428 = vld [vmem:[%s11] sm:$0xff]
        %v2429 = vld [vmem:[%s11 + $0x8] sm:$0xff]
        %v2430 = vld [vmem:[%s11 + $0x10] sm:$0xff]
        %v2431 = vld [vmem:[%s11 + $0x18] sm:$0xff]
        %v2432 = vld [vmem:[%s11 + $0x20] sm:$0xff]
        %v2433 = vld [vmem:[%s11 + $0x28] sm:$0xff]
        %v2434 = vld [vmem:[%s11 + $0x30] sm:$0xff]
        %v2435 = vld [vmem:[%s11 + $0x38] sm:$0xff]
        %v2437 = vsel %vm552, %v2427, 0
        %2439 = vmatprep.subr.mxu0 0.0
        %2440 = vmatpush1.msra.mxu0 %v2428
        %2441 = vmatprep.subr.mxu0 0.0
        %2442 = vmatpush1.msra.mxu0 %v2429
        %2443 = vmatprep.subr.mxu0 0.0
        %2444 = vmatpush1.msra.mxu0 %v2430
        %2445 = vmatprep.subr.mxu0 0.0
        %2446 = vmatpush1.msra.mxu0 %v2431
        %2447 = vmatprep.subr.mxu0 0.0
        %2448 = vmatpush1.msra.mxu0 %v2432
        %2449 = vmatprep.subr.mxu0 0.0
        %2450 = vmatpush1.msra.mxu0 %v2433
        %2451 = vmatprep.subr.mxu0 0.0
        %2452 = vmatpush1.msra.mxu0 %v2434
        %2453 = vmatprep.subr.mxu0 0.0
        %2454 = vmatpush1.msra.mxu0 %v2435
        %2455 = vmatprep.subr.mxu0 0.0
        %2456 = vmatpush1.msra.mxu0 0.0
        %2457 = vmatprep.subr.mxu0 0.0
        %2458 = vmatpush1.msra.mxu0 0.0
        %2459 = vmatprep.subr.mxu0 0.0
        %2460 = vmatpush1.msra.mxu0 0.0
        %2461 = vmatprep.subr.mxu0 0.0
        %2462 = vmatpush1.msra.mxu0 0.0
        %2463 = vmatprep.subr.mxu0 0.0
        %2464 = vmatpush1.msra.mxu0 0.0
        %2465 = vmatprep.subr.mxu0 0.0
        %2466 = vmatpush1.msra.mxu0 0.0
        %2467 = vmatprep.subr.mxu0 0.0
        %2468 = vmatpush1.msra.mxu0 0.0
        %2469 = vmatprep.subr.mxu0 0.0
        %2470 = vmatpush1.msra.mxu0 0.0
        %2471 = vmatprep.subr.mxu0 0.0
        %2472 = vmatpush1.msra.mxu0 0.0
        %2473 = vmatprep.subr.mxu0 0.0
        %2474 = vmatpush1.msra.mxu0 0.0
        %2475 = vmatprep.subr.mxu0 0.0
        %2476 = vmatpush1.msra.mxu0 0.0
        %2477 = vmatprep.subr.mxu0 0.0
        %2478 = vmatpush1.msra.mxu0 0.0
        %2479 = vmatprep.subr.mxu0 0.0
        %2480 = vmatpush1.msra.mxu0 0.0
        %2481 = vmatprep.subr.mxu0 0.0
        %2482 = vmatpush1.msra.mxu0 0.0
        %2483 = vmatprep.subr.mxu0 0.0
        %2484 = vmatpush1.msra.mxu0 0.0
        %2485 = vmatprep.subr.mxu0 0.0
        %2486 = vmatpush1.msra.mxu0 0.0
        %2487 = vmatprep.subr.mxu0 0.0
        %2488 = vmatpush1.msra.mxu0 0.0
        %2489 = vmatprep.subr.mxu0 0.0
        %2490 = vmatpush1.msra.mxu0 0.0
        %2491 = vmatprep.subr.mxu0 0.0
        %2492 = vmatpush1.msra.mxu0 0.0
        %2493 = vmatprep.subr.mxu0 0.0
        %2494 = vmatpush1.msra.mxu0 0.0
        %2495 = vmatprep.subr.mxu0 0.0
        %2496 = vmatpush1.msra.mxu0 0.0
        %2497 = vmatprep.subr.mxu0 0.0
        %2498 = vmatpush1.msra.mxu0 0.0
        %2499 = vmatprep.subr.mxu0 0.0
        %2500 = vmatpush1.msra.mxu0 0.0
        %2501 = vmatprep.subr.mxu0 0.0
        %2502 = vmatpush1.msra.mxu0 0.0
        %2503 = vmatprep.mubr.f32.mxu0 0.0
        %2504 = vmatmul.mubr.f32.gmra.mrb[0].mxu0 %v2437
        %v2505 = vpop.f32.mrb[0].mxu0
        %v2506 = vadd.f32 %v443, %v2505
        %v2507 = vpop.f32.mrb[0].mxu0
        %2508 = vdwg.mxu0
        %2509 = vst.msk [vmem:[%s426] sm:$0xff] %vm444, %v2506
        %s2510 = sand.u32 %s307, 1
        %s2511 = scalar_lea.sflag [#allocation9], %s2510
        %s2512 = sand.u32 %s307, 1
        %s2513 = smul.addr %s2512, 8
        %s2514 = scalar_lea.vmem [#allocation8], %s2513
        // Predicated region
        $region73: #{tpu_custom_call.1} parent=67 // pred_check
          %p2515 = pneg %p317
        $region74: #{tpu_custom_call.1} parent=67 // pred_check_branch
          %2517 = sbr.rel (%p2515) target = $region76
        $region75: #{tpu_custom_call.1} parent=67 // pred_region
          %s2519 = ssub.s32 128, 128
          %2520 = vsyncadd %s2511, %s2519
          %s2521 = sadd.s32 %s31, %s30
          %s2522 = smul.addr %s2521, 128
          %s2523 = scalar_lea.hbm %s12, %s2522
          %s2525 = sshll.u32 %s2514, 4
          %s2526 = int_to_ptr.vmem [resolvable:$true] %s2525
          %2528 = dma.vmem_to_hbm [thread:$0]  %s2526, 128, %s2523, %s2511
        $region76: #{tpu_custom_call.1} parent=67 // pred_fallthru
          _
      $region68: #{tpu_custom_call.1} parent=5 // pred_fallthru
        _
      %p2529 = scmp.le.s32.totalorder 2, %s21
      // Predicated region
      $region77: #{tpu_custom_call.1} parent=5 // pred_check
        %p2530 = pneg %p2529
      $region78: #{tpu_custom_call.1} parent=5 // pred_check_branch
        %2532 = sbr.rel (%p2530) target = $region80
      $region79: #{tpu_custom_call.1} parent=5 // pred_region
        %s2533 = ssub.s32 %s21, 2
        // Predicated region
        $region81: #{tpu_custom_call.1} parent=79 // pred_check
          %p2534 = pneg %p323
        $region82: #{tpu_custom_call.1} parent=79 // pred_check_branch
          %2536 = sbr.rel (%p2534) target = $region84
        $region83: #{tpu_custom_call.1} parent=79 // pred_region
          %s2537 = sand.u32 %s308, 1
          %s2538 = scalar_lea.sflag [#allocation9], %s2537
          %s2539 = sand.u32 %s308, 1
          %s2540 = smul.addr %s2539, 8
          %s2541 = scalar_lea.vmem [#allocation8], %s2540
          %2542 = dma.done %s2538, 128
        $region84: #{tpu_custom_call.1} parent=79 // pred_fallthru
          _
      $region80: #{tpu_custom_call.1} parent=5 // pred_fallthru
        _
    $region6: #{tpu_custom_call.1} parent=1 // loop_footer
      %s25 = sadd.s32 1, %s21
    $region7: #{tpu_custom_call.1} parent=1 // loop_footer_branch
      %20 = sbr.rel target = $region3
    $region8: #{tpu_custom_call.1} parent=1 // loop_exit
      _
    %2543 = vsyncpa [#allocation9], 1
    %s2544 = scalar_lea.sflag [#allocation9], 1
    %2545 = vsyncpa %s2544, 1

</llo_original>
